<compile_context>
chip_gen: v7x
topology: tpu7x:2x2x1
jax: 0.10.0
libtpu: 0.0.40
codegen_flags: <defaults>
</compile_context>

<pallas_src>
import jax
import jax.numpy as jnp
import numpy as np
from jax.experimental import pallas as pl
from jax.experimental.pallas import tpu as pltpu

HIDDEN_DIMS = (1024, 512, 256)
OUT_FEATURES = 100          # logical fc4 width
OUT_PAD = 128               # lane-dense padded fc4 width


def _round_up(n, m):
    return (n + m - 1) // m * m


def _mlp_kernel(x_ref,
                w1_ref, b1_ref,
                w2_ref, b2_ref,
                w3_ref, b3_ref,
                w4_ref, b4_ref,
                o_ref):
    """Fused 4-layer MLP on one batch tile.

    Weights arrive as bf16 (native MXU input); each jnp.dot accumulates in
    f32 via preferred_element_type; bias add + tanh run in f32 and the
    activation is re-quantized to bf16 before the next MXU matmul. The final
    activation is written back in f32.
    """
    h = x_ref[...].astype(jnp.bfloat16)
    h = jnp.tanh(jnp.dot(h, w1_ref[...], preferred_element_type=jnp.float32)
                 + b1_ref[...]).astype(jnp.bfloat16)
    h = jnp.tanh(jnp.dot(h, w2_ref[...], preferred_element_type=jnp.float32)
                 + b2_ref[...]).astype(jnp.bfloat16)
    h = jnp.tanh(jnp.dot(h, w3_ref[...], preferred_element_type=jnp.float32)
                 + b3_ref[...]).astype(jnp.bfloat16)
    h = jnp.tanh(jnp.dot(h, w4_ref[...], preferred_element_type=jnp.float32)
                 + b4_ref[...])
    o_ref[...] = h.astype(o_ref.dtype)


def init_params(key, input_feature_number):
    """nn.Linear-style U(-1/sqrt(fan_in), +1/sqrt(fan_in)) init, f32.

    Weights are returned already transposed to [in, out]; biases as [1, out].
    """
    dims = [input_feature_number, *HIDDEN_DIMS, OUT_FEATURES]
    params = []
    for i in range(4):
        fan_in, fan_out = dims[i], dims[i + 1]
        key, kw, kb = jax.random.split(key, 3)
        bound = 1.0 / np.sqrt(fan_in)
        w = jax.random.uniform(kw, (fan_in, fan_out), jnp.float32, -bound, bound)
        b = jax.random.uniform(kb, (1, fan_out), jnp.float32, -bound, bound)
        params.append((w, b))
    return params


def prepare_kernel_params(params, input_feature_number):
    """One-time prep: pad to lane-dense shapes and cast weights to bf16."""
    (w1, b1), (w2, b2), (w3, b3), (w4, b4) = params
    k_pad = _round_up(input_feature_number, 128)
    w1p = jnp.zeros((k_pad, HIDDEN_DIMS[0]), jnp.float32)
    w1p = w1p.at[:input_feature_number].set(w1)
    w4p = jnp.zeros((HIDDEN_DIMS[2], OUT_PAD), jnp.float32)
    w4p = w4p.at[:, :OUT_FEATURES].set(w4)
    b4p = jnp.zeros((1, OUT_PAD), jnp.float32)
    b4p = b4p.at[:, :OUT_FEATURES].set(b4)
    bf = lambda w: w.astype(jnp.bfloat16)
    # TODO(synk): for very large input_feature_number (W1 > ~16 MiB in bf16,
    # i.e. tens of thousands of features on v7x's 64 MiB VMEM), add a
    # K-reduction grid axis for layer 1 instead of loading W1 as one block.
    return ((bf(w1p), b1), (bf(w2), b2), (bf(w3), b3), (bf(w4p), b4p))


def target_net_texas_forward(x, kernel_params, *, block_m=128):
    """x: [B, input_feature_number] f32. Returns [B, 100] f32."""
    (w1, b1), (w2, b2), (w3, b3), (w4, b4) = kernel_params
    B, K = x.shape
    K_pad = w1.shape[0]

    # Lane-dense pad of the feature axis (matching zero rows already in w1).
    if K_pad != K:
        x = jnp.pad(x, ((0, 0), (0, K_pad - K)))

    # Batch tiling: up to `block_m` rows per grid step (multiple of 8).
    bm = min(block_m, _round_up(B, 8))
    B_pad = _round_up(B, bm)
    if B_pad != B:
        x = jnp.pad(x, ((0, B_pad - B), (0, 0)))

    grid = (B_pad // bm,)
    const = lambda a: pl.BlockSpec(a.shape, lambda i: (0,) * a.ndim)

    # Right-sized VMEM budget: resident weights/biases + double-buffered
    # x/out tiles + headroom; stays well under v7x's 64 MiB physical VMEM.
    weight_bytes = int(sum(w.size * w.dtype.itemsize + b.size * b.dtype.itemsize
                           for (w, b) in kernel_params))
    tile_bytes = bm * (K_pad + OUT_PAD) * 4
    vmem_limit = int(min(60 << 20,
                         max(16 << 20, 2 * (weight_bytes + 2 * tile_bytes))))

    flops = 2 * B_pad * (K_pad * 1024 + 1024 * 512 + 512 * 256 + 256 * OUT_PAD)
    transcendentals = B_pad * (1024 + 512 + 256 + OUT_PAD)
    bytes_accessed = int(x.size) * 4 + weight_bytes + B_pad * OUT_PAD * 4

    out = pl.pallas_call(
        _mlp_kernel,
        out_shape=jax.ShapeDtypeStruct((B_pad, OUT_PAD), jnp.float32),
        grid=grid,
        in_specs=[pl.BlockSpec((bm, K_pad), lambda i: (i, 0)),
                  const(w1), const(b1),
                  const(w2), const(b2),
                  const(w3), const(b3),
                  const(w4), const(b4)],
        out_specs=pl.BlockSpec((bm, OUT_PAD), lambda i: (i, 0)),
        compiler_params=pltpu.CompilerParams(
            dimension_semantics=("parallel",),
            vmem_limit_bytes=vmem_limit),
        cost_estimate=pl.CostEstimate(flops=int(flops),
                                      transcendentals=int(transcendentals),
                                      bytes_accessed=int(bytes_accessed)),
    )(x, w1, b1, w2, b2, w3, b3, w4, b4)

    return out[:B, :OUT_FEATURES]


def reference_forward(x, params):
    """f32 reference emulating the kernel's bf16 weight/activation quantization."""
    h = x.reshape(x.shape[0], -1).astype(jnp.bfloat16)
    for li, (w, b) in enumerate(params):
        acc = jnp.dot(h, w.astype(jnp.bfloat16),
                      preferred_element_type=jnp.float32)
        h = jnp.tanh(acc + b)
        if li < 3:
            h = h.astype(jnp.bfloat16)
    return h.astype(jnp.float32)


if __name__ == "__main__":
    key = jax.random.PRNGKey(0)
    k_x, k_p = jax.random.split(key)

    batch = 6                     # exercises batch padding (-> 8 rows)
    input_feature_number = 600    # exercises feature padding (-> 640 lanes)

    x = jax.random.normal(k_x, (batch, input_feature_number), jnp.float32)
    params = init_params(k_p, input_feature_number)
    kernel_params = prepare_kernel_params(params, input_feature_number)

    out = target_net_texas_forward(x, kernel_params)
    out = jax.block_until_ready(out)

    ref = reference_forward(x, params)
    np.testing.assert_allclose(np.asarray(out), np.asarray(ref),
                               rtol=1e-2, atol=1e-2)
    assert out.shape == (batch, OUT_FEATURES)

    print("KERNEL_OK")
</pallas_src>

<mosaic_0001>
module attributes {stable_mosaic.version = 11 : i64} {
  func.func @_mlp_kernel(%arg0: i32, %arg1: memref<8x640xf32, #tpu.memory_space<vmem>>, %arg2: memref<640x1024xbf16, #tpu.memory_space<vmem>>, %arg3: memref<1x1024xf32, #tpu.memory_space<vmem>>, %arg4: memref<1024x512xbf16, #tpu.memory_space<vmem>>, %arg5: memref<1x512xf32, #tpu.memory_space<vmem>>, %arg6: memref<512x256xbf16, #tpu.memory_space<vmem>>, %arg7: memref<1x256xf32, #tpu.memory_space<vmem>>, %arg8: memref<256x128xbf16, #tpu.memory_space<vmem>>, %arg9: memref<1x128xf32, #tpu.memory_space<vmem>>, %arg10: memref<8x128xf32, #tpu.memory_space<vmem>>) attributes {dimension_semantics = [#tpu.dimension_semantics<parallel>], iteration_bounds = array<i64: 1>, scalar_prefetch = 0 : i64, scratch_operands = 0 : i64, tpu.core_type = #tpu.core_type<tc>, window_params = [{transform_indices = @transform_0, window_bounds = array<i64: 8, 640>}, {pipeline_mode = #tpu.pipeline_mode<synchronous>, transform_indices = @transform_1, window_bounds = array<i64: 640, 1024>}, {pipeline_mode = #tpu.pipeline_mode<synchronous>, transform_indices = @transform_2, window_bounds = array<i64: 1, 1024>}, {pipeline_mode = #tpu.pipeline_mode<synchronous>, transform_indices = @transform_3, window_bounds = array<i64: 1024, 512>}, {pipeline_mode = #tpu.pipeline_mode<synchronous>, transform_indices = @transform_4, window_bounds = array<i64: 1, 512>}, {pipeline_mode = #tpu.pipeline_mode<synchronous>, transform_indices = @transform_5, window_bounds = array<i64: 512, 256>}, {pipeline_mode = #tpu.pipeline_mode<synchronous>, transform_indices = @transform_6, window_bounds = array<i64: 1, 256>}, {pipeline_mode = #tpu.pipeline_mode<synchronous>, transform_indices = @transform_7, window_bounds = array<i64: 256, 128>}, {pipeline_mode = #tpu.pipeline_mode<synchronous>, transform_indices = @transform_8, window_bounds = array<i64: 1, 128>}, {transform_indices = @transform_9, window_bounds = array<i64: 8, 128>}]} {
    %c0 = arith.constant 0 : index
    %c0_0 = arith.constant 0 : index
    %0 = vector.load %arg1[%c0, %c0_0] : memref<8x640xf32, #tpu.memory_space<vmem>>, vector<8x640xf32>
    %1 = arith.truncf %0 : vector<8x640xf32> to vector<8x640xbf16>
    %c0_1 = arith.constant 0 : index
    %c0_2 = arith.constant 0 : index
    %2 = vector.load %arg2[%c0_1, %c0_2] : memref<640x1024xbf16, #tpu.memory_space<vmem>>, vector<640x1024xbf16>
    %cst = arith.constant dense<0.000000e+00> : vector<8x1024xf32>
    %3 = tpu.matmul %1, %2, %cst {dimension_numbers = #tpu.dot_dimension_numbers<[1], [0], [0], [1], [0, 0, 1, 1], [], []>} : vector<8x640xbf16>, vector<640x1024xbf16>, vector<8x1024xf32> -> vector<8x1024xf32>
    %c0_3 = arith.constant 0 : index
    %c0_4 = arith.constant 0 : index
    %4 = vector.load %arg3[%c0_3, %c0_4] : memref<1x1024xf32, #tpu.memory_space<vmem>>, vector<1x1024xf32>
    %5 = vector.broadcast %4 : vector<1x1024xf32> to vector<8x1024xf32>
    %6 = arith.addf %3, %5 : vector<8x1024xf32>
    %7 = math.tanh %6 : vector<8x1024xf32>
    %8 = arith.truncf %7 : vector<8x1024xf32> to vector<8x1024xbf16>
    %c0_5 = arith.constant 0 : index
    %c0_6 = arith.constant 0 : index
    %9 = vector.load %arg4[%c0_5, %c0_6] : memref<1024x512xbf16, #tpu.memory_space<vmem>>, vector<1024x512xbf16>
    %cst_7 = arith.constant dense<0.000000e+00> : vector<8x512xf32>
    %10 = tpu.matmul %8, %9, %cst_7 {dimension_numbers = #tpu.dot_dimension_numbers<[1], [0], [0], [1], [0, 0, 1, 1], [], []>} : vector<8x1024xbf16>, vector<1024x512xbf16>, vector<8x512xf32> -> vector<8x512xf32>
    %c0_8 = arith.constant 0 : index
    %c0_9 = arith.constant 0 : index
    %11 = vector.load %arg5[%c0_8, %c0_9] : memref<1x512xf32, #tpu.memory_space<vmem>>, vector<1x512xf32>
    %12 = vector.broadcast %11 : vector<1x512xf32> to vector<8x512xf32>
    %13 = arith.addf %10, %12 : vector<8x512xf32>
    %14 = math.tanh %13 : vector<8x512xf32>
    %15 = arith.truncf %14 : vector<8x512xf32> to vector<8x512xbf16>
    %c0_10 = arith.constant 0 : index
    %c0_11 = arith.constant 0 : index
    %16 = vector.load %arg6[%c0_10, %c0_11] : memref<512x256xbf16, #tpu.memory_space<vmem>>, vector<512x256xbf16>
    %cst_12 = arith.constant dense<0.000000e+00> : vector<8x256xf32>
    %17 = tpu.matmul %15, %16, %cst_12 {dimension_numbers = #tpu.dot_dimension_numbers<[1], [0], [0], [1], [0, 0, 1, 1], [], []>} : vector<8x512xbf16>, vector<512x256xbf16>, vector<8x256xf32> -> vector<8x256xf32>
    %c0_13 = arith.constant 0 : index
    %c0_14 = arith.constant 0 : index
    %18 = vector.load %arg7[%c0_13, %c0_14] : memref<1x256xf32, #tpu.memory_space<vmem>>, vector<1x256xf32>
    %19 = vector.broadcast %18 : vector<1x256xf32> to vector<8x256xf32>
    %20 = arith.addf %17, %19 : vector<8x256xf32>
    %21 = math.tanh %20 : vector<8x256xf32>
    %22 = arith.truncf %21 : vector<8x256xf32> to vector<8x256xbf16>
    %c0_15 = arith.constant 0 : index
    %c0_16 = arith.constant 0 : index
    %23 = vector.load %arg8[%c0_15, %c0_16] : memref<256x128xbf16, #tpu.memory_space<vmem>>, vector<256x128xbf16>
    %cst_17 = arith.constant dense<0.000000e+00> : vector<8x128xf32>
    %24 = tpu.matmul %22, %23, %cst_17 {dimension_numbers = #tpu.dot_dimension_numbers<[1], [0], [0], [1], [0, 0, 1, 1], [], []>} : vector<8x256xbf16>, vector<256x128xbf16>, vector<8x128xf32> -> vector<8x128xf32>
    %c0_18 = arith.constant 0 : index
    %c0_19 = arith.constant 0 : index
    %25 = vector.load %arg9[%c0_18, %c0_19] : memref<1x128xf32, #tpu.memory_space<vmem>>, vector<1x128xf32>
    %26 = vector.broadcast %25 : vector<1x128xf32> to vector<8x128xf32>
    %27 = arith.addf %24, %26 : vector<8x128xf32>
    %28 = math.tanh %27 : vector<8x128xf32>
    %c0_20 = arith.constant 0 : index
    %c0_21 = arith.constant 0 : index
    %29 = vector.load %arg10[%c0_20, %c0_21] : memref<8x128xf32, #tpu.memory_space<vmem>>, vector<8x128xf32>
    tpu.vector_store %arg10[%c0_20, %c0_21], %28 {strides = array<i32>} : memref<8x128xf32, #tpu.memory_space<vmem>>, vector<8x128xf32>,
    return
  }
  func.func @transform_0(%arg0: i32) -> (i32, i32) {
    %c0_i32 = arith.constant 0 : i32
    %c0_i32_0 = arith.constant 0 : i32
    return %arg0, %c0_i32 : i32, i32
  }
  func.func @transform_1(%arg0: i32) -> (i32, i32) {
    %c0_i32 = arith.constant 0 : i32
    %c0_i32_0 = arith.constant 0 : i32
    %c0_i32_1 = arith.constant 0 : i32
    return %c0_i32, %c0_i32_0 : i32, i32
  }
  func.func @transform_2(%arg0: i32) -> (i32, i32) {
    %c0_i32 = arith.constant 0 : i32
    %c0_i32_0 = arith.constant 0 : i32
    %c0_i32_1 = arith.constant 0 : i32
    return %c0_i32, %c0_i32_0 : i32, i32
  }
  func.func @transform_3(%arg0: i32) -> (i32, i32) {
    %c0_i32 = arith.constant 0 : i32
    %c0_i32_0 = arith.constant 0 : i32
    %c0_i32_1 = arith.constant 0 : i32
    return %c0_i32, %c0_i32_0 : i32, i32
  }
  func.func @transform_4(%arg0: i32) -> (i32, i32) {
    %c0_i32 = arith.constant 0 : i32
    %c0_i32_0 = arith.constant 0 : i32
    %c0_i32_1 = arith.constant 0 : i32
    return %c0_i32, %c0_i32_0 : i32, i32
  }
  func.func @transform_5(%arg0: i32) -> (i32, i32) {
    %c0_i32 = arith.constant 0 : i32
    %c0_i32_0 = arith.constant 0 : i32
    %c0_i32_1 = arith.constant 0 : i32
    return %c0_i32, %c0_i32_0 : i32, i32
  }
  func.func @transform_6(%arg0: i32) -> (i32, i32) {
    %c0_i32 = arith.constant 0 : i32
    %c0_i32_0 = arith.constant 0 : i32
    %c0_i32_1 = arith.constant 0 : i32
    return %c0_i32, %c0_i32_0 : i32, i32
  }
  func.func @transform_7(%arg0: i32) -> (i32, i32) {
    %c0_i32 = arith.constant 0 : i32
    %c0_i32_0 = arith.constant 0 : i32
    %c0_i32_1 = arith.constant 0 : i32
    return %c0_i32, %c0_i32_0 : i32, i32
  }
  func.func @transform_8(%arg0: i32) -> (i32, i32) {
    %c0_i32 = arith.constant 0 : i32
    %c0_i32_0 = arith.constant 0 : i32
    %c0_i32_1 = arith.constant 0 : i32
    return %c0_i32, %c0_i32_0 : i32, i32
  }
  func.func @transform_9(%arg0: i32) -> (i32, i32) {
    %c0_i32 = arith.constant 0 : i32
    %c0_i32_0 = arith.constant 0 : i32
    return %arg0, %c0_i32 : i32, i32
  }
}

</mosaic_0001>

<llo_original>
// kernel: tpu_custom_call.1
$region0: #{tpu_custom_call.1}
  #allocation0 [shape = 'u32[]', space=smem, size = 0x4, offset = 0x4, fixed_abs, tag = 'smem constant byte address 0x4 - core index']
  #allocation1 [shape = 'u32[144,128]{1,0:T(1,128)}', space=vmem, size = 0x12000, scoped, tag = 'internal scratch']
  %s0 = inlined_call_operand.hbm [shape: f32[8,640], index: 0, kind: input, shape index: {}]
  %s1 = inlined_call_operand.hbm [shape: bf16[640,1024], index: 1, kind: input, shape index: {}]
  %s2 = inlined_call_operand.hbm [shape: f32[1,1024], index: 2, kind: input, shape index: {}]
  %s3 = inlined_call_operand.hbm [shape: bf16[1024,512], index: 3, kind: input, shape index: {}]
  %s4 = inlined_call_operand.hbm [shape: f32[1,512], index: 4, kind: input, shape index: {}]
  %s5 = inlined_call_operand.hbm [shape: bf16[512,256], index: 5, kind: input, shape index: {}]
  %s6 = inlined_call_operand.hbm [shape: f32[1,256], index: 6, kind: input, shape index: {}]
  %s7 = inlined_call_operand.hbm [shape: bf16[256,128], index: 7, kind: input, shape index: {}]
  %s8 = inlined_call_operand.hbm [shape: f32[1,128], index: 8, kind: input, shape index: {}]
  %s9 = inlined_call_operand.hbm [shape: f32[8,128], index: 9, kind: output, shape index: {}]
  %s10 = sld [smem:[#allocation0]]
  $region82: #{tpu_custom_call.1} parent=0
    _
  %s12 = ssub.s32 1, %s10
  %s13 = scalar_select 0, %s12, %s10
  $region1: #{tpu_custom_call.1} parent=0
    #allocation2 [shape = 'u8[20480]{0}', space=vmem, size = 0x5000, scoped, tag = 'input window, operand 0, single buffered']
    #allocation3 [shape = 's32[1]{0}', space=sflag, size = 0x4, scoped, tag = 'scoped memory for tpu_custom_call.1']
    #allocation4 [shape = 's32[1]{0}', space=sflag, size = 0x4, scoped, tag = 'scoped memory for tpu_custom_call.1']
    #allocation5 [shape = 'u8[1310720]{0}', space=vmem, size = 0x140000, scoped, tag = 'input window, operand 1, single buffered']
    #allocation6 [shape = 's32[1]{0}', space=sflag, size = 0x4, scoped, tag = 'scoped memory for tpu_custom_call.1']
    #allocation7 [shape = 'u8[4096]{0}', space=vmem, size = 0x1000, scoped, tag = 'input window, operand 2, single buffered']
    #allocation8 [shape = 'u8[1048576]{0}', space=vmem, size = 0x100000, scoped, tag = 'input window, operand 3, single buffered']
    #allocation9 [shape = 's32[1]{0}', space=sflag, size = 0x4, scoped, tag = 'scoped memory for tpu_custom_call.1']
    #allocation10 [shape = 'u8[2048]{0}', space=vmem, size = 0x800, scoped, tag = 'input window, operand 4, single buffered']
    #allocation11 [shape = 'u8[262144]{0}', space=vmem, size = 0x40000, scoped, tag = 'input window, operand 5, single buffered']
    #allocation12 [shape = 's32[1]{0}', space=sflag, size = 0x4, scoped, tag = 'scoped memory for tpu_custom_call.1']
    #allocation13 [shape = 'u8[1024]{0}', space=vmem, size = 0x400, scoped, tag = 'input window, operand 6, single buffered']
    #allocation14 [shape = 'u8[65536]{0}', space=vmem, size = 0x10000, scoped, tag = 'input window, operand 7, single buffered']
    #allocation15 [shape = 's32[1]{0}', space=sflag, size = 0x4, scoped, tag = 'scoped memory for tpu_custom_call.1']
    #allocation16 [shape = 'u8[512]{0}', space=vmem, size = 0x400, scoped, tag = 'input window, operand 8, single buffered']
    #allocation17 [shape = 'u8[4096]{0}', space=vmem, size = 0x1000, scoped, tag = 'output window, operand 0, single buffered']
    %14 = vsyncpa [#allocation3], 0
    %15 = vsyncpa [#allocation6], 0
    %16 = vsyncpa [#allocation9], 0
    %17 = vsyncpa [#allocation12], 0
    %18 = vsyncpa [#allocation15], 0
    %19 = vsyncpa [#allocation4], 0
    // Predicated region
    $region2: #{tpu_custom_call.1} parent=1 // pred_check
      _
    $region3: #{tpu_custom_call.1} parent=1 // pred_check_branch
      %21 = sbr.rel (0) target = $region5
    $region4: #{tpu_custom_call.1} parent=1 // pred_region
      %s23 = ssub.s32 640, 640
      %24 = vsyncadd [#allocation3], %s23
      %s26 = sshll.u32 [#allocation2], 4
      %s27 = int_to_ptr.vmem [resolvable:$true] %s26
      %29 = dma.hbm_to_vmem [thread:$0]  %s0, 640, %s27, [#allocation3]
    $region5: #{tpu_custom_call.1} parent=1 // pred_fallthru
      _
    // Predicated region
    $region6: #{tpu_custom_call.1} parent=1 // pred_check
      _
    $region7: #{tpu_custom_call.1} parent=1 // pred_check_branch
      %31 = sbr.rel (0) target = $region9
    $region8: #{tpu_custom_call.1} parent=1 // pred_region
      %s33 = ssub.s32 40960, 40960
      %34 = vsyncadd [#allocation6], %s33
      %s35 = sshll.u32 [#allocation5], 4
      %s36 = int_to_ptr.vmem [resolvable:$true] %s35
      %41 = dma.hbm_to_vmem [thread:$0]  %s1, 40960, %s36, [#allocation6], 512, 512, 32
    $region9: #{tpu_custom_call.1} parent=1 // pred_fallthru
      _
    // Predicated region
    $region10: #{tpu_custom_call.1} parent=1 // pred_check
      _
    $region11: #{tpu_custom_call.1} parent=1 // pred_check_branch
      %43 = sbr.rel (0) target = $region13
    $region12: #{tpu_custom_call.1} parent=1 // pred_region
      %s45 = ssub.s32 128, 128
      %46 = vsyncadd [#allocation6], %s45
      %s48 = sshll.u32 [#allocation7], 4
      %s49 = int_to_ptr.vmem [resolvable:$true] %s48
      %51 = dma.hbm_to_vmem [thread:$0]  %s2, 128, %s49, [#allocation6]
    $region13: #{tpu_custom_call.1} parent=1 // pred_fallthru
      _
    // Predicated region
    $region14: #{tpu_custom_call.1} parent=1 // pred_check
      _
    $region15: #{tpu_custom_call.1} parent=1 // pred_check_branch
      %53 = sbr.rel (0) target = $region17
    $region16: #{tpu_custom_call.1} parent=1 // pred_region
      %s55 = ssub.s32 32768, 32768
      %56 = vsyncadd [#allocation9], %s55
      %s57 = sshll.u32 [#allocation8], 4
      %s58 = int_to_ptr.vmem [resolvable:$true] %s57
      %63 = dma.hbm_to_vmem [thread:$0]  %s3, 32768, %s58, [#allocation9], 256, 256, 16
    $region17: #{tpu_custom_call.1} parent=1 // pred_fallthru
      _
    // Predicated region
    $region18: #{tpu_custom_call.1} parent=1 // pred_check
      _
    $region19: #{tpu_custom_call.1} parent=1 // pred_check_branch
      %65 = sbr.rel (0) target = $region21
    $region20: #{tpu_custom_call.1} parent=1 // pred_region
      %s67 = ssub.s32 64, 64
      %68 = vsyncadd [#allocation9], %s67
      %s70 = sshll.u32 [#allocation10], 4
      %s71 = int_to_ptr.vmem [resolvable:$true] %s70
      %73 = dma.hbm_to_vmem [thread:$0]  %s4, 64, %s71, [#allocation9]
    $region21: #{tpu_custom_call.1} parent=1 // pred_fallthru
      _
    // Predicated region
    $region22: #{tpu_custom_call.1} parent=1 // pred_check
      _
    $region23: #{tpu_custom_call.1} parent=1 // pred_check_branch
      %75 = sbr.rel (0) target = $region25
    $region24: #{tpu_custom_call.1} parent=1 // pred_region
      %s77 = ssub.s32 8192, 8192
      %78 = vsyncadd [#allocation12], %s77
      %s79 = sshll.u32 [#allocation11], 4
      %s80 = int_to_ptr.vmem [resolvable:$true] %s79
      %85 = dma.hbm_to_vmem [thread:$0]  %s5, 8192, %s80, [#allocation12], 128, 128, 8
    $region25: #{tpu_custom_call.1} parent=1 // pred_fallthru
      _
    // Predicated region
    $region26: #{tpu_custom_call.1} parent=1 // pred_check
      _
    $region27: #{tpu_custom_call.1} parent=1 // pred_check_branch
      %87 = sbr.rel (0) target = $region29
    $region28: #{tpu_custom_call.1} parent=1 // pred_region
      %s89 = ssub.s32 32, 32
      %90 = vsyncadd [#allocation12], %s89
      %s92 = sshll.u32 [#allocation13], 4
      %s93 = int_to_ptr.vmem [resolvable:$true] %s92
      %95 = dma.hbm_to_vmem [thread:$0]  %s6, 32, %s93, [#allocation12]
    $region29: #{tpu_custom_call.1} parent=1 // pred_fallthru
      _
    // Predicated region
    $region30: #{tpu_custom_call.1} parent=1 // pred_check
      _
    $region31: #{tpu_custom_call.1} parent=1 // pred_check_branch
      %97 = sbr.rel (0) target = $region33
    $region32: #{tpu_custom_call.1} parent=1 // pred_region
      %s99 = ssub.s32 2048, 2048
      %100 = vsyncadd [#allocation15], %s99
      %s101 = sshll.u32 [#allocation14], 4
      %s102 = int_to_ptr.vmem [resolvable:$true] %s101
      %107 = dma.hbm_to_vmem [thread:$0]  %s7, 2048, %s102, [#allocation15], 64, 64, 4
    $region33: #{tpu_custom_call.1} parent=1 // pred_fallthru
      _
    // Predicated region
    $region34: #{tpu_custom_call.1} parent=1 // pred_check
      _
    $region35: #{tpu_custom_call.1} parent=1 // pred_check_branch
      %109 = sbr.rel (0) target = $region37
    $region36: #{tpu_custom_call.1} parent=1 // pred_region
      %s111 = ssub.s32 16, 16
      %112 = vsyncadd [#allocation15], %s111
      %s114 = sshll.u32 [#allocation16], 4
      %s115 = int_to_ptr.vmem [resolvable:$true] %s114
      %117 = dma.hbm_to_vmem [thread:$0]  %s8, 16, %s115, [#allocation15]
    $region37: #{tpu_custom_call.1} parent=1 // pred_fallthru
      _
    // Predicated region
    $region38: #{tpu_custom_call.1} parent=1 // pred_check
      _
    $region39: #{tpu_custom_call.1} parent=1 // pred_check_branch
      %119 = sbr.rel (0) target = $region41
    $region40: #{tpu_custom_call.1} parent=1 // pred_region
      %120 = dma.done [#allocation3], 640
    $region41: #{tpu_custom_call.1} parent=1 // pred_fallthru
      _
    // Predicated region
    $region42: #{tpu_custom_call.1} parent=1 // pred_check
      _
    $region43: #{tpu_custom_call.1} parent=1 // pred_check_branch
      %122 = sbr.rel (0) target = $region45
    $region44: #{tpu_custom_call.1} parent=1 // pred_region
      %123 = dma.done [#allocation6], 40960
    $region45: #{tpu_custom_call.1} parent=1 // pred_fallthru
      _
    // Predicated region
    $region46: #{tpu_custom_call.1} parent=1 // pred_check
      _
    $region47: #{tpu_custom_call.1} parent=1 // pred_check_branch
      %125 = sbr.rel (0) target = $region49
    $region48: #{tpu_custom_call.1} parent=1 // pred_region
      %126 = dma.done [#allocation6], 128
    $region49: #{tpu_custom_call.1} parent=1 // pred_fallthru
      _
    // Predicated region
    $region50: #{tpu_custom_call.1} parent=1 // pred_check
      _
    $region51: #{tpu_custom_call.1} parent=1 // pred_check_branch
      %128 = sbr.rel (0) target = $region53
    $region52: #{tpu_custom_call.1} parent=1 // pred_region
      %129 = dma.done [#allocation9], 32768
    $region53: #{tpu_custom_call.1} parent=1 // pred_fallthru
      _
    // Predicated region
    $region54: #{tpu_custom_call.1} parent=1 // pred_check
      _
    $region55: #{tpu_custom_call.1} parent=1 // pred_check_branch
      %131 = sbr.rel (0) target = $region57
    $region56: #{tpu_custom_call.1} parent=1 // pred_region
      %132 = dma.done [#allocation9], 64
    $region57: #{tpu_custom_call.1} parent=1 // pred_fallthru
      _
    // Predicated region
    $region58: #{tpu_custom_call.1} parent=1 // pred_check
      _
    $region59: #{tpu_custom_call.1} parent=1 // pred_check_branch
      %134 = sbr.rel (0) target = $region61
    $region60: #{tpu_custom_call.1} parent=1 // pred_region
      %135 = dma.done [#allocation12], 8192
    $region61: #{tpu_custom_call.1} parent=1 // pred_fallthru
      _
    // Predicated region
    $region62: #{tpu_custom_call.1} parent=1 // pred_check
      _
    $region63: #{tpu_custom_call.1} parent=1 // pred_check_branch
      %137 = sbr.rel (0) target = $region65
    $region64: #{tpu_custom_call.1} parent=1 // pred_region
      %138 = dma.done [#allocation12], 32
    $region65: #{tpu_custom_call.1} parent=1 // pred_fallthru
      _
    // Predicated region
    $region66: #{tpu_custom_call.1} parent=1 // pred_check
      _
    $region67: #{tpu_custom_call.1} parent=1 // pred_check_branch
      %140 = sbr.rel (0) target = $region69
    $region68: #{tpu_custom_call.1} parent=1 // pred_region
      %141 = dma.done [#allocation15], 2048
    $region69: #{tpu_custom_call.1} parent=1 // pred_fallthru
      _
    // Predicated region
    $region70: #{tpu_custom_call.1} parent=1 // pred_check
      _
    $region71: #{tpu_custom_call.1} parent=1 // pred_check_branch
      %143 = sbr.rel (0) target = $region73
    $region72: #{tpu_custom_call.1} parent=1 // pred_region
      %144 = dma.done [#allocation15], 16
    $region73: #{tpu_custom_call.1} parent=1 // pred_fallthru
      _
    %v146 = vld [vmem:[#allocation2] sm:$0xff]
    %v147 = vld [vmem:[#allocation2 + $0x8] sm:$0xff]
    %v148 = vld [vmem:[#allocation2 + $0x10] sm:$0xff]
    %v149 = vld [vmem:[#allocation2 + $0x18] sm:$0xff]
    %v150 = vld [vmem:[#allocation2 + $0x20] sm:$0xff]
    %v151 = vpack.c.bf16 %v146, %v146
    %v152 = vpack.c.bf16 %v147, %v147
    %v153 = vpack.c.bf16 %v148, %v148
    %v154 = vpack.c.bf16 %v149, %v149
    %v155 = vpack.c.bf16 %v150, %v150
    %v156 = vld [vmem:[#allocation5] sm:$0xff]
    %v157 = vld [vmem:[#allocation5 + $0x8] sm:$0xff]
    %v158 = vld [vmem:[#allocation5 + $0x10] sm:$0xff]
    %v159 = vld [vmem:[#allocation5 + $0x18] sm:$0xff]
    %v160 = vld [vmem:[#allocation5 + $0x20] sm:$0xff]
    %v161 = vld [vmem:[#allocation5 + $0x28] sm:$0xff]
    %v162 = vld [vmem:[#allocation5 + $0x30] sm:$0xff]
    %v163 = vld [vmem:[#allocation5 + $0x38] sm:$0xff]
    %v164 = vld [vmem:[#allocation5 + $0x40] sm:$0xff]
    %v165 = vld [vmem:[#allocation5 + $0x48] sm:$0xff]
    %v166 = vld [vmem:[#allocation5 + $0x50] sm:$0xff]
    %v167 = vld [vmem:[#allocation5 + $0x58] sm:$0xff]
    %v168 = vld [vmem:[#allocation5 + $0x60] sm:$0xff]
    %v169 = vld [vmem:[#allocation5 + $0x68] sm:$0xff]
    %v170 = vld [vmem:[#allocation5 + $0x70] sm:$0xff]
    %v171 = vld [vmem:[#allocation5 + $0x78] sm:$0xff]
    %v172 = vld [vmem:[#allocation5 + $0x80] sm:$0xff]
    %v173 = vld [vmem:[#allocation5 + $0x88] sm:$0xff]
    %v174 = vld [vmem:[#allocation5 + $0x90] sm:$0xff]
    %v175 = vld [vmem:[#allocation5 + $0x98] sm:$0xff]
    %v176 = vld [vmem:[#allocation5 + $0xa0] sm:$0xff]
    %v177 = vld [vmem:[#allocation5 + $0xa8] sm:$0xff]
    %v178 = vld [vmem:[#allocation5 + $0xb0] sm:$0xff]
    %v179 = vld [vmem:[#allocation5 + $0xb8] sm:$0xff]
    %v180 = vld [vmem:[#allocation5 + $0xc0] sm:$0xff]
    %v181 = vld [vmem:[#allocation5 + $0xc8] sm:$0xff]
    %v182 = vld [vmem:[#allocation5 + $0xd0] sm:$0xff]
    %v183 = vld [vmem:[#allocation5 + $0xd8] sm:$0xff]
    %v184 = vld [vmem:[#allocation5 + $0xe0] sm:$0xff]
    %v185 = vld [vmem:[#allocation5 + $0xe8] sm:$0xff]
    %v186 = vld [vmem:[#allocation5 + $0xf0] sm:$0xff]
    %v187 = vld [vmem:[#allocation5 + $0xf8] sm:$0xff]
    %v188 = vld [vmem:[#allocation5 + $0x100] sm:$0xff]
    %v189 = vld [vmem:[#allocation5 + $0x108] sm:$0xff]
    %v190 = vld [vmem:[#allocation5 + $0x110] sm:$0xff]
    %v191 = vld [vmem:[#allocation5 + $0x118] sm:$0xff]
    %v192 = vld [vmem:[#allocation5 + $0x120] sm:$0xff]
    %v193 = vld [vmem:[#allocation5 + $0x128] sm:$0xff]
    %v194 = vld [vmem:[#allocation5 + $0x130] sm:$0xff]
    %v195 = vld [vmem:[#allocation5 + $0x138] sm:$0xff]
    %v196 = vld [vmem:[#allocation5 + $0x140] sm:$0xff]
    %v197 = vld [vmem:[#allocation5 + $0x148] sm:$0xff]
    %v198 = vld [vmem:[#allocation5 + $0x150] sm:$0xff]
    %v199 = vld [vmem:[#allocation5 + $0x158] sm:$0xff]
    %v200 = vld [vmem:[#allocation5 + $0x160] sm:$0xff]
    %v201 = vld [vmem:[#allocation5 + $0x168] sm:$0xff]
    %v202 = vld [vmem:[#allocation5 + $0x170] sm:$0xff]
    %v203 = vld [vmem:[#allocation5 + $0x178] sm:$0xff]
    %v204 = vld [vmem:[#allocation5 + $0x180] sm:$0xff]
    %v205 = vld [vmem:[#allocation5 + $0x188] sm:$0xff]
    %v206 = vld [vmem:[#allocation5 + $0x190] sm:$0xff]
    %v207 = vld [vmem:[#allocation5 + $0x198] sm:$0xff]
    %v208 = vld [vmem:[#allocation5 + $0x1a0] sm:$0xff]
    %v209 = vld [vmem:[#allocation5 + $0x1a8] sm:$0xff]
    %v210 = vld [vmem:[#allocation5 + $0x1b0] sm:$0xff]
    %v211 = vld [vmem:[#allocation5 + $0x1b8] sm:$0xff]
    %v212 = vld [vmem:[#allocation5 + $0x1c0] sm:$0xff]
    %v213 = vld [vmem:[#allocation5 + $0x1c8] sm:$0xff]
    %v214 = vld [vmem:[#allocation5 + $0x1d0] sm:$0xff]
    %v215 = vld [vmem:[#allocation5 + $0x1d8] sm:$0xff]
    %v216 = vld [vmem:[#allocation5 + $0x1e0] sm:$0xff]
    %v217 = vld [vmem:[#allocation5 + $0x1e8] sm:$0xff]
    %v218 = vld [vmem:[#allocation5 + $0x1f0] sm:$0xff]
    %v219 = vld [vmem:[#allocation5 + $0x1f8] sm:$0xff]
    %v220 = vld [vmem:[#allocation5 + $0x200] sm:$0xff]
    %v221 = vld [vmem:[#allocation5 + $0x208] sm:$0xff]
    %v222 = vld [vmem:[#allocation5 + $0x210] sm:$0xff]
    %v223 = vld [vmem:[#allocation5 + $0x218] sm:$0xff]
    %v224 = vld [vmem:[#allocation5 + $0x220] sm:$0xff]
    %v225 = vld [vmem:[#allocation5 + $0x228] sm:$0xff]
    %v226 = vld [vmem:[#allocation5 + $0x230] sm:$0xff]
    %v227 = vld [vmem:[#allocation5 + $0x238] sm:$0xff]
    %v228 = vld [vmem:[#allocation5 + $0x240] sm:$0xff]
    %v229 = vld [vmem:[#allocation5 + $0x248] sm:$0xff]
    %v230 = vld [vmem:[#allocation5 + $0x250] sm:$0xff]
    %v231 = vld [vmem:[#allocation5 + $0x258] sm:$0xff]
    %v232 = vld [vmem:[#allocation5 + $0x260] sm:$0xff]
    %v233 = vld [vmem:[#allocation5 + $0x268] sm:$0xff]
    %v234 = vld [vmem:[#allocation5 + $0x270] sm:$0xff]
    %v235 = vld [vmem:[#allocation5 + $0x278] sm:$0xff]
    %v236 = vld [vmem:[#allocation5 + $0x280] sm:$0xff]
    %v237 = vld [vmem:[#allocation5 + $0x288] sm:$0xff]
    %v238 = vld [vmem:[#allocation5 + $0x290] sm:$0xff]
    %v239 = vld [vmem:[#allocation5 + $0x298] sm:$0xff]
    %v240 = vld [vmem:[#allocation5 + $0x2a0] sm:$0xff]
    %v241 = vld [vmem:[#allocation5 + $0x2a8] sm:$0xff]
    %v242 = vld [vmem:[#allocation5 + $0x2b0] sm:$0xff]
    %v243 = vld [vmem:[#allocation5 + $0x2b8] sm:$0xff]
    %v244 = vld [vmem:[#allocation5 + $0x2c0] sm:$0xff]
    %v245 = vld [vmem:[#allocation5 + $0x2c8] sm:$0xff]
    %v246 = vld [vmem:[#allocation5 + $0x2d0] sm:$0xff]
    %v247 = vld [vmem:[#allocation5 + $0x2d8] sm:$0xff]
    %v248 = vld [vmem:[#allocation5 + $0x2e0] sm:$0xff]
    %v249 = vld [vmem:[#allocation5 + $0x2e8] sm:$0xff]
    %v250 = vld [vmem:[#allocation5 + $0x2f0] sm:$0xff]
    %v251 = vld [vmem:[#allocation5 + $0x2f8] sm:$0xff]
    %v252 = vld [vmem:[#allocation5 + $0x300] sm:$0xff]
    %v253 = vld [vmem:[#allocation5 + $0x308] sm:$0xff]
    %v254 = vld [vmem:[#allocation5 + $0x310] sm:$0xff]
    %v255 = vld [vmem:[#allocation5 + $0x318] sm:$0xff]
    %v256 = vld [vmem:[#allocation5 + $0x320] sm:$0xff]
    %v257 = vld [vmem:[#allocation5 + $0x328] sm:$0xff]
    %v258 = vld [vmem:[#allocation5 + $0x330] sm:$0xff]
    %v259 = vld [vmem:[#allocation5 + $0x338] sm:$0xff]
    %v260 = vld [vmem:[#allocation5 + $0x340] sm:$0xff]
    %v261 = vld [vmem:[#allocation5 + $0x348] sm:$0xff]
    %v262 = vld [vmem:[#allocation5 + $0x350] sm:$0xff]
    %v263 = vld [vmem:[#allocation5 + $0x358] sm:$0xff]
    %v264 = vld [vmem:[#allocation5 + $0x360] sm:$0xff]
    %v265 = vld [vmem:[#allocation5 + $0x368] sm:$0xff]
    %v266 = vld [vmem:[#allocation5 + $0x370] sm:$0xff]
    %v267 = vld [vmem:[#allocation5 + $0x378] sm:$0xff]
    %v268 = vld [vmem:[#allocation5 + $0x380] sm:$0xff]
    %v269 = vld [vmem:[#allocation5 + $0x388] sm:$0xff]
    %v270 = vld [vmem:[#allocation5 + $0x390] sm:$0xff]
    %v271 = vld [vmem:[#allocation5 + $0x398] sm:$0xff]
    %v272 = vld [vmem:[#allocation5 + $0x3a0] sm:$0xff]
    %v273 = vld [vmem:[#allocation5 + $0x3a8] sm:$0xff]
    %v274 = vld [vmem:[#allocation5 + $0x3b0] sm:$0xff]
    %v275 = vld [vmem:[#allocation5 + $0x3b8] sm:$0xff]
    %v276 = vld [vmem:[#allocation5 + $0x3c0] sm:$0xff]
    %v277 = vld [vmem:[#allocation5 + $0x3c8] sm:$0xff]
    %v278 = vld [vmem:[#allocation5 + $0x3d0] sm:$0xff]
    %v279 = vld [vmem:[#allocation5 + $0x3d8] sm:$0xff]
    %v280 = vld [vmem:[#allocation5 + $0x3e0] sm:$0xff]
    %v281 = vld [vmem:[#allocation5 + $0x3e8] sm:$0xff]
    %v282 = vld [vmem:[#allocation5 + $0x3f0] sm:$0xff]
    %v283 = vld [vmem:[#allocation5 + $0x3f8] sm:$0xff]
    %v284 = vld [vmem:[#allocation5 + $0x400] sm:$0xff]
    %v285 = vld [vmem:[#allocation5 + $0x408] sm:$0xff]
    %v286 = vld [vmem:[#allocation5 + $0x410] sm:$0xff]
    %v287 = vld [vmem:[#allocation5 + $0x418] sm:$0xff]
    %v288 = vld [vmem:[#allocation5 + $0x420] sm:$0xff]
    %v289 = vld [vmem:[#allocation5 + $0x428] sm:$0xff]
    %v290 = vld [vmem:[#allocation5 + $0x430] sm:$0xff]
    %v291 = vld [vmem:[#allocation5 + $0x438] sm:$0xff]
    %v292 = vld [vmem:[#allocation5 + $0x440] sm:$0xff]
    %v293 = vld [vmem:[#allocation5 + $0x448] sm:$0xff]
    %v294 = vld [vmem:[#allocation5 + $0x450] sm:$0xff]
    %v295 = vld [vmem:[#allocation5 + $0x458] sm:$0xff]
    %v296 = vld [vmem:[#allocation5 + $0x460] sm:$0xff]
    %v297 = vld [vmem:[#allocation5 + $0x468] sm:$0xff]
    %v298 = vld [vmem:[#allocation5 + $0x470] sm:$0xff]
    %v299 = vld [vmem:[#allocation5 + $0x478] sm:$0xff]
    %v300 = vld [vmem:[#allocation5 + $0x480] sm:$0xff]
    %v301 = vld [vmem:[#allocation5 + $0x488] sm:$0xff]
    %v302 = vld [vmem:[#allocation5 + $0x490] sm:$0xff]
    %v303 = vld [vmem:[#allocation5 + $0x498] sm:$0xff]
    %v304 = vld [vmem:[#allocation5 + $0x4a0] sm:$0xff]
    %v305 = vld [vmem:[#allocation5 + $0x4a8] sm:$0xff]
    %v306 = vld [vmem:[#allocation5 + $0x4b0] sm:$0xff]
    %v307 = vld [vmem:[#allocation5 + $0x4b8] sm:$0xff]
    %v308 = vld [vmem:[#allocation5 + $0x4c0] sm:$0xff]
    %v309 = vld [vmem:[#allocation5 + $0x4c8] sm:$0xff]
    %v310 = vld [vmem:[#allocation5 + $0x4d0] sm:$0xff]
    %v311 = vld [vmem:[#allocation5 + $0x4d8] sm:$0xff]
    %v312 = vld [vmem:[#allocation5 + $0x4e0] sm:$0xff]
    %v313 = vld [vmem:[#allocation5 + $0x4e8] sm:$0xff]
    %v314 = vld [vmem:[#allocation5 + $0x4f0] sm:$0xff]
    %v315 = vld [vmem:[#allocation5 + $0x4f8] sm:$0xff]
    %v316 = vld [vmem:[#allocation5 + $0x500] sm:$0xff]
    %v317 = vld [vmem:[#allocation5 + $0x508] sm:$0xff]
    %v318 = vld [vmem:[#allocation5 + $0x510] sm:$0xff]
    %v319 = vld [vmem:[#allocation5 + $0x518] sm:$0xff]
    %v320 = vld [vmem:[#allocation5 + $0x520] sm:$0xff]
    %v321 = vld [vmem:[#allocation5 + $0x528] sm:$0xff]
    %v322 = vld [vmem:[#allocation5 + $0x530] sm:$0xff]
    %v323 = vld [vmem:[#allocation5 + $0x538] sm:$0xff]
    %v324 = vld [vmem:[#allocation5 + $0x540] sm:$0xff]
    %v325 = vld [vmem:[#allocation5 + $0x548] sm:$0xff]
    %v326 = vld [vmem:[#allocation5 + $0x550] sm:$0xff]
    %v327 = vld [vmem:[#allocation5 + $0x558] sm:$0xff]
    %v328 = vld [vmem:[#allocation5 + $0x560] sm:$0xff]
    %v329 = vld [vmem:[#allocation5 + $0x568] sm:$0xff]
    %v330 = vld [vmem:[#allocation5 + $0x570] sm:$0xff]
    %v331 = vld [vmem:[#allocation5 + $0x578] sm:$0xff]
    %v332 = vld [vmem:[#allocation5 + $0x580] sm:$0xff]
    %v333 = vld [vmem:[#allocation5 + $0x588] sm:$0xff]
    %v334 = vld [vmem:[#allocation5 + $0x590] sm:$0xff]
    %v335 = vld [vmem:[#allocation5 + $0x598] sm:$0xff]
    %v336 = vld [vmem:[#allocation5 + $0x5a0] sm:$0xff]
    %v337 = vld [vmem:[#allocation5 + $0x5a8] sm:$0xff]
    %v338 = vld [vmem:[#allocation5 + $0x5b0] sm:$0xff]
    %v339 = vld [vmem:[#allocation5 + $0x5b8] sm:$0xff]
    %v340 = vld [vmem:[#allocation5 + $0x5c0] sm:$0xff]
    %v341 = vld [vmem:[#allocation5 + $0x5c8] sm:$0xff]
    %v342 = vld [vmem:[#allocation5 + $0x5d0] sm:$0xff]
    %v343 = vld [vmem:[#allocation5 + $0x5d8] sm:$0xff]
    %v344 = vld [vmem:[#allocation5 + $0x5e0] sm:$0xff]
    %v345 = vld [vmem:[#allocation5 + $0x5e8] sm:$0xff]
    %v346 = vld [vmem:[#allocation5 + $0x5f0] sm:$0xff]
    %v347 = vld [vmem:[#allocation5 + $0x5f8] sm:$0xff]
    %v348 = vld [vmem:[#allocation5 + $0x600] sm:$0xff]
    %v349 = vld [vmem:[#allocation5 + $0x608] sm:$0xff]
    %v350 = vld [vmem:[#allocation5 + $0x610] sm:$0xff]
    %v351 = vld [vmem:[#allocation5 + $0x618] sm:$0xff]
    %v352 = vld [vmem:[#allocation5 + $0x620] sm:$0xff]
    %v353 = vld [vmem:[#allocation5 + $0x628] sm:$0xff]
    %v354 = vld [vmem:[#allocation5 + $0x630] sm:$0xff]
    %v355 = vld [vmem:[#allocation5 + $0x638] sm:$0xff]
    %v356 = vld [vmem:[#allocation5 + $0x640] sm:$0xff]
    %v357 = vld [vmem:[#allocation5 + $0x648] sm:$0xff]
    %v358 = vld [vmem:[#allocation5 + $0x650] sm:$0xff]
    %v359 = vld [vmem:[#allocation5 + $0x658] sm:$0xff]
    %v360 = vld [vmem:[#allocation5 + $0x660] sm:$0xff]
    %v361 = vld [vmem:[#allocation5 + $0x668] sm:$0xff]
    %v362 = vld [vmem:[#allocation5 + $0x670] sm:$0xff]
    %v363 = vld [vmem:[#allocation5 + $0x678] sm:$0xff]
    %v364 = vld [vmem:[#allocation5 + $0x680] sm:$0xff]
    %v365 = vld [vmem:[#allocation5 + $0x688] sm:$0xff]
    %v366 = vld [vmem:[#allocation5 + $0x690] sm:$0xff]
    %v367 = vld [vmem:[#allocation5 + $0x698] sm:$0xff]
    %v368 = vld [vmem:[#allocation5 + $0x6a0] sm:$0xff]
    %v369 = vld [vmem:[#allocation5 + $0x6a8] sm:$0xff]
    %v370 = vld [vmem:[#allocation5 + $0x6b0] sm:$0xff]
    %v371 = vld [vmem:[#allocation5 + $0x6b8] sm:$0xff]
    %v372 = vld [vmem:[#allocation5 + $0x6c0] sm:$0xff]
    %v373 = vld [vmem:[#allocation5 + $0x6c8] sm:$0xff]
    %v374 = vld [vmem:[#allocation5 + $0x6d0] sm:$0xff]
    %v375 = vld [vmem:[#allocation5 + $0x6d8] sm:$0xff]
    %v376 = vld [vmem:[#allocation5 + $0x6e0] sm:$0xff]
    %v377 = vld [vmem:[#allocation5 + $0x6e8] sm:$0xff]
    %v378 = vld [vmem:[#allocation5 + $0x6f0] sm:$0xff]
    %v379 = vld [vmem:[#allocation5 + $0x6f8] sm:$0xff]
    %v380 = vld [vmem:[#allocation5 + $0x700] sm:$0xff]
    %v381 = vld [vmem:[#allocation5 + $0x708] sm:$0xff]
    %v382 = vld [vmem:[#allocation5 + $0x710] sm:$0xff]
    %v383 = vld [vmem:[#allocation5 + $0x718] sm:$0xff]
    %v384 = vld [vmem:[#allocation5 + $0x720] sm:$0xff]
    %v385 = vld [vmem:[#allocation5 + $0x728] sm:$0xff]
    %v386 = vld [vmem:[#allocation5 + $0x730] sm:$0xff]
    %v387 = vld [vmem:[#allocation5 + $0x738] sm:$0xff]
    %v388 = vld [vmem:[#allocation5 + $0x740] sm:$0xff]
    %v389 = vld [vmem:[#allocation5 + $0x748] sm:$0xff]
    %v390 = vld [vmem:[#allocation5 + $0x750] sm:$0xff]
    %v391 = vld [vmem:[#allocation5 + $0x758] sm:$0xff]
    %v392 = vld [vmem:[#allocation5 + $0x760] sm:$0xff]
    %v393 = vld [vmem:[#allocation5 + $0x768] sm:$0xff]
    %v394 = vld [vmem:[#allocation5 + $0x770] sm:$0xff]
    %v395 = vld [vmem:[#allocation5 + $0x778] sm:$0xff]
    %v396 = vld [vmem:[#allocation5 + $0x780] sm:$0xff]
    %v397 = vld [vmem:[#allocation5 + $0x788] sm:$0xff]
    %v398 = vld [vmem:[#allocation5 + $0x790] sm:$0xff]
    %v399 = vld [vmem:[#allocation5 + $0x798] sm:$0xff]
    %v400 = vld [vmem:[#allocation5 + $0x7a0] sm:$0xff]
    %v401 = vld [vmem:[#allocation5 + $0x7a8] sm:$0xff]
    %v402 = vld [vmem:[#allocation5 + $0x7b0] sm:$0xff]
    %v403 = vld [vmem:[#allocation5 + $0x7b8] sm:$0xff]
    %v404 = vld [vmem:[#allocation5 + $0x7c0] sm:$0xff]
    %v405 = vld [vmem:[#allocation5 + $0x7c8] sm:$0xff]
    %v406 = vld [vmem:[#allocation5 + $0x7d0] sm:$0xff]
    %v407 = vld [vmem:[#allocation5 + $0x7d8] sm:$0xff]
    %v408 = vld [vmem:[#allocation5 + $0x7e0] sm:$0xff]
    %v409 = vld [vmem:[#allocation5 + $0x7e8] sm:$0xff]
    %v410 = vld [vmem:[#allocation5 + $0x7f0] sm:$0xff]
    %v411 = vld [vmem:[#allocation5 + $0x7f8] sm:$0xff]
    %v412 = vld [vmem:[#allocation5 + $0x800] sm:$0xff]
    %v413 = vld [vmem:[#allocation5 + $0x808] sm:$0xff]
    %v414 = vld [vmem:[#allocation5 + $0x810] sm:$0xff]
    %v415 = vld [vmem:[#allocation5 + $0x818] sm:$0xff]
    %v416 = vld [vmem:[#allocation5 + $0x820] sm:$0xff]
    %v417 = vld [vmem:[#allocation5 + $0x828] sm:$0xff]
    %v418 = vld [vmem:[#allocation5 + $0x830] sm:$0xff]
    %v419 = vld [vmem:[#allocation5 + $0x838] sm:$0xff]
    %v420 = vld [vmem:[#allocation5 + $0x840] sm:$0xff]
    %v421 = vld [vmem:[#allocation5 + $0x848] sm:$0xff]
    %v422 = vld [vmem:[#allocation5 + $0x850] sm:$0xff]
    %v423 = vld [vmem:[#allocation5 + $0x858] sm:$0xff]
    %v424 = vld [vmem:[#allocation5 + $0x860] sm:$0xff]
    %v425 = vld [vmem:[#allocation5 + $0x868] sm:$0xff]
    %v426 = vld [vmem:[#allocation5 + $0x870] sm:$0xff]
    %v427 = vld [vmem:[#allocation5 + $0x878] sm:$0xff]
    %v428 = vld [vmem:[#allocation5 + $0x880] sm:$0xff]
    %v429 = vld [vmem:[#allocation5 + $0x888] sm:$0xff]
    %v430 = vld [vmem:[#allocation5 + $0x890] sm:$0xff]
    %v431 = vld [vmem:[#allocation5 + $0x898] sm:$0xff]
    %v432 = vld [vmem:[#allocation5 + $0x8a0] sm:$0xff]
    %v433 = vld [vmem:[#allocation5 + $0x8a8] sm:$0xff]
    %v434 = vld [vmem:[#allocation5 + $0x8b0] sm:$0xff]
    %v435 = vld [vmem:[#allocation5 + $0x8b8] sm:$0xff]
    %v436 = vld [vmem:[#allocation5 + $0x8c0] sm:$0xff]
    %v437 = vld [vmem:[#allocation5 + $0x8c8] sm:$0xff]
    %v438 = vld [vmem:[#allocation5 + $0x8d0] sm:$0xff]
    %v439 = vld [vmem:[#allocation5 + $0x8d8] sm:$0xff]
    %v440 = vld [vmem:[#allocation5 + $0x8e0] sm:$0xff]
    %v441 = vld [vmem:[#allocation5 + $0x8e8] sm:$0xff]
    %v442 = vld [vmem:[#allocation5 + $0x8f0] sm:$0xff]
    %v443 = vld [vmem:[#allocation5 + $0x8f8] sm:$0xff]
    %v444 = vld [vmem:[#allocation5 + $0x900] sm:$0xff]
    %v445 = vld [vmem:[#allocation5 + $0x908] sm:$0xff]
    %v446 = vld [vmem:[#allocation5 + $0x910] sm:$0xff]
    %v447 = vld [vmem:[#allocation5 + $0x918] sm:$0xff]
    %v448 = vld [vmem:[#allocation5 + $0x920] sm:$0xff]
    %v449 = vld [vmem:[#allocation5 + $0x928] sm:$0xff]
    %v450 = vld [vmem:[#allocation5 + $0x930] sm:$0xff]
    %v451 = vld [vmem:[#allocation5 + $0x938] sm:$0xff]
    %v452 = vld [vmem:[#allocation5 + $0x940] sm:$0xff]
    %v453 = vld [vmem:[#allocation5 + $0x948] sm:$0xff]
    %v454 = vld [vmem:[#allocation5 + $0x950] sm:$0xff]
    %v455 = vld [vmem:[#allocation5 + $0x958] sm:$0xff]
    %v456 = vld [vmem:[#allocation5 + $0x960] sm:$0xff]
    %v457 = vld [vmem:[#allocation5 + $0x968] sm:$0xff]
    %v458 = vld [vmem:[#allocation5 + $0x970] sm:$0xff]
    %v459 = vld [vmem:[#allocation5 + $0x978] sm:$0xff]
    %v460 = vld [vmem:[#allocation5 + $0x980] sm:$0xff]
    %v461 = vld [vmem:[#allocation5 + $0x988] sm:$0xff]
    %v462 = vld [vmem:[#allocation5 + $0x990] sm:$0xff]
    %v463 = vld [vmem:[#allocation5 + $0x998] sm:$0xff]
    %v464 = vld [vmem:[#allocation5 + $0x9a0] sm:$0xff]
    %v465 = vld [vmem:[#allocation5 + $0x9a8] sm:$0xff]
    %v466 = vld [vmem:[#allocation5 + $0x9b0] sm:$0xff]
    %v467 = vld [vmem:[#allocation5 + $0x9b8] sm:$0xff]
    %v468 = vld [vmem:[#allocation5 + $0x9c0] sm:$0xff]
    %v469 = vld [vmem:[#allocation5 + $0x9c8] sm:$0xff]
    %v470 = vld [vmem:[#allocation5 + $0x9d0] sm:$0xff]
    %v471 = vld [vmem:[#allocation5 + $0x9d8] sm:$0xff]
    %v472 = vld [vmem:[#allocation5 + $0x9e0] sm:$0xff]
    %v473 = vld [vmem:[#allocation5 + $0x9e8] sm:$0xff]
    %v474 = vld [vmem:[#allocation5 + $0x9f0] sm:$0xff]
    %v475 = vld [vmem:[#allocation5 + $0x9f8] sm:$0xff]
    %v476 = vld [vmem:[#allocation7] sm:$0xff]
    %v478 = vlaneseq
    %v479 = vshrl.u32 %v478, 7
    %v480 = vsub.s32 0, %v479
    %v481 = vrot.slane %v476, %v480
    %v482 = vlaneseq
    %v483 = vshrl.u32 %v482, 7
    %v484 = vsub.s32 1, %v483
    %v485 = vrot.slane %v476, %v484
    %v486 = vlaneseq
    %v487 = vshrl.u32 %v486, 7
    %v488 = vsub.s32 2, %v487
    %v489 = vrot.slane %v476, %v488
    %v490 = vlaneseq
    %v491 = vshrl.u32 %v490, 7
    %v492 = vsub.s32 3, %v491
    %v493 = vrot.slane %v476, %v492
    %v494 = vlaneseq
    %v495 = vshrl.u32 %v494, 7
    %v496 = vsub.s32 4, %v495
    %v497 = vrot.slane %v476, %v496
    %v498 = vlaneseq
    %v499 = vshrl.u32 %v498, 7
    %v500 = vsub.s32 5, %v499
    %v501 = vrot.slane %v476, %v500
    %v502 = vlaneseq
    %v503 = vshrl.u32 %v502, 7
    %v504 = vsub.s32 6, %v503
    %v505 = vrot.slane %v476, %v504
    %v506 = vlaneseq
    %v507 = vshrl.u32 %v506, 7
    %v508 = vsub.s32 7, %v507
    %v509 = vrot.slane %v476, %v508
    %v838 = vunpack.c.l.b16 %v156
    %v839 = vunpack.c.h.b16 %v156
    %v840 = vunpack.c.l.b16 %v157
    %v841 = vunpack.c.h.b16 %v157
    %v842 = vunpack.c.l.b16 %v158
    %v843 = vunpack.c.h.b16 %v158
    %v844 = vunpack.c.l.b16 %v159
    %v845 = vunpack.c.h.b16 %v159
    %v846 = vunpack.c.l.b16 %v160
    %v847 = vunpack.c.h.b16 %v160
    %v848 = vunpack.c.l.b16 %v161
    %v849 = vunpack.c.h.b16 %v161
    %v850 = vunpack.c.l.b16 %v162
    %v851 = vunpack.c.h.b16 %v162
    %v852 = vunpack.c.l.b16 %v163
    %v853 = vunpack.c.h.b16 %v163
    %v854 = vunpack.c.l.b16 %v164
    %v855 = vunpack.c.h.b16 %v164
    %v856 = vunpack.c.l.b16 %v165
    %v857 = vunpack.c.h.b16 %v165
    %v858 = vunpack.c.l.b16 %v166
    %v859 = vunpack.c.h.b16 %v166
    %v860 = vunpack.c.l.b16 %v167
    %v861 = vunpack.c.h.b16 %v167
    %v862 = vunpack.c.l.b16 %v168
    %v863 = vunpack.c.h.b16 %v168
    %v864 = vunpack.c.l.b16 %v169
    %v865 = vunpack.c.h.b16 %v169
    %v866 = vunpack.c.l.b16 %v170
    %v867 = vunpack.c.h.b16 %v170
    %v868 = vunpack.c.l.b16 %v171
    %v869 = vunpack.c.h.b16 %v171
    %v870 = vunpack.c.l.b16 %v172
    %v871 = vunpack.c.h.b16 %v172
    %v872 = vunpack.c.l.b16 %v173
    %v873 = vunpack.c.h.b16 %v173
    %v874 = vunpack.c.l.b16 %v174
    %v875 = vunpack.c.h.b16 %v174
    %v876 = vunpack.c.l.b16 %v175
    %v877 = vunpack.c.h.b16 %v175
    %v878 = vunpack.c.l.b16 %v176
    %v879 = vunpack.c.h.b16 %v176
    %v880 = vunpack.c.l.b16 %v177
    %v881 = vunpack.c.h.b16 %v177
    %v882 = vunpack.c.l.b16 %v178
    %v883 = vunpack.c.h.b16 %v178
    %v884 = vunpack.c.l.b16 %v179
    %v885 = vunpack.c.h.b16 %v179
    %v886 = vunpack.c.l.b16 %v180
    %v887 = vunpack.c.h.b16 %v180
    %v888 = vunpack.c.l.b16 %v181
    %v889 = vunpack.c.h.b16 %v181
    %v890 = vunpack.c.l.b16 %v182
    %v891 = vunpack.c.h.b16 %v182
    %v892 = vunpack.c.l.b16 %v183
    %v893 = vunpack.c.h.b16 %v183
    %v894 = vunpack.c.l.b16 %v184
    %v895 = vunpack.c.h.b16 %v184
    %v896 = vunpack.c.l.b16 %v185
    %v897 = vunpack.c.h.b16 %v185
    %v898 = vunpack.c.l.b16 %v186
    %v899 = vunpack.c.h.b16 %v186
    %v900 = vunpack.c.l.b16 %v187
    %v901 = vunpack.c.h.b16 %v187
    %v902 = vunpack.c.l.b16 %v188
    %v903 = vunpack.c.h.b16 %v188
    %v904 = vunpack.c.l.b16 %v189
    %v905 = vunpack.c.h.b16 %v189
    %v906 = vunpack.c.l.b16 %v190
    %v907 = vunpack.c.h.b16 %v190
    %v908 = vunpack.c.l.b16 %v191
    %v909 = vunpack.c.h.b16 %v191
    %v910 = vunpack.c.l.b16 %v192
    %v911 = vunpack.c.h.b16 %v192
    %v912 = vunpack.c.l.b16 %v193
    %v913 = vunpack.c.h.b16 %v193
    %v914 = vunpack.c.l.b16 %v194
    %v915 = vunpack.c.h.b16 %v194
    %v916 = vunpack.c.l.b16 %v195
    %v917 = vunpack.c.h.b16 %v195
    %v918 = vunpack.c.l.b16 %v196
    %v919 = vunpack.c.h.b16 %v196
    %v920 = vunpack.c.l.b16 %v197
    %v921 = vunpack.c.h.b16 %v197
    %v922 = vunpack.c.l.b16 %v198
    %v923 = vunpack.c.h.b16 %v198
    %v924 = vunpack.c.l.b16 %v199
    %v925 = vunpack.c.h.b16 %v199
    %v926 = vunpack.c.l.b16 %v200
    %v927 = vunpack.c.h.b16 %v200
    %v928 = vunpack.c.l.b16 %v201
    %v929 = vunpack.c.h.b16 %v201
    %v930 = vunpack.c.l.b16 %v202
    %v931 = vunpack.c.h.b16 %v202
    %v932 = vunpack.c.l.b16 %v203
    %v933 = vunpack.c.h.b16 %v203
    %v934 = vunpack.c.l.b16 %v204
    %v935 = vunpack.c.h.b16 %v204
    %v936 = vunpack.c.l.b16 %v205
    %v937 = vunpack.c.h.b16 %v205
    %v938 = vunpack.c.l.b16 %v206
    %v939 = vunpack.c.h.b16 %v206
    %v940 = vunpack.c.l.b16 %v207
    %v941 = vunpack.c.h.b16 %v207
    %v942 = vunpack.c.l.b16 %v208
    %v943 = vunpack.c.h.b16 %v208
    %v944 = vunpack.c.l.b16 %v209
    %v945 = vunpack.c.h.b16 %v209
    %v946 = vunpack.c.l.b16 %v210
    %v947 = vunpack.c.h.b16 %v210
    %v948 = vunpack.c.l.b16 %v211
    %v949 = vunpack.c.h.b16 %v211
    %v950 = vunpack.c.l.b16 %v212
    %v951 = vunpack.c.h.b16 %v212
    %v952 = vunpack.c.l.b16 %v213
    %v953 = vunpack.c.h.b16 %v213
    %v954 = vunpack.c.l.b16 %v214
    %v955 = vunpack.c.h.b16 %v214
    %v956 = vunpack.c.l.b16 %v215
    %v957 = vunpack.c.h.b16 %v215
    %v958 = vunpack.c.l.b16 %v216
    %v959 = vunpack.c.h.b16 %v216
    %v960 = vunpack.c.l.b16 %v217
    %v961 = vunpack.c.h.b16 %v217
    %v962 = vunpack.c.l.b16 %v218
    %v963 = vunpack.c.h.b16 %v218
    %v964 = vunpack.c.l.b16 %v219
    %v965 = vunpack.c.h.b16 %v219
    %v966 = vunpack.c.l.b16 %v220
    %v967 = vunpack.c.h.b16 %v220
    %v968 = vunpack.c.l.b16 %v221
    %v969 = vunpack.c.h.b16 %v221
    %v970 = vunpack.c.l.b16 %v222
    %v971 = vunpack.c.h.b16 %v222
    %v972 = vunpack.c.l.b16 %v223
    %v973 = vunpack.c.h.b16 %v223
    %v974 = vunpack.c.l.b16 %v224
    %v975 = vunpack.c.h.b16 %v224
    %v976 = vunpack.c.l.b16 %v225
    %v977 = vunpack.c.h.b16 %v225
    %v978 = vunpack.c.l.b16 %v226
    %v979 = vunpack.c.h.b16 %v226
    %v980 = vunpack.c.l.b16 %v227
    %v981 = vunpack.c.h.b16 %v227
    %v982 = vunpack.c.l.b16 %v228
    %v983 = vunpack.c.h.b16 %v228
    %v984 = vunpack.c.l.b16 %v229
    %v985 = vunpack.c.h.b16 %v229
    %v986 = vunpack.c.l.b16 %v230
    %v987 = vunpack.c.h.b16 %v230
    %v988 = vunpack.c.l.b16 %v231
    %v989 = vunpack.c.h.b16 %v231
    %v990 = vunpack.c.l.b16 %v232
    %v991 = vunpack.c.h.b16 %v232
    %v992 = vunpack.c.l.b16 %v233
    %v993 = vunpack.c.h.b16 %v233
    %v994 = vunpack.c.l.b16 %v234
    %v995 = vunpack.c.h.b16 %v234
    %v996 = vunpack.c.l.b16 %v235
    %v997 = vunpack.c.h.b16 %v235
    %v998 = vunpack.c.l.b16 %v236
    %v999 = vunpack.c.h.b16 %v236
    %v1000 = vunpack.c.l.b16 %v237
    %v1001 = vunpack.c.h.b16 %v237
    %v1002 = vunpack.c.l.b16 %v238
    %v1003 = vunpack.c.h.b16 %v238
    %v1004 = vunpack.c.l.b16 %v239
    %v1005 = vunpack.c.h.b16 %v239
    %v1006 = vunpack.c.l.b16 %v240
    %v1007 = vunpack.c.h.b16 %v240
    %v1008 = vunpack.c.l.b16 %v241
    %v1009 = vunpack.c.h.b16 %v241
    %v1010 = vunpack.c.l.b16 %v242
    %v1011 = vunpack.c.h.b16 %v242
    %v1012 = vunpack.c.l.b16 %v243
    %v1013 = vunpack.c.h.b16 %v243
    %v1014 = vunpack.c.l.b16 %v244
    %v1015 = vunpack.c.h.b16 %v244
    %v1016 = vunpack.c.l.b16 %v245
    %v1017 = vunpack.c.h.b16 %v245
    %v1018 = vunpack.c.l.b16 %v246
    %v1019 = vunpack.c.h.b16 %v246
    %v1020 = vunpack.c.l.b16 %v247
    %v1021 = vunpack.c.h.b16 %v247
    %v1022 = vunpack.c.l.b16 %v248
    %v1023 = vunpack.c.h.b16 %v248
    %v1024 = vunpack.c.l.b16 %v249
    %v1025 = vunpack.c.h.b16 %v249
    %v1026 = vunpack.c.l.b16 %v250
    %v1027 = vunpack.c.h.b16 %v250
    %v1028 = vunpack.c.l.b16 %v251
    %v1029 = vunpack.c.h.b16 %v251
    %v1030 = vunpack.c.l.b16 %v252
    %v1031 = vunpack.c.h.b16 %v252
    %v1032 = vunpack.c.l.b16 %v253
    %v1033 = vunpack.c.h.b16 %v253
    %v1034 = vunpack.c.l.b16 %v254
    %v1035 = vunpack.c.h.b16 %v254
    %v1036 = vunpack.c.l.b16 %v255
    %v1037 = vunpack.c.h.b16 %v255
    %v1038 = vunpack.c.l.b16 %v256
    %v1039 = vunpack.c.h.b16 %v256
    %v1040 = vunpack.c.l.b16 %v257
    %v1041 = vunpack.c.h.b16 %v257
    %v1042 = vunpack.c.l.b16 %v258
    %v1043 = vunpack.c.h.b16 %v258
    %v1044 = vunpack.c.l.b16 %v259
    %v1045 = vunpack.c.h.b16 %v259
    %v1046 = vunpack.c.l.b16 %v260
    %v1047 = vunpack.c.h.b16 %v260
    %v1048 = vunpack.c.l.b16 %v261
    %v1049 = vunpack.c.h.b16 %v261
    %v1050 = vunpack.c.l.b16 %v262
    %v1051 = vunpack.c.h.b16 %v262
    %v1052 = vunpack.c.l.b16 %v263
    %v1053 = vunpack.c.h.b16 %v263
    %v1054 = vunpack.c.l.b16 %v264
    %v1055 = vunpack.c.h.b16 %v264
    %v1056 = vunpack.c.l.b16 %v265
    %v1057 = vunpack.c.h.b16 %v265
    %v1058 = vunpack.c.l.b16 %v266
    %v1059 = vunpack.c.h.b16 %v266
    %v1060 = vunpack.c.l.b16 %v267
    %v1061 = vunpack.c.h.b16 %v267
    %v1062 = vunpack.c.l.b16 %v268
    %v1063 = vunpack.c.h.b16 %v268
    %v1064 = vunpack.c.l.b16 %v269
    %v1065 = vunpack.c.h.b16 %v269
    %v1066 = vunpack.c.l.b16 %v270
    %v1067 = vunpack.c.h.b16 %v270
    %v1068 = vunpack.c.l.b16 %v271
    %v1069 = vunpack.c.h.b16 %v271
    %v1070 = vunpack.c.l.b16 %v272
    %v1071 = vunpack.c.h.b16 %v272
    %v1072 = vunpack.c.l.b16 %v273
    %v1073 = vunpack.c.h.b16 %v273
    %v1074 = vunpack.c.l.b16 %v274
    %v1075 = vunpack.c.h.b16 %v274
    %v1076 = vunpack.c.l.b16 %v275
    %v1077 = vunpack.c.h.b16 %v275
    %v1078 = vunpack.c.l.b16 %v276
    %v1079 = vunpack.c.h.b16 %v276
    %v1080 = vunpack.c.l.b16 %v277
    %v1081 = vunpack.c.h.b16 %v277
    %v1082 = vunpack.c.l.b16 %v278
    %v1083 = vunpack.c.h.b16 %v278
    %v1084 = vunpack.c.l.b16 %v279
    %v1085 = vunpack.c.h.b16 %v279
    %v1086 = vunpack.c.l.b16 %v280
    %v1087 = vunpack.c.h.b16 %v280
    %v1088 = vunpack.c.l.b16 %v281
    %v1089 = vunpack.c.h.b16 %v281
    %v1090 = vunpack.c.l.b16 %v282
    %v1091 = vunpack.c.h.b16 %v282
    %v1092 = vunpack.c.l.b16 %v283
    %v1093 = vunpack.c.h.b16 %v283
    %v1094 = vunpack.c.l.b16 %v284
    %v1095 = vunpack.c.h.b16 %v284
    %v1096 = vunpack.c.l.b16 %v285
    %v1097 = vunpack.c.h.b16 %v285
    %v1098 = vunpack.c.l.b16 %v286
    %v1099 = vunpack.c.h.b16 %v286
    %v1100 = vunpack.c.l.b16 %v287
    %v1101 = vunpack.c.h.b16 %v287
    %v1102 = vunpack.c.l.b16 %v288
    %v1103 = vunpack.c.h.b16 %v288
    %v1104 = vunpack.c.l.b16 %v289
    %v1105 = vunpack.c.h.b16 %v289
    %v1106 = vunpack.c.l.b16 %v290
    %v1107 = vunpack.c.h.b16 %v290
    %v1108 = vunpack.c.l.b16 %v291
    %v1109 = vunpack.c.h.b16 %v291
    %v1110 = vunpack.c.l.b16 %v292
    %v1111 = vunpack.c.h.b16 %v292
    %v1112 = vunpack.c.l.b16 %v293
    %v1113 = vunpack.c.h.b16 %v293
    %v1114 = vunpack.c.l.b16 %v294
    %v1115 = vunpack.c.h.b16 %v294
    %v1116 = vunpack.c.l.b16 %v295
    %v1117 = vunpack.c.h.b16 %v295
    %v1118 = vunpack.c.l.b16 %v296
    %v1119 = vunpack.c.h.b16 %v296
    %v1120 = vunpack.c.l.b16 %v297
    %v1121 = vunpack.c.h.b16 %v297
    %v1122 = vunpack.c.l.b16 %v298
    %v1123 = vunpack.c.h.b16 %v298
    %v1124 = vunpack.c.l.b16 %v299
    %v1125 = vunpack.c.h.b16 %v299
    %v1126 = vunpack.c.l.b16 %v300
    %v1127 = vunpack.c.h.b16 %v300
    %v1128 = vunpack.c.l.b16 %v301
    %v1129 = vunpack.c.h.b16 %v301
    %v1130 = vunpack.c.l.b16 %v302
    %v1131 = vunpack.c.h.b16 %v302
    %v1132 = vunpack.c.l.b16 %v303
    %v1133 = vunpack.c.h.b16 %v303
    %v1134 = vunpack.c.l.b16 %v304
    %v1135 = vunpack.c.h.b16 %v304
    %v1136 = vunpack.c.l.b16 %v305
    %v1137 = vunpack.c.h.b16 %v305
    %v1138 = vunpack.c.l.b16 %v306
    %v1139 = vunpack.c.h.b16 %v306
    %v1140 = vunpack.c.l.b16 %v307
    %v1141 = vunpack.c.h.b16 %v307
    %v1142 = vunpack.c.l.b16 %v308
    %v1143 = vunpack.c.h.b16 %v308
    %v1144 = vunpack.c.l.b16 %v309
    %v1145 = vunpack.c.h.b16 %v309
    %v1146 = vunpack.c.l.b16 %v310
    %v1147 = vunpack.c.h.b16 %v310
    %v1148 = vunpack.c.l.b16 %v311
    %v1149 = vunpack.c.h.b16 %v311
    %v1150 = vunpack.c.l.b16 %v312
    %v1151 = vunpack.c.h.b16 %v312
    %v1152 = vunpack.c.l.b16 %v313
    %v1153 = vunpack.c.h.b16 %v313
    %v1154 = vunpack.c.l.b16 %v314
    %v1155 = vunpack.c.h.b16 %v314
    %v1156 = vunpack.c.l.b16 %v315
    %v1157 = vunpack.c.h.b16 %v315
    %v1158 = vunpack.c.l.b16 %v316
    %v1159 = vunpack.c.h.b16 %v316
    %v1160 = vunpack.c.l.b16 %v317
    %v1161 = vunpack.c.h.b16 %v317
    %v1162 = vunpack.c.l.b16 %v318
    %v1163 = vunpack.c.h.b16 %v318
    %v1164 = vunpack.c.l.b16 %v319
    %v1165 = vunpack.c.h.b16 %v319
    %v1166 = vunpack.c.l.b16 %v320
    %v1167 = vunpack.c.h.b16 %v320
    %v1168 = vunpack.c.l.b16 %v321
    %v1169 = vunpack.c.h.b16 %v321
    %v1170 = vunpack.c.l.b16 %v322
    %v1171 = vunpack.c.h.b16 %v322
    %v1172 = vunpack.c.l.b16 %v323
    %v1173 = vunpack.c.h.b16 %v323
    %v1174 = vunpack.c.l.b16 %v324
    %v1175 = vunpack.c.h.b16 %v324
    %v1176 = vunpack.c.l.b16 %v325
    %v1177 = vunpack.c.h.b16 %v325
    %v1178 = vunpack.c.l.b16 %v326
    %v1179 = vunpack.c.h.b16 %v326
    %v1180 = vunpack.c.l.b16 %v327
    %v1181 = vunpack.c.h.b16 %v327
    %v1182 = vunpack.c.l.b16 %v328
    %v1183 = vunpack.c.h.b16 %v328
    %v1184 = vunpack.c.l.b16 %v329
    %v1185 = vunpack.c.h.b16 %v329
    %v1186 = vunpack.c.l.b16 %v330
    %v1187 = vunpack.c.h.b16 %v330
    %v1188 = vunpack.c.l.b16 %v331
    %v1189 = vunpack.c.h.b16 %v331
    %v1190 = vunpack.c.l.b16 %v332
    %v1191 = vunpack.c.h.b16 %v332
    %v1192 = vunpack.c.l.b16 %v333
    %v1193 = vunpack.c.h.b16 %v333
    %v1194 = vunpack.c.l.b16 %v334
    %v1195 = vunpack.c.h.b16 %v334
    %v1196 = vunpack.c.l.b16 %v335
    %v1197 = vunpack.c.h.b16 %v335
    %v1198 = vunpack.c.l.b16 %v336
    %v1199 = vunpack.c.h.b16 %v336
    %v1200 = vunpack.c.l.b16 %v337
    %v1201 = vunpack.c.h.b16 %v337
    %v1202 = vunpack.c.l.b16 %v338
    %v1203 = vunpack.c.h.b16 %v338
    %v1204 = vunpack.c.l.b16 %v339
    %v1205 = vunpack.c.h.b16 %v339
    %v1206 = vunpack.c.l.b16 %v340
    %v1207 = vunpack.c.h.b16 %v340
    %v1208 = vunpack.c.l.b16 %v341
    %v1209 = vunpack.c.h.b16 %v341
    %v1210 = vunpack.c.l.b16 %v342
    %v1211 = vunpack.c.h.b16 %v342
    %v1212 = vunpack.c.l.b16 %v343
    %v1213 = vunpack.c.h.b16 %v343
    %v1214 = vunpack.c.l.b16 %v344
    %v1215 = vunpack.c.h.b16 %v344
    %v1216 = vunpack.c.l.b16 %v345
    %v1217 = vunpack.c.h.b16 %v345
    %v1218 = vunpack.c.l.b16 %v346
    %v1219 = vunpack.c.h.b16 %v346
    %v1220 = vunpack.c.l.b16 %v347
    %v1221 = vunpack.c.h.b16 %v347
    %v1222 = vunpack.c.l.b16 %v348
    %v1223 = vunpack.c.h.b16 %v348
    %v1224 = vunpack.c.l.b16 %v349
    %v1225 = vunpack.c.h.b16 %v349
    %v1226 = vunpack.c.l.b16 %v350
    %v1227 = vunpack.c.h.b16 %v350
    %v1228 = vunpack.c.l.b16 %v351
    %v1229 = vunpack.c.h.b16 %v351
    %v1230 = vunpack.c.l.b16 %v352
    %v1231 = vunpack.c.h.b16 %v352
    %v1232 = vunpack.c.l.b16 %v353
    %v1233 = vunpack.c.h.b16 %v353
    %v1234 = vunpack.c.l.b16 %v354
    %v1235 = vunpack.c.h.b16 %v354
    %v1236 = vunpack.c.l.b16 %v355
    %v1237 = vunpack.c.h.b16 %v355
    %v1238 = vunpack.c.l.b16 %v356
    %v1239 = vunpack.c.h.b16 %v356
    %v1240 = vunpack.c.l.b16 %v357
    %v1241 = vunpack.c.h.b16 %v357
    %v1242 = vunpack.c.l.b16 %v358
    %v1243 = vunpack.c.h.b16 %v358
    %v1244 = vunpack.c.l.b16 %v359
    %v1245 = vunpack.c.h.b16 %v359
    %v1246 = vunpack.c.l.b16 %v360
    %v1247 = vunpack.c.h.b16 %v360
    %v1248 = vunpack.c.l.b16 %v361
    %v1249 = vunpack.c.h.b16 %v361
    %v1250 = vunpack.c.l.b16 %v362
    %v1251 = vunpack.c.h.b16 %v362
    %v1252 = vunpack.c.l.b16 %v363
    %v1253 = vunpack.c.h.b16 %v363
    %v1254 = vunpack.c.l.b16 %v364
    %v1255 = vunpack.c.h.b16 %v364
    %v1256 = vunpack.c.l.b16 %v365
    %v1257 = vunpack.c.h.b16 %v365
    %v1258 = vunpack.c.l.b16 %v366
    %v1259 = vunpack.c.h.b16 %v366
    %v1260 = vunpack.c.l.b16 %v367
    %v1261 = vunpack.c.h.b16 %v367
    %v1262 = vunpack.c.l.b16 %v368
    %v1263 = vunpack.c.h.b16 %v368
    %v1264 = vunpack.c.l.b16 %v369
    %v1265 = vunpack.c.h.b16 %v369
    %v1266 = vunpack.c.l.b16 %v370
    %v1267 = vunpack.c.h.b16 %v370
    %v1268 = vunpack.c.l.b16 %v371
    %v1269 = vunpack.c.h.b16 %v371
    %v1270 = vunpack.c.l.b16 %v372
    %v1271 = vunpack.c.h.b16 %v372
    %v1272 = vunpack.c.l.b16 %v373
    %v1273 = vunpack.c.h.b16 %v373
    %v1274 = vunpack.c.l.b16 %v374
    %v1275 = vunpack.c.h.b16 %v374
    %v1276 = vunpack.c.l.b16 %v375
    %v1277 = vunpack.c.h.b16 %v375
    %v1278 = vunpack.c.l.b16 %v376
    %v1279 = vunpack.c.h.b16 %v376
    %v1280 = vunpack.c.l.b16 %v377
    %v1281 = vunpack.c.h.b16 %v377
    %v1282 = vunpack.c.l.b16 %v378
    %v1283 = vunpack.c.h.b16 %v378
    %v1284 = vunpack.c.l.b16 %v379
    %v1285 = vunpack.c.h.b16 %v379
    %v1286 = vunpack.c.l.b16 %v380
    %v1287 = vunpack.c.h.b16 %v380
    %v1288 = vunpack.c.l.b16 %v381
    %v1289 = vunpack.c.h.b16 %v381
    %v1290 = vunpack.c.l.b16 %v382
    %v1291 = vunpack.c.h.b16 %v382
    %v1292 = vunpack.c.l.b16 %v383
    %v1293 = vunpack.c.h.b16 %v383
    %v1294 = vunpack.c.l.b16 %v384
    %v1295 = vunpack.c.h.b16 %v384
    %v1296 = vunpack.c.l.b16 %v385
    %v1297 = vunpack.c.h.b16 %v385
    %v1298 = vunpack.c.l.b16 %v386
    %v1299 = vunpack.c.h.b16 %v386
    %v1300 = vunpack.c.l.b16 %v387
    %v1301 = vunpack.c.h.b16 %v387
    %v1302 = vunpack.c.l.b16 %v388
    %v1303 = vunpack.c.h.b16 %v388
    %v1304 = vunpack.c.l.b16 %v389
    %v1305 = vunpack.c.h.b16 %v389
    %v1306 = vunpack.c.l.b16 %v390
    %v1307 = vunpack.c.h.b16 %v390
    %v1308 = vunpack.c.l.b16 %v391
    %v1309 = vunpack.c.h.b16 %v391
    %v1310 = vunpack.c.l.b16 %v392
    %v1311 = vunpack.c.h.b16 %v392
    %v1312 = vunpack.c.l.b16 %v393
    %v1313 = vunpack.c.h.b16 %v393
    %v1314 = vunpack.c.l.b16 %v394
    %v1315 = vunpack.c.h.b16 %v394
    %v1316 = vunpack.c.l.b16 %v395
    %v1317 = vunpack.c.h.b16 %v395
    %v1318 = vunpack.c.l.b16 %v396
    %v1319 = vunpack.c.h.b16 %v396
    %v1320 = vunpack.c.l.b16 %v397
    %v1321 = vunpack.c.h.b16 %v397
    %v1322 = vunpack.c.l.b16 %v398
    %v1323 = vunpack.c.h.b16 %v398
    %v1324 = vunpack.c.l.b16 %v399
    %v1325 = vunpack.c.h.b16 %v399
    %v1326 = vunpack.c.l.b16 %v400
    %v1327 = vunpack.c.h.b16 %v400
    %v1328 = vunpack.c.l.b16 %v401
    %v1329 = vunpack.c.h.b16 %v401
    %v1330 = vunpack.c.l.b16 %v402
    %v1331 = vunpack.c.h.b16 %v402
    %v1332 = vunpack.c.l.b16 %v403
    %v1333 = vunpack.c.h.b16 %v403
    %v1334 = vunpack.c.l.b16 %v404
    %v1335 = vunpack.c.h.b16 %v404
    %v1336 = vunpack.c.l.b16 %v405
    %v1337 = vunpack.c.h.b16 %v405
    %v1338 = vunpack.c.l.b16 %v406
    %v1339 = vunpack.c.h.b16 %v406
    %v1340 = vunpack.c.l.b16 %v407
    %v1341 = vunpack.c.h.b16 %v407
    %v1342 = vunpack.c.l.b16 %v408
    %v1343 = vunpack.c.h.b16 %v408
    %v1344 = vunpack.c.l.b16 %v409
    %v1345 = vunpack.c.h.b16 %v409
    %v1346 = vunpack.c.l.b16 %v410
    %v1347 = vunpack.c.h.b16 %v410
    %v1348 = vunpack.c.l.b16 %v411
    %v1349 = vunpack.c.h.b16 %v411
    %v1350 = vunpack.c.l.b16 %v412
    %v1351 = vunpack.c.h.b16 %v412
    %v1352 = vunpack.c.l.b16 %v413
    %v1353 = vunpack.c.h.b16 %v413
    %v1354 = vunpack.c.l.b16 %v414
    %v1355 = vunpack.c.h.b16 %v414
    %v1356 = vunpack.c.l.b16 %v415
    %v1357 = vunpack.c.h.b16 %v415
    %v1358 = vunpack.c.l.b16 %v416
    %v1359 = vunpack.c.h.b16 %v416
    %v1360 = vunpack.c.l.b16 %v417
    %v1361 = vunpack.c.h.b16 %v417
    %v1362 = vunpack.c.l.b16 %v418
    %v1363 = vunpack.c.h.b16 %v418
    %v1364 = vunpack.c.l.b16 %v419
    %v1365 = vunpack.c.h.b16 %v419
    %v1366 = vunpack.c.l.b16 %v420
    %v1367 = vunpack.c.h.b16 %v420
    %v1368 = vunpack.c.l.b16 %v421
    %v1369 = vunpack.c.h.b16 %v421
    %v1370 = vunpack.c.l.b16 %v422
    %v1371 = vunpack.c.h.b16 %v422
    %v1372 = vunpack.c.l.b16 %v423
    %v1373 = vunpack.c.h.b16 %v423
    %v1374 = vunpack.c.l.b16 %v424
    %v1375 = vunpack.c.h.b16 %v424
    %v1376 = vunpack.c.l.b16 %v425
    %v1377 = vunpack.c.h.b16 %v425
    %v1378 = vunpack.c.l.b16 %v426
    %v1379 = vunpack.c.h.b16 %v426
    %v1380 = vunpack.c.l.b16 %v427
    %v1381 = vunpack.c.h.b16 %v427
    %v1382 = vunpack.c.l.b16 %v428
    %v1383 = vunpack.c.h.b16 %v428
    %v1384 = vunpack.c.l.b16 %v429
    %v1385 = vunpack.c.h.b16 %v429
    %v1386 = vunpack.c.l.b16 %v430
    %v1387 = vunpack.c.h.b16 %v430
    %v1388 = vunpack.c.l.b16 %v431
    %v1389 = vunpack.c.h.b16 %v431
    %v1390 = vunpack.c.l.b16 %v432
    %v1391 = vunpack.c.h.b16 %v432
    %v1392 = vunpack.c.l.b16 %v433
    %v1393 = vunpack.c.h.b16 %v433
    %v1394 = vunpack.c.l.b16 %v434
    %v1395 = vunpack.c.h.b16 %v434
    %v1396 = vunpack.c.l.b16 %v435
    %v1397 = vunpack.c.h.b16 %v435
    %v1398 = vunpack.c.l.b16 %v436
    %v1399 = vunpack.c.h.b16 %v436
    %v1400 = vunpack.c.l.b16 %v437
    %v1401 = vunpack.c.h.b16 %v437
    %v1402 = vunpack.c.l.b16 %v438
    %v1403 = vunpack.c.h.b16 %v438
    %v1404 = vunpack.c.l.b16 %v439
    %v1405 = vunpack.c.h.b16 %v439
    %v1406 = vunpack.c.l.b16 %v440
    %v1407 = vunpack.c.h.b16 %v440
    %v1408 = vunpack.c.l.b16 %v441
    %v1409 = vunpack.c.h.b16 %v441
    %v1410 = vunpack.c.l.b16 %v442
    %v1411 = vunpack.c.h.b16 %v442
    %v1412 = vunpack.c.l.b16 %v443
    %v1413 = vunpack.c.h.b16 %v443
    %v1414 = vunpack.c.l.b16 %v444
    %v1415 = vunpack.c.h.b16 %v444
    %v1416 = vunpack.c.l.b16 %v445
    %v1417 = vunpack.c.h.b16 %v445
    %v1418 = vunpack.c.l.b16 %v446
    %v1419 = vunpack.c.h.b16 %v446
    %v1420 = vunpack.c.l.b16 %v447
    %v1421 = vunpack.c.h.b16 %v447
    %v1422 = vunpack.c.l.b16 %v448
    %v1423 = vunpack.c.h.b16 %v448
    %v1424 = vunpack.c.l.b16 %v449
    %v1425 = vunpack.c.h.b16 %v449
    %v1426 = vunpack.c.l.b16 %v450
    %v1427 = vunpack.c.h.b16 %v450
    %v1428 = vunpack.c.l.b16 %v451
    %v1429 = vunpack.c.h.b16 %v451
    %v1430 = vunpack.c.l.b16 %v452
    %v1431 = vunpack.c.h.b16 %v452
    %v1432 = vunpack.c.l.b16 %v453
    %v1433 = vunpack.c.h.b16 %v453
    %v1434 = vunpack.c.l.b16 %v454
    %v1435 = vunpack.c.h.b16 %v454
    %v1436 = vunpack.c.l.b16 %v455
    %v1437 = vunpack.c.h.b16 %v455
    %v1438 = vunpack.c.l.b16 %v456
    %v1439 = vunpack.c.h.b16 %v456
    %v1440 = vunpack.c.l.b16 %v457
    %v1441 = vunpack.c.h.b16 %v457
    %v1442 = vunpack.c.l.b16 %v458
    %v1443 = vunpack.c.h.b16 %v458
    %v1444 = vunpack.c.l.b16 %v459
    %v1445 = vunpack.c.h.b16 %v459
    %v1446 = vunpack.c.l.b16 %v460
    %v1447 = vunpack.c.h.b16 %v460
    %v1448 = vunpack.c.l.b16 %v461
    %v1449 = vunpack.c.h.b16 %v461
    %v1450 = vunpack.c.l.b16 %v462
    %v1451 = vunpack.c.h.b16 %v462
    %v1452 = vunpack.c.l.b16 %v463
    %v1453 = vunpack.c.h.b16 %v463
    %v1454 = vunpack.c.l.b16 %v464
    %v1455 = vunpack.c.h.b16 %v464
    %v1456 = vunpack.c.l.b16 %v465
    %v1457 = vunpack.c.h.b16 %v465
    %v1458 = vunpack.c.l.b16 %v466
    %v1459 = vunpack.c.h.b16 %v466
    %v1460 = vunpack.c.l.b16 %v467
    %v1461 = vunpack.c.h.b16 %v467
    %v1462 = vunpack.c.l.b16 %v468
    %v1463 = vunpack.c.h.b16 %v468
    %v1464 = vunpack.c.l.b16 %v469
    %v1465 = vunpack.c.h.b16 %v469
    %v1466 = vunpack.c.l.b16 %v470
    %v1467 = vunpack.c.h.b16 %v470
    %v1468 = vunpack.c.l.b16 %v471
    %v1469 = vunpack.c.h.b16 %v471
    %v1470 = vunpack.c.l.b16 %v472
    %v1471 = vunpack.c.h.b16 %v472
    %v1472 = vunpack.c.l.b16 %v473
    %v1473 = vunpack.c.h.b16 %v473
    %v1474 = vunpack.c.l.b16 %v474
    %v1475 = vunpack.c.h.b16 %v474
    %v1476 = vunpack.c.l.b16 %v475
    %v1477 = vunpack.c.h.b16 %v475
    %v1478 = vpack.c.b16 %v846, %v838
    %v1479 = vpack.c.b16 %v847, %v839
    %v1480 = vpack.c.b16 %v848, %v840
    %v1481 = vpack.c.b16 %v849, %v841
    %v1482 = vpack.c.b16 %v850, %v842
    %v1483 = vpack.c.b16 %v851, %v843
    %v1484 = vpack.c.b16 %v852, %v844
    %v1485 = vpack.c.b16 %v853, %v845
    %v1486 = vpack.c.b16 %v862, %v854
    %v1487 = vpack.c.b16 %v863, %v855
    %v1488 = vpack.c.b16 %v864, %v856
    %v1489 = vpack.c.b16 %v865, %v857
    %v1490 = vpack.c.b16 %v866, %v858
    %v1491 = vpack.c.b16 %v867, %v859
    %v1492 = vpack.c.b16 %v868, %v860
    %v1493 = vpack.c.b16 %v869, %v861
    %v1494 = vpack.c.b16 %v878, %v870
    %v1495 = vpack.c.b16 %v879, %v871
    %v1496 = vpack.c.b16 %v880, %v872
    %v1497 = vpack.c.b16 %v881, %v873
    %v1498 = vpack.c.b16 %v882, %v874
    %v1499 = vpack.c.b16 %v883, %v875
    %v1500 = vpack.c.b16 %v884, %v876
    %v1501 = vpack.c.b16 %v885, %v877
    %v1502 = vpack.c.b16 %v894, %v886
    %v1503 = vpack.c.b16 %v895, %v887
    %v1504 = vpack.c.b16 %v896, %v888
    %v1505 = vpack.c.b16 %v897, %v889
    %v1506 = vpack.c.b16 %v898, %v890
    %v1507 = vpack.c.b16 %v899, %v891
    %v1508 = vpack.c.b16 %v900, %v892
    %v1509 = vpack.c.b16 %v901, %v893
    %v1510 = vpack.c.b16 %v910, %v902
    %v1511 = vpack.c.b16 %v911, %v903
    %v1512 = vpack.c.b16 %v912, %v904
    %v1513 = vpack.c.b16 %v913, %v905
    %v1514 = vpack.c.b16 %v914, %v906
    %v1515 = vpack.c.b16 %v915, %v907
    %v1516 = vpack.c.b16 %v916, %v908
    %v1517 = vpack.c.b16 %v917, %v909
    %v1518 = vpack.c.b16 %v926, %v918
    %v1519 = vpack.c.b16 %v927, %v919
    %v1520 = vpack.c.b16 %v928, %v920
    %v1521 = vpack.c.b16 %v929, %v921
    %v1522 = vpack.c.b16 %v930, %v922
    %v1523 = vpack.c.b16 %v931, %v923
    %v1524 = vpack.c.b16 %v932, %v924
    %v1525 = vpack.c.b16 %v933, %v925
    %v1526 = vpack.c.b16 %v942, %v934
    %v1527 = vpack.c.b16 %v943, %v935
    %v1528 = vpack.c.b16 %v944, %v936
    %v1529 = vpack.c.b16 %v945, %v937
    %v1530 = vpack.c.b16 %v946, %v938
    %v1531 = vpack.c.b16 %v947, %v939
    %v1532 = vpack.c.b16 %v948, %v940
    %v1533 = vpack.c.b16 %v949, %v941
    %v1534 = vpack.c.b16 %v958, %v950
    %v1535 = vpack.c.b16 %v959, %v951
    %v1536 = vpack.c.b16 %v960, %v952
    %v1537 = vpack.c.b16 %v961, %v953
    %v1538 = vpack.c.b16 %v962, %v954
    %v1539 = vpack.c.b16 %v963, %v955
    %v1540 = vpack.c.b16 %v964, %v956
    %v1541 = vpack.c.b16 %v965, %v957
    %v1542 = vpack.c.b16 %v974, %v966
    %v1543 = vpack.c.b16 %v975, %v967
    %v1544 = vpack.c.b16 %v976, %v968
    %v1545 = vpack.c.b16 %v977, %v969
    %v1546 = vpack.c.b16 %v978, %v970
    %v1547 = vpack.c.b16 %v979, %v971
    %v1548 = vpack.c.b16 %v980, %v972
    %v1549 = vpack.c.b16 %v981, %v973
    %v1550 = vpack.c.b16 %v990, %v982
    %v1551 = vpack.c.b16 %v991, %v983
    %v1552 = vpack.c.b16 %v992, %v984
    %v1553 = vpack.c.b16 %v993, %v985
    %v1554 = vpack.c.b16 %v994, %v986
    %v1555 = vpack.c.b16 %v995, %v987
    %v1556 = vpack.c.b16 %v996, %v988
    %v1557 = vpack.c.b16 %v997, %v989
    %v1558 = vpack.c.b16 %v1006, %v998
    %v1559 = vpack.c.b16 %v1007, %v999
    %v1560 = vpack.c.b16 %v1008, %v1000
    %v1561 = vpack.c.b16 %v1009, %v1001
    %v1562 = vpack.c.b16 %v1010, %v1002
    %v1563 = vpack.c.b16 %v1011, %v1003
    %v1564 = vpack.c.b16 %v1012, %v1004
    %v1565 = vpack.c.b16 %v1013, %v1005
    %v1566 = vpack.c.b16 %v1022, %v1014
    %v1567 = vpack.c.b16 %v1023, %v1015
    %v1568 = vpack.c.b16 %v1024, %v1016
    %v1569 = vpack.c.b16 %v1025, %v1017
    %v1570 = vpack.c.b16 %v1026, %v1018
    %v1571 = vpack.c.b16 %v1027, %v1019
    %v1572 = vpack.c.b16 %v1028, %v1020
    %v1573 = vpack.c.b16 %v1029, %v1021
    %v1574 = vpack.c.b16 %v1038, %v1030
    %v1575 = vpack.c.b16 %v1039, %v1031
    %v1576 = vpack.c.b16 %v1040, %v1032
    %v1577 = vpack.c.b16 %v1041, %v1033
    %v1578 = vpack.c.b16 %v1042, %v1034
    %v1579 = vpack.c.b16 %v1043, %v1035
    %v1580 = vpack.c.b16 %v1044, %v1036
    %v1581 = vpack.c.b16 %v1045, %v1037
    %v1582 = vpack.c.b16 %v1054, %v1046
    %v1583 = vpack.c.b16 %v1055, %v1047
    %v1584 = vpack.c.b16 %v1056, %v1048
    %v1585 = vpack.c.b16 %v1057, %v1049
    %v1586 = vpack.c.b16 %v1058, %v1050
    %v1587 = vpack.c.b16 %v1059, %v1051
    %v1588 = vpack.c.b16 %v1060, %v1052
    %v1589 = vpack.c.b16 %v1061, %v1053
    %v1590 = vpack.c.b16 %v1070, %v1062
    %v1591 = vpack.c.b16 %v1071, %v1063
    %v1592 = vpack.c.b16 %v1072, %v1064
    %v1593 = vpack.c.b16 %v1073, %v1065
    %v1594 = vpack.c.b16 %v1074, %v1066
    %v1595 = vpack.c.b16 %v1075, %v1067
    %v1596 = vpack.c.b16 %v1076, %v1068
    %v1597 = vpack.c.b16 %v1077, %v1069
    %v1598 = vpack.c.b16 %v1086, %v1078
    %v1599 = vpack.c.b16 %v1087, %v1079
    %v1600 = vpack.c.b16 %v1088, %v1080
    %v1601 = vpack.c.b16 %v1089, %v1081
    %v1602 = vpack.c.b16 %v1090, %v1082
    %v1603 = vpack.c.b16 %v1091, %v1083
    %v1604 = vpack.c.b16 %v1092, %v1084
    %v1605 = vpack.c.b16 %v1093, %v1085
    %v1606 = vpack.c.b16 %v1102, %v1094
    %v1607 = vpack.c.b16 %v1103, %v1095
    %v1608 = vpack.c.b16 %v1104, %v1096
    %v1609 = vpack.c.b16 %v1105, %v1097
    %v1610 = vpack.c.b16 %v1106, %v1098
    %v1611 = vpack.c.b16 %v1107, %v1099
    %v1612 = vpack.c.b16 %v1108, %v1100
    %v1613 = vpack.c.b16 %v1109, %v1101
    %v1614 = vpack.c.b16 %v1118, %v1110
    %v1615 = vpack.c.b16 %v1119, %v1111
    %v1616 = vpack.c.b16 %v1120, %v1112
    %v1617 = vpack.c.b16 %v1121, %v1113
    %v1618 = vpack.c.b16 %v1122, %v1114
    %v1619 = vpack.c.b16 %v1123, %v1115
    %v1620 = vpack.c.b16 %v1124, %v1116
    %v1621 = vpack.c.b16 %v1125, %v1117
    %v1622 = vpack.c.b16 %v1134, %v1126
    %v1623 = vpack.c.b16 %v1135, %v1127
    %v1624 = vpack.c.b16 %v1136, %v1128
    %v1625 = vpack.c.b16 %v1137, %v1129
    %v1626 = vpack.c.b16 %v1138, %v1130
    %v1627 = vpack.c.b16 %v1139, %v1131
    %v1628 = vpack.c.b16 %v1140, %v1132
    %v1629 = vpack.c.b16 %v1141, %v1133
    %v1630 = vpack.c.b16 %v1150, %v1142
    %v1631 = vpack.c.b16 %v1151, %v1143
    %v1632 = vpack.c.b16 %v1152, %v1144
    %v1633 = vpack.c.b16 %v1153, %v1145
    %v1634 = vpack.c.b16 %v1154, %v1146
    %v1635 = vpack.c.b16 %v1155, %v1147
    %v1636 = vpack.c.b16 %v1156, %v1148
    %v1637 = vpack.c.b16 %v1157, %v1149
    %v1638 = vpack.c.b16 %v1166, %v1158
    %v1639 = vpack.c.b16 %v1167, %v1159
    %v1640 = vpack.c.b16 %v1168, %v1160
    %v1641 = vpack.c.b16 %v1169, %v1161
    %v1642 = vpack.c.b16 %v1170, %v1162
    %v1643 = vpack.c.b16 %v1171, %v1163
    %v1644 = vpack.c.b16 %v1172, %v1164
    %v1645 = vpack.c.b16 %v1173, %v1165
    %v1646 = vpack.c.b16 %v1182, %v1174
    %v1647 = vpack.c.b16 %v1183, %v1175
    %v1648 = vpack.c.b16 %v1184, %v1176
    %v1649 = vpack.c.b16 %v1185, %v1177
    %v1650 = vpack.c.b16 %v1186, %v1178
    %v1651 = vpack.c.b16 %v1187, %v1179
    %v1652 = vpack.c.b16 %v1188, %v1180
    %v1653 = vpack.c.b16 %v1189, %v1181
    %v1654 = vpack.c.b16 %v1198, %v1190
    %v1655 = vpack.c.b16 %v1199, %v1191
    %v1656 = vpack.c.b16 %v1200, %v1192
    %v1657 = vpack.c.b16 %v1201, %v1193
    %v1658 = vpack.c.b16 %v1202, %v1194
    %v1659 = vpack.c.b16 %v1203, %v1195
    %v1660 = vpack.c.b16 %v1204, %v1196
    %v1661 = vpack.c.b16 %v1205, %v1197
    %v1662 = vpack.c.b16 %v1214, %v1206
    %v1663 = vpack.c.b16 %v1215, %v1207
    %v1664 = vpack.c.b16 %v1216, %v1208
    %v1665 = vpack.c.b16 %v1217, %v1209
    %v1666 = vpack.c.b16 %v1218, %v1210
    %v1667 = vpack.c.b16 %v1219, %v1211
    %v1668 = vpack.c.b16 %v1220, %v1212
    %v1669 = vpack.c.b16 %v1221, %v1213
    %v1670 = vpack.c.b16 %v1230, %v1222
    %v1671 = vpack.c.b16 %v1231, %v1223
    %v1672 = vpack.c.b16 %v1232, %v1224
    %v1673 = vpack.c.b16 %v1233, %v1225
    %v1674 = vpack.c.b16 %v1234, %v1226
    %v1675 = vpack.c.b16 %v1235, %v1227
    %v1676 = vpack.c.b16 %v1236, %v1228
    %v1677 = vpack.c.b16 %v1237, %v1229
    %v1678 = vpack.c.b16 %v1246, %v1238
    %v1679 = vpack.c.b16 %v1247, %v1239
    %v1680 = vpack.c.b16 %v1248, %v1240
    %v1681 = vpack.c.b16 %v1249, %v1241
    %v1682 = vpack.c.b16 %v1250, %v1242
    %v1683 = vpack.c.b16 %v1251, %v1243
    %v1684 = vpack.c.b16 %v1252, %v1244
    %v1685 = vpack.c.b16 %v1253, %v1245
    %v1686 = vpack.c.b16 %v1262, %v1254
    %v1687 = vpack.c.b16 %v1263, %v1255
    %v1688 = vpack.c.b16 %v1264, %v1256
    %v1689 = vpack.c.b16 %v1265, %v1257
    %v1690 = vpack.c.b16 %v1266, %v1258
    %v1691 = vpack.c.b16 %v1267, %v1259
    %v1692 = vpack.c.b16 %v1268, %v1260
    %v1693 = vpack.c.b16 %v1269, %v1261
    %v1694 = vpack.c.b16 %v1278, %v1270
    %v1695 = vpack.c.b16 %v1279, %v1271
    %v1696 = vpack.c.b16 %v1280, %v1272
    %v1697 = vpack.c.b16 %v1281, %v1273
    %v1698 = vpack.c.b16 %v1282, %v1274
    %v1699 = vpack.c.b16 %v1283, %v1275
    %v1700 = vpack.c.b16 %v1284, %v1276
    %v1701 = vpack.c.b16 %v1285, %v1277
    %v1702 = vpack.c.b16 %v1294, %v1286
    %v1703 = vpack.c.b16 %v1295, %v1287
    %v1704 = vpack.c.b16 %v1296, %v1288
    %v1705 = vpack.c.b16 %v1297, %v1289
    %v1706 = vpack.c.b16 %v1298, %v1290
    %v1707 = vpack.c.b16 %v1299, %v1291
    %v1708 = vpack.c.b16 %v1300, %v1292
    %v1709 = vpack.c.b16 %v1301, %v1293
    %v1710 = vpack.c.b16 %v1310, %v1302
    %v1711 = vpack.c.b16 %v1311, %v1303
    %v1712 = vpack.c.b16 %v1312, %v1304
    %v1713 = vpack.c.b16 %v1313, %v1305
    %v1714 = vpack.c.b16 %v1314, %v1306
    %v1715 = vpack.c.b16 %v1315, %v1307
    %v1716 = vpack.c.b16 %v1316, %v1308
    %v1717 = vpack.c.b16 %v1317, %v1309
    %v1718 = vpack.c.b16 %v1326, %v1318
    %v1719 = vpack.c.b16 %v1327, %v1319
    %v1720 = vpack.c.b16 %v1328, %v1320
    %v1721 = vpack.c.b16 %v1329, %v1321
    %v1722 = vpack.c.b16 %v1330, %v1322
    %v1723 = vpack.c.b16 %v1331, %v1323
    %v1724 = vpack.c.b16 %v1332, %v1324
    %v1725 = vpack.c.b16 %v1333, %v1325
    %v1726 = vpack.c.b16 %v1342, %v1334
    %v1727 = vpack.c.b16 %v1343, %v1335
    %v1728 = vpack.c.b16 %v1344, %v1336
    %v1729 = vpack.c.b16 %v1345, %v1337
    %v1730 = vpack.c.b16 %v1346, %v1338
    %v1731 = vpack.c.b16 %v1347, %v1339
    %v1732 = vpack.c.b16 %v1348, %v1340
    %v1733 = vpack.c.b16 %v1349, %v1341
    %v1734 = vpack.c.b16 %v1358, %v1350
    %v1735 = vpack.c.b16 %v1359, %v1351
    %v1736 = vpack.c.b16 %v1360, %v1352
    %v1737 = vpack.c.b16 %v1361, %v1353
    %v1738 = vpack.c.b16 %v1362, %v1354
    %v1739 = vpack.c.b16 %v1363, %v1355
    %v1740 = vpack.c.b16 %v1364, %v1356
    %v1741 = vpack.c.b16 %v1365, %v1357
    %v1742 = vpack.c.b16 %v1374, %v1366
    %v1743 = vpack.c.b16 %v1375, %v1367
    %v1744 = vpack.c.b16 %v1376, %v1368
    %v1745 = vpack.c.b16 %v1377, %v1369
    %v1746 = vpack.c.b16 %v1378, %v1370
    %v1747 = vpack.c.b16 %v1379, %v1371
    %v1748 = vpack.c.b16 %v1380, %v1372
    %v1749 = vpack.c.b16 %v1381, %v1373
    %v1750 = vpack.c.b16 %v1390, %v1382
    %v1751 = vpack.c.b16 %v1391, %v1383
    %v1752 = vpack.c.b16 %v1392, %v1384
    %v1753 = vpack.c.b16 %v1393, %v1385
    %v1754 = vpack.c.b16 %v1394, %v1386
    %v1755 = vpack.c.b16 %v1395, %v1387
    %v1756 = vpack.c.b16 %v1396, %v1388
    %v1757 = vpack.c.b16 %v1397, %v1389
    %v1758 = vpack.c.b16 %v1406, %v1398
    %v1759 = vpack.c.b16 %v1407, %v1399
    %v1760 = vpack.c.b16 %v1408, %v1400
    %v1761 = vpack.c.b16 %v1409, %v1401
    %v1762 = vpack.c.b16 %v1410, %v1402
    %v1763 = vpack.c.b16 %v1411, %v1403
    %v1764 = vpack.c.b16 %v1412, %v1404
    %v1765 = vpack.c.b16 %v1413, %v1405
    %v1766 = vpack.c.b16 %v1422, %v1414
    %v1767 = vpack.c.b16 %v1423, %v1415
    %v1768 = vpack.c.b16 %v1424, %v1416
    %v1769 = vpack.c.b16 %v1425, %v1417
    %v1770 = vpack.c.b16 %v1426, %v1418
    %v1771 = vpack.c.b16 %v1427, %v1419
    %v1772 = vpack.c.b16 %v1428, %v1420
    %v1773 = vpack.c.b16 %v1429, %v1421
    %v1774 = vpack.c.b16 %v1438, %v1430
    %v1775 = vpack.c.b16 %v1439, %v1431
    %v1776 = vpack.c.b16 %v1440, %v1432
    %v1777 = vpack.c.b16 %v1441, %v1433
    %v1778 = vpack.c.b16 %v1442, %v1434
    %v1779 = vpack.c.b16 %v1443, %v1435
    %v1780 = vpack.c.b16 %v1444, %v1436
    %v1781 = vpack.c.b16 %v1445, %v1437
    %v1782 = vpack.c.b16 %v1454, %v1446
    %v1783 = vpack.c.b16 %v1455, %v1447
    %v1784 = vpack.c.b16 %v1456, %v1448
    %v1785 = vpack.c.b16 %v1457, %v1449
    %v1786 = vpack.c.b16 %v1458, %v1450
    %v1787 = vpack.c.b16 %v1459, %v1451
    %v1788 = vpack.c.b16 %v1460, %v1452
    %v1789 = vpack.c.b16 %v1461, %v1453
    %v1790 = vpack.c.b16 %v1470, %v1462
    %v1791 = vpack.c.b16 %v1471, %v1463
    %v1792 = vpack.c.b16 %v1472, %v1464
    %v1793 = vpack.c.b16 %v1473, %v1465
    %v1794 = vpack.c.b16 %v1474, %v1466
    %v1795 = vpack.c.b16 %v1475, %v1467
    %v1796 = vpack.c.b16 %v1476, %v1468
    %v1797 = vpack.c.b16 %v1477, %v1469
    %2118 = vmatprep.subr.bf16.mxu0 %v1479
    %2119 = vmatpush1.bf16.msra.mxu0 %v1478
    %2120 = vmatprep.subr.bf16.mxu0 %v1487
    %2121 = vmatpush1.bf16.msra.mxu0 %v1486
    %2122 = vmatprep.subr.bf16.mxu0 %v1495
    %2123 = vmatpush1.bf16.msra.mxu0 %v1494
    %2124 = vmatprep.subr.bf16.mxu0 %v1503
    %2125 = vmatpush1.bf16.msra.mxu0 %v1502
    %2126 = vmatprep.subr.bf16.mxu0 %v1511
    %2127 = vmatpush1.bf16.msra.mxu0 %v1510
    %2128 = vmatprep.subr.bf16.mxu0 %v1519
    %2129 = vmatpush1.bf16.msra.mxu0 %v1518
    %2130 = vmatprep.subr.bf16.mxu0 %v1527
    %2131 = vmatpush1.bf16.msra.mxu0 %v1526
    %2132 = vmatprep.subr.bf16.mxu0 %v1535
    %2133 = vmatpush1.bf16.msra.mxu0 %v1534
    %2134 = vmatprep.subr.bf16.mxu0 %v1543
    %2135 = vmatpush1.bf16.msra.mxu0 %v1542
    %2136 = vmatprep.subr.bf16.mxu0 %v1551
    %2137 = vmatpush1.bf16.msra.mxu0 %v1550
    %2138 = vmatprep.subr.bf16.mxu0 %v1559
    %2139 = vmatpush1.bf16.msra.mxu0 %v1558
    %2140 = vmatprep.subr.bf16.mxu0 %v1567
    %2141 = vmatpush1.bf16.msra.mxu0 %v1566
    %2142 = vmatprep.subr.bf16.mxu0 %v1575
    %2143 = vmatpush1.bf16.msra.mxu0 %v1574
    %2144 = vmatprep.subr.bf16.mxu0 %v1583
    %2145 = vmatpush1.bf16.msra.mxu0 %v1582
    %2146 = vmatprep.subr.bf16.mxu0 %v1591
    %2147 = vmatpush1.bf16.msra.mxu0 %v1590
    %2148 = vmatprep.subr.bf16.mxu0 %v1599
    %2149 = vmatpush1.bf16.msra.mxu0 %v1598
    %2150 = vmatprep.mubr.bf16.mxu0 %v152
    %2151 = vmatmul.mubr.bf16.gmra.mrb[0].mxu0 %v151
    %v2152 = vpop.f32.mrb[0].mxu0
    %v2153 = vadd.f32 %v481, %v2152
    %v2154 = vpop.f32.mrb[0].mxu0
    %v2155 = vadd.f32 %v485, %v2154
    %v2156 = vpop.f32.mrb[0].mxu0
    %v2157 = vpop.f32.mrb[0].mxu0
    %2158 = vdwg.mxu0
    %2159 = vmatprep.subr.bf16.mxu0 %v1607
    %2160 = vmatpush1.bf16.msra.mxu0 %v1606
    %2161 = vmatprep.subr.bf16.mxu0 %v1615
    %2162 = vmatpush1.bf16.msra.mxu0 %v1614
    %2163 = vmatprep.subr.bf16.mxu0 %v1623
    %2164 = vmatpush1.bf16.msra.mxu0 %v1622
    %2165 = vmatprep.subr.bf16.mxu0 %v1631
    %2166 = vmatpush1.bf16.msra.mxu0 %v1630
    %2167 = vmatprep.subr.bf16.mxu0 %v1639
    %2168 = vmatpush1.bf16.msra.mxu0 %v1638
    %2169 = vmatprep.subr.bf16.mxu0 %v1647
    %2170 = vmatpush1.bf16.msra.mxu0 %v1646
    %2171 = vmatprep.subr.bf16.mxu0 %v1655
    %2172 = vmatpush1.bf16.msra.mxu0 %v1654
    %2173 = vmatprep.subr.bf16.mxu0 %v1663
    %2174 = vmatpush1.bf16.msra.mxu0 %v1662
    %2175 = vmatprep.subr.bf16.mxu0 %v1671
    %2176 = vmatpush1.bf16.msra.mxu0 %v1670
    %2177 = vmatprep.subr.bf16.mxu0 %v1679
    %2178 = vmatpush1.bf16.msra.mxu0 %v1678
    %2179 = vmatprep.subr.bf16.mxu0 %v1687
    %2180 = vmatpush1.bf16.msra.mxu0 %v1686
    %2181 = vmatprep.subr.bf16.mxu0 %v1695
    %2182 = vmatpush1.bf16.msra.mxu0 %v1694
    %2183 = vmatprep.subr.bf16.mxu0 %v1703
    %2184 = vmatpush1.bf16.msra.mxu0 %v1702
    %2185 = vmatprep.subr.bf16.mxu0 %v1711
    %2186 = vmatpush1.bf16.msra.mxu0 %v1710
    %2187 = vmatprep.subr.bf16.mxu0 %v1719
    %2188 = vmatpush1.bf16.msra.mxu0 %v1718
    %2189 = vmatprep.subr.bf16.mxu0 %v1727
    %2190 = vmatpush1.bf16.msra.mxu0 %v1726
    %2191 = vmatprep.mubr.bf16.mxu0 %v154
    %2192 = vmatmul.mubr.bf16.gmra.mrb[0].mxu0 %v153
    %v2193 = vpop.f32.mrb[0].mxu0
    %v2194 = vadd.f32 %v2153, %v2193
    %v2195 = vpop.f32.mrb[0].mxu0
    %v2196 = vadd.f32 %v2155, %v2195
    %v2197 = vpop.f32.mrb[0].mxu0
    %v2198 = vpop.f32.mrb[0].mxu0
    %2199 = vdwg.mxu0
    %2200 = vmatprep.subr.bf16.mxu0 %v1735
    %2201 = vmatpush1.bf16.msra.mxu0 %v1734
    %2202 = vmatprep.subr.bf16.mxu0 %v1743
    %2203 = vmatpush1.bf16.msra.mxu0 %v1742
    %2204 = vmatprep.subr.bf16.mxu0 %v1751
    %2205 = vmatpush1.bf16.msra.mxu0 %v1750
    %2206 = vmatprep.subr.bf16.mxu0 %v1759
    %2207 = vmatpush1.bf16.msra.mxu0 %v1758
    %2208 = vmatprep.subr.bf16.mxu0 %v1767
    %2209 = vmatpush1.bf16.msra.mxu0 %v1766
    %2210 = vmatprep.subr.bf16.mxu0 %v1775
    %2211 = vmatpush1.bf16.msra.mxu0 %v1774
    %2212 = vmatprep.subr.bf16.mxu0 %v1783
    %2213 = vmatpush1.bf16.msra.mxu0 %v1782
    %2214 = vmatprep.subr.bf16.mxu0 %v1791
    %2215 = vmatpush1.bf16.msra.mxu0 %v1790
    %2216 = vmatprep.subr.bf16.mxu0 0
    %2217 = vmatpush1.bf16.msra.mxu0 0
    %2218 = vmatprep.subr.bf16.mxu0 0
    %2219 = vmatpush1.bf16.msra.mxu0 0
    %2220 = vmatprep.subr.bf16.mxu0 0
    %2221 = vmatpush1.bf16.msra.mxu0 0
    %2222 = vmatprep.subr.bf16.mxu0 0
    %2223 = vmatpush1.bf16.msra.mxu0 0
    %2224 = vmatprep.subr.bf16.mxu0 0
    %2225 = vmatpush1.bf16.msra.mxu0 0
    %2226 = vmatprep.subr.bf16.mxu0 0
    %2227 = vmatpush1.bf16.msra.mxu0 0
    %2228 = vmatprep.subr.bf16.mxu0 0
    %2229 = vmatpush1.bf16.msra.mxu0 0
    %2230 = vmatprep.subr.bf16.mxu0 0
    %2231 = vmatpush1.bf16.msra.mxu0 0
    %2232 = vmatprep.mubr.bf16.mxu0 0
    %2233 = vmatmul.mubr.bf16.gmra.mrb[0].mxu0 %v155
    %v2234 = vpop.f32.mrb[0].mxu0
    %v2235 = vadd.f32 %v2194, %v2234
    %v2236 = vpop.f32.mrb[0].mxu0
    %v2237 = vadd.f32 %v2196, %v2236
    %v2238 = vpop.f32.mrb[0].mxu0
    %v2239 = vpop.f32.mrb[0].mxu0
    %2240 = vdwg.mxu0
    %2241 = vmatprep.subr.bf16.mxu0 %v1481
    %2242 = vmatpush1.bf16.msra.mxu0 %v1480
    %2243 = vmatprep.subr.bf16.mxu0 %v1489
    %2244 = vmatpush1.bf16.msra.mxu0 %v1488
    %2245 = vmatprep.subr.bf16.mxu0 %v1497
    %2246 = vmatpush1.bf16.msra.mxu0 %v1496
    %2247 = vmatprep.subr.bf16.mxu0 %v1505
    %2248 = vmatpush1.bf16.msra.mxu0 %v1504
    %2249 = vmatprep.subr.bf16.mxu0 %v1513
    %2250 = vmatpush1.bf16.msra.mxu0 %v1512
    %2251 = vmatprep.subr.bf16.mxu0 %v1521
    %2252 = vmatpush1.bf16.msra.mxu0 %v1520
    %2253 = vmatprep.subr.bf16.mxu0 %v1529
    %2254 = vmatpush1.bf16.msra.mxu0 %v1528
    %2255 = vmatprep.subr.bf16.mxu0 %v1537
    %2256 = vmatpush1.bf16.msra.mxu0 %v1536
    %2257 = vmatprep.subr.bf16.mxu0 %v1545
    %2258 = vmatpush1.bf16.msra.mxu0 %v1544
    %2259 = vmatprep.subr.bf16.mxu0 %v1553
    %2260 = vmatpush1.bf16.msra.mxu0 %v1552
    %2261 = vmatprep.subr.bf16.mxu0 %v1561
    %2262 = vmatpush1.bf16.msra.mxu0 %v1560
    %2263 = vmatprep.subr.bf16.mxu0 %v1569
    %2264 = vmatpush1.bf16.msra.mxu0 %v1568
    %2265 = vmatprep.subr.bf16.mxu0 %v1577
    %2266 = vmatpush1.bf16.msra.mxu0 %v1576
    %2267 = vmatprep.subr.bf16.mxu0 %v1585
    %2268 = vmatpush1.bf16.msra.mxu0 %v1584
    %2269 = vmatprep.subr.bf16.mxu0 %v1593
    %2270 = vmatpush1.bf16.msra.mxu0 %v1592
    %2271 = vmatprep.subr.bf16.mxu0 %v1601
    %2272 = vmatpush1.bf16.msra.mxu0 %v1600
    %2273 = vmatprep.mubr.bf16.mxu0 %v152
    %2274 = vmatmul.mubr.bf16.gmra.mrb[0].mxu0 %v151
    %v2275 = vpop.f32.mrb[0].mxu0
    %v2276 = vadd.f32 %v489, %v2275
    %v2277 = vpop.f32.mrb[0].mxu0
    %v2278 = vadd.f32 %v493, %v2277
    %v2279 = vpop.f32.mrb[0].mxu0
    %v2280 = vpop.f32.mrb[0].mxu0
    %2281 = vdwg.mxu0
    %2282 = vmatprep.subr.bf16.mxu0 %v1609
    %2283 = vmatpush1.bf16.msra.mxu0 %v1608
    %2284 = vmatprep.subr.bf16.mxu0 %v1617
    %2285 = vmatpush1.bf16.msra.mxu0 %v1616
    %2286 = vmatprep.subr.bf16.mxu0 %v1625
    %2287 = vmatpush1.bf16.msra.mxu0 %v1624
    %2288 = vmatprep.subr.bf16.mxu0 %v1633
    %2289 = vmatpush1.bf16.msra.mxu0 %v1632
    %2290 = vmatprep.subr.bf16.mxu0 %v1641
    %2291 = vmatpush1.bf16.msra.mxu0 %v1640
    %2292 = vmatprep.subr.bf16.mxu0 %v1649
    %2293 = vmatpush1.bf16.msra.mxu0 %v1648
    %2294 = vmatprep.subr.bf16.mxu0 %v1657
    %2295 = vmatpush1.bf16.msra.mxu0 %v1656
    %2296 = vmatprep.subr.bf16.mxu0 %v1665
    %2297 = vmatpush1.bf16.msra.mxu0 %v1664
    %2298 = vmatprep.subr.bf16.mxu0 %v1673
    %2299 = vmatpush1.bf16.msra.mxu0 %v1672
    %2300 = vmatprep.subr.bf16.mxu0 %v1681
    %2301 = vmatpush1.bf16.msra.mxu0 %v1680
    %2302 = vmatprep.subr.bf16.mxu0 %v1689
    %2303 = vmatpush1.bf16.msra.mxu0 %v1688
    %2304 = vmatprep.subr.bf16.mxu0 %v1697
    %2305 = vmatpush1.bf16.msra.mxu0 %v1696
    %2306 = vmatprep.subr.bf16.mxu0 %v1705
    %2307 = vmatpush1.bf16.msra.mxu0 %v1704
    %2308 = vmatprep.subr.bf16.mxu0 %v1713
    %2309 = vmatpush1.bf16.msra.mxu0 %v1712
    %2310 = vmatprep.subr.bf16.mxu0 %v1721
    %2311 = vmatpush1.bf16.msra.mxu0 %v1720
    %2312 = vmatprep.subr.bf16.mxu0 %v1729
    %2313 = vmatpush1.bf16.msra.mxu0 %v1728
    %2314 = vmatprep.mubr.bf16.mxu0 %v154
    %2315 = vmatmul.mubr.bf16.gmra.mrb[0].mxu0 %v153
    %v2316 = vpop.f32.mrb[0].mxu0
    %v2317 = vadd.f32 %v2276, %v2316
    %v2318 = vpop.f32.mrb[0].mxu0
    %v2319 = vadd.f32 %v2278, %v2318
    %v2320 = vpop.f32.mrb[0].mxu0
    %v2321 = vpop.f32.mrb[0].mxu0
    %2322 = vdwg.mxu0
    %2323 = vmatprep.subr.bf16.mxu0 %v1737
    %2324 = vmatpush1.bf16.msra.mxu0 %v1736
    %2325 = vmatprep.subr.bf16.mxu0 %v1745
    %2326 = vmatpush1.bf16.msra.mxu0 %v1744
    %2327 = vmatprep.subr.bf16.mxu0 %v1753
    %2328 = vmatpush1.bf16.msra.mxu0 %v1752
    %2329 = vmatprep.subr.bf16.mxu0 %v1761
    %2330 = vmatpush1.bf16.msra.mxu0 %v1760
    %2331 = vmatprep.subr.bf16.mxu0 %v1769
    %2332 = vmatpush1.bf16.msra.mxu0 %v1768
    %2333 = vmatprep.subr.bf16.mxu0 %v1777
    %2334 = vmatpush1.bf16.msra.mxu0 %v1776
    %2335 = vmatprep.subr.bf16.mxu0 %v1785
    %2336 = vmatpush1.bf16.msra.mxu0 %v1784
    %2337 = vmatprep.subr.bf16.mxu0 %v1793
    %2338 = vmatpush1.bf16.msra.mxu0 %v1792
    %2339 = vmatprep.subr.bf16.mxu0 0
    %2340 = vmatpush1.bf16.msra.mxu0 0
    %2341 = vmatprep.subr.bf16.mxu0 0
    %2342 = vmatpush1.bf16.msra.mxu0 0
    %2343 = vmatprep.subr.bf16.mxu0 0
    %2344 = vmatpush1.bf16.msra.mxu0 0
    %2345 = vmatprep.subr.bf16.mxu0 0
    %2346 = vmatpush1.bf16.msra.mxu0 0
    %2347 = vmatprep.subr.bf16.mxu0 0
    %2348 = vmatpush1.bf16.msra.mxu0 0
    %2349 = vmatprep.subr.bf16.mxu0 0
    %2350 = vmatpush1.bf16.msra.mxu0 0
    %2351 = vmatprep.subr.bf16.mxu0 0
    %2352 = vmatpush1.bf16.msra.mxu0 0
    %2353 = vmatprep.subr.bf16.mxu0 0
    %2354 = vmatpush1.bf16.msra.mxu0 0
    %2355 = vmatprep.mubr.bf16.mxu0 0
    %2356 = vmatmul.mubr.bf16.gmra.mrb[0].mxu0 %v155
    %v2357 = vpop.f32.mrb[0].mxu0
    %v2358 = vadd.f32 %v2317, %v2357
    %v2359 = vpop.f32.mrb[0].mxu0
    %v2360 = vadd.f32 %v2319, %v2359
    %v2361 = vpop.f32.mrb[0].mxu0
    %v2362 = vpop.f32.mrb[0].mxu0
    %2363 = vdwg.mxu0
    %2364 = vmatprep.subr.bf16.mxu0 %v1483
    %2365 = vmatpush1.bf16.msra.mxu0 %v1482
    %2366 = vmatprep.subr.bf16.mxu0 %v1491
    %2367 = vmatpush1.bf16.msra.mxu0 %v1490
    %2368 = vmatprep.subr.bf16.mxu0 %v1499
    %2369 = vmatpush1.bf16.msra.mxu0 %v1498
    %2370 = vmatprep.subr.bf16.mxu0 %v1507
    %2371 = vmatpush1.bf16.msra.mxu0 %v1506
    %2372 = vmatprep.subr.bf16.mxu0 %v1515
    %2373 = vmatpush1.bf16.msra.mxu0 %v1514
    %2374 = vmatprep.subr.bf16.mxu0 %v1523
    %2375 = vmatpush1.bf16.msra.mxu0 %v1522
    %2376 = vmatprep.subr.bf16.mxu0 %v1531
    %2377 = vmatpush1.bf16.msra.mxu0 %v1530
    %2378 = vmatprep.subr.bf16.mxu0 %v1539
    %2379 = vmatpush1.bf16.msra.mxu0 %v1538
    %2380 = vmatprep.subr.bf16.mxu0 %v1547
    %2381 = vmatpush1.bf16.msra.mxu0 %v1546
    %2382 = vmatprep.subr.bf16.mxu0 %v1555
    %2383 = vmatpush1.bf16.msra.mxu0 %v1554
    %2384 = vmatprep.subr.bf16.mxu0 %v1563
    %2385 = vmatpush1.bf16.msra.mxu0 %v1562
    %2386 = vmatprep.subr.bf16.mxu0 %v1571
    %2387 = vmatpush1.bf16.msra.mxu0 %v1570
    %2388 = vmatprep.subr.bf16.mxu0 %v1579
    %2389 = vmatpush1.bf16.msra.mxu0 %v1578
    %2390 = vmatprep.subr.bf16.mxu0 %v1587
    %2391 = vmatpush1.bf16.msra.mxu0 %v1586
    %2392 = vmatprep.subr.bf16.mxu0 %v1595
    %2393 = vmatpush1.bf16.msra.mxu0 %v1594
    %2394 = vmatprep.subr.bf16.mxu0 %v1603
    %2395 = vmatpush1.bf16.msra.mxu0 %v1602
    %2396 = vmatprep.mubr.bf16.mxu0 %v152
    %2397 = vmatmul.mubr.bf16.gmra.mrb[0].mxu0 %v151
    %v2398 = vpop.f32.mrb[0].mxu0
    %v2399 = vadd.f32 %v497, %v2398
    %v2400 = vpop.f32.mrb[0].mxu0
    %v2401 = vadd.f32 %v501, %v2400
    %v2402 = vpop.f32.mrb[0].mxu0
    %v2403 = vpop.f32.mrb[0].mxu0
    %2404 = vdwg.mxu0
    %2405 = vmatprep.subr.bf16.mxu0 %v1611
    %2406 = vmatpush1.bf16.msra.mxu0 %v1610
    %2407 = vmatprep.subr.bf16.mxu0 %v1619
    %2408 = vmatpush1.bf16.msra.mxu0 %v1618
    %2409 = vmatprep.subr.bf16.mxu0 %v1627
    %2410 = vmatpush1.bf16.msra.mxu0 %v1626
    %2411 = vmatprep.subr.bf16.mxu0 %v1635
    %2412 = vmatpush1.bf16.msra.mxu0 %v1634
    %2413 = vmatprep.subr.bf16.mxu0 %v1643
    %2414 = vmatpush1.bf16.msra.mxu0 %v1642
    %2415 = vmatprep.subr.bf16.mxu0 %v1651
    %2416 = vmatpush1.bf16.msra.mxu0 %v1650
    %2417 = vmatprep.subr.bf16.mxu0 %v1659
    %2418 = vmatpush1.bf16.msra.mxu0 %v1658
    %2419 = vmatprep.subr.bf16.mxu0 %v1667
    %2420 = vmatpush1.bf16.msra.mxu0 %v1666
    %2421 = vmatprep.subr.bf16.mxu0 %v1675
    %2422 = vmatpush1.bf16.msra.mxu0 %v1674
    %2423 = vmatprep.subr.bf16.mxu0 %v1683
    %2424 = vmatpush1.bf16.msra.mxu0 %v1682
    %2425 = vmatprep.subr.bf16.mxu0 %v1691
    %2426 = vmatpush1.bf16.msra.mxu0 %v1690
    %2427 = vmatprep.subr.bf16.mxu0 %v1699
    %2428 = vmatpush1.bf16.msra.mxu0 %v1698
    %2429 = vmatprep.subr.bf16.mxu0 %v1707
    %2430 = vmatpush1.bf16.msra.mxu0 %v1706
    %2431 = vmatprep.subr.bf16.mxu0 %v1715
    %2432 = vmatpush1.bf16.msra.mxu0 %v1714
    %2433 = vmatprep.subr.bf16.mxu0 %v1723
    %2434 = vmatpush1.bf16.msra.mxu0 %v1722
    %2435 = vmatprep.subr.bf16.mxu0 %v1731
    %2436 = vmatpush1.bf16.msra.mxu0 %v1730
    %2437 = vmatprep.mubr.bf16.mxu0 %v154
    %2438 = vmatmul.mubr.bf16.gmra.mrb[0].mxu0 %v153
    %v2439 = vpop.f32.mrb[0].mxu0
    %v2440 = vadd.f32 %v2399, %v2439
    %v2441 = vpop.f32.mrb[0].mxu0
    %v2442 = vadd.f32 %v2401, %v2441
    %v2443 = vpop.f32.mrb[0].mxu0
    %v2444 = vpop.f32.mrb[0].mxu0
    %2445 = vdwg.mxu0
    %2446 = vmatprep.subr.bf16.mxu0 %v1739
    %2447 = vmatpush1.bf16.msra.mxu0 %v1738
    %2448 = vmatprep.subr.bf16.mxu0 %v1747
    %2449 = vmatpush1.bf16.msra.mxu0 %v1746
    %2450 = vmatprep.subr.bf16.mxu0 %v1755
    %2451 = vmatpush1.bf16.msra.mxu0 %v1754
    %2452 = vmatprep.subr.bf16.mxu0 %v1763
    %2453 = vmatpush1.bf16.msra.mxu0 %v1762
    %2454 = vmatprep.subr.bf16.mxu0 %v1771
    %2455 = vmatpush1.bf16.msra.mxu0 %v1770
    %2456 = vmatprep.subr.bf16.mxu0 %v1779
    %2457 = vmatpush1.bf16.msra.mxu0 %v1778
    %2458 = vmatprep.subr.bf16.mxu0 %v1787
    %2459 = vmatpush1.bf16.msra.mxu0 %v1786
    %2460 = vmatprep.subr.bf16.mxu0 %v1795
    %2461 = vmatpush1.bf16.msra.mxu0 %v1794
    %2462 = vmatprep.subr.bf16.mxu0 0
    %2463 = vmatpush1.bf16.msra.mxu0 0
    %2464 = vmatprep.subr.bf16.mxu0 0
    %2465 = vmatpush1.bf16.msra.mxu0 0
    %2466 = vmatprep.subr.bf16.mxu0 0
    %2467 = vmatpush1.bf16.msra.mxu0 0
    %2468 = vmatprep.subr.bf16.mxu0 0
    %2469 = vmatpush1.bf16.msra.mxu0 0
    %2470 = vmatprep.subr.bf16.mxu0 0
    %2471 = vmatpush1.bf16.msra.mxu0 0
    %2472 = vmatprep.subr.bf16.mxu0 0
    %2473 = vmatpush1.bf16.msra.mxu0 0
    %2474 = vmatprep.subr.bf16.mxu0 0
    %2475 = vmatpush1.bf16.msra.mxu0 0
    %2476 = vmatprep.subr.bf16.mxu0 0
    %2477 = vmatpush1.bf16.msra.mxu0 0
    %2478 = vmatprep.mubr.bf16.mxu0 0
    %2479 = vmatmul.mubr.bf16.gmra.mrb[0].mxu0 %v155
    %v2480 = vpop.f32.mrb[0].mxu0
    %v2481 = vadd.f32 %v2440, %v2480
    %v2482 = vpop.f32.mrb[0].mxu0
    %v2483 = vadd.f32 %v2442, %v2482
    %v2484 = vpop.f32.mrb[0].mxu0
    %v2485 = vpop.f32.mrb[0].mxu0
    %2486 = vdwg.mxu0
    %2487 = vmatprep.subr.bf16.mxu0 %v1485
    %2488 = vmatpush1.bf16.msra.mxu0 %v1484
    %2489 = vmatprep.subr.bf16.mxu0 %v1493
    %2490 = vmatpush1.bf16.msra.mxu0 %v1492
    %2491 = vmatprep.subr.bf16.mxu0 %v1501
    %2492 = vmatpush1.bf16.msra.mxu0 %v1500
    %2493 = vmatprep.subr.bf16.mxu0 %v1509
    %2494 = vmatpush1.bf16.msra.mxu0 %v1508
    %2495 = vmatprep.subr.bf16.mxu0 %v1517
    %2496 = vmatpush1.bf16.msra.mxu0 %v1516
    %2497 = vmatprep.subr.bf16.mxu0 %v1525
    %2498 = vmatpush1.bf16.msra.mxu0 %v1524
    %2499 = vmatprep.subr.bf16.mxu0 %v1533
    %2500 = vmatpush1.bf16.msra.mxu0 %v1532
    %2501 = vmatprep.subr.bf16.mxu0 %v1541
    %2502 = vmatpush1.bf16.msra.mxu0 %v1540
    %2503 = vmatprep.subr.bf16.mxu0 %v1549
    %2504 = vmatpush1.bf16.msra.mxu0 %v1548
    %2505 = vmatprep.subr.bf16.mxu0 %v1557
    %2506 = vmatpush1.bf16.msra.mxu0 %v1556
    %2507 = vmatprep.subr.bf16.mxu0 %v1565
    %2508 = vmatpush1.bf16.msra.mxu0 %v1564
    %2509 = vmatprep.subr.bf16.mxu0 %v1573
    %2510 = vmatpush1.bf16.msra.mxu0 %v1572
    %2511 = vmatprep.subr.bf16.mxu0 %v1581
    %2512 = vmatpush1.bf16.msra.mxu0 %v1580
    %2513 = vmatprep.subr.bf16.mxu0 %v1589
    %2514 = vmatpush1.bf16.msra.mxu0 %v1588
    %2515 = vmatprep.subr.bf16.mxu0 %v1597
    %2516 = vmatpush1.bf16.msra.mxu0 %v1596
    %2517 = vmatprep.subr.bf16.mxu0 %v1605
    %2518 = vmatpush1.bf16.msra.mxu0 %v1604
    %2519 = vmatprep.mubr.bf16.mxu0 %v152
    %2520 = vmatmul.mubr.bf16.gmra.mrb[0].mxu0 %v151
    %v2521 = vpop.f32.mrb[0].mxu0
    %v2522 = vadd.f32 %v505, %v2521
    %v2523 = vpop.f32.mrb[0].mxu0
    %v2524 = vadd.f32 %v509, %v2523
    %v2525 = vpop.f32.mrb[0].mxu0
    %v2526 = vpop.f32.mrb[0].mxu0
    %2527 = vdwg.mxu0
    %2528 = vmatprep.subr.bf16.mxu0 %v1613
    %2529 = vmatpush1.bf16.msra.mxu0 %v1612
    %2530 = vmatprep.subr.bf16.mxu0 %v1621
    %2531 = vmatpush1.bf16.msra.mxu0 %v1620
    %2532 = vmatprep.subr.bf16.mxu0 %v1629
    %2533 = vmatpush1.bf16.msra.mxu0 %v1628
    %2534 = vmatprep.subr.bf16.mxu0 %v1637
    %2535 = vmatpush1.bf16.msra.mxu0 %v1636
    %2536 = vmatprep.subr.bf16.mxu0 %v1645
    %2537 = vmatpush1.bf16.msra.mxu0 %v1644
    %2538 = vmatprep.subr.bf16.mxu0 %v1653
    %2539 = vmatpush1.bf16.msra.mxu0 %v1652
    %2540 = vmatprep.subr.bf16.mxu0 %v1661
    %2541 = vmatpush1.bf16.msra.mxu0 %v1660
    %2542 = vmatprep.subr.bf16.mxu0 %v1669
    %2543 = vmatpush1.bf16.msra.mxu0 %v1668
    %2544 = vmatprep.subr.bf16.mxu0 %v1677
    %2545 = vmatpush1.bf16.msra.mxu0 %v1676
    %2546 = vmatprep.subr.bf16.mxu0 %v1685
    %2547 = vmatpush1.bf16.msra.mxu0 %v1684
    %2548 = vmatprep.subr.bf16.mxu0 %v1693
    %2549 = vmatpush1.bf16.msra.mxu0 %v1692
    %2550 = vmatprep.subr.bf16.mxu0 %v1701
    %2551 = vmatpush1.bf16.msra.mxu0 %v1700
    %2552 = vmatprep.subr.bf16.mxu0 %v1709
    %2553 = vmatpush1.bf16.msra.mxu0 %v1708
    %2554 = vmatprep.subr.bf16.mxu0 %v1717
    %2555 = vmatpush1.bf16.msra.mxu0 %v1716
    %2556 = vmatprep.subr.bf16.mxu0 %v1725
    %2557 = vmatpush1.bf16.msra.mxu0 %v1724
    %2558 = vmatprep.subr.bf16.mxu0 %v1733
    %2559 = vmatpush1.bf16.msra.mxu0 %v1732
    %2560 = vmatprep.mubr.bf16.mxu0 %v154
    %2561 = vmatmul.mubr.bf16.gmra.mrb[0].mxu0 %v153
    %v2562 = vpop.f32.mrb[0].mxu0
    %v2563 = vadd.f32 %v2522, %v2562
    %v2564 = vpop.f32.mrb[0].mxu0
    %v2565 = vadd.f32 %v2524, %v2564
    %v2566 = vpop.f32.mrb[0].mxu0
    %v2567 = vpop.f32.mrb[0].mxu0
    %2568 = vdwg.mxu0
    %2569 = vmatprep.subr.bf16.mxu0 %v1741
    %2570 = vmatpush1.bf16.msra.mxu0 %v1740
    %2571 = vmatprep.subr.bf16.mxu0 %v1749
    %2572 = vmatpush1.bf16.msra.mxu0 %v1748
    %2573 = vmatprep.subr.bf16.mxu0 %v1757
    %2574 = vmatpush1.bf16.msra.mxu0 %v1756
    %2575 = vmatprep.subr.bf16.mxu0 %v1765
    %2576 = vmatpush1.bf16.msra.mxu0 %v1764
    %2577 = vmatprep.subr.bf16.mxu0 %v1773
    %2578 = vmatpush1.bf16.msra.mxu0 %v1772
    %2579 = vmatprep.subr.bf16.mxu0 %v1781
    %2580 = vmatpush1.bf16.msra.mxu0 %v1780
    %2581 = vmatprep.subr.bf16.mxu0 %v1789
    %2582 = vmatpush1.bf16.msra.mxu0 %v1788
    %2583 = vmatprep.subr.bf16.mxu0 %v1797
    %2584 = vmatpush1.bf16.msra.mxu0 %v1796
    %2585 = vmatprep.subr.bf16.mxu0 0
    %2586 = vmatpush1.bf16.msra.mxu0 0
    %2587 = vmatprep.subr.bf16.mxu0 0
    %2588 = vmatpush1.bf16.msra.mxu0 0
    %2589 = vmatprep.subr.bf16.mxu0 0
    %2590 = vmatpush1.bf16.msra.mxu0 0
    %2591 = vmatprep.subr.bf16.mxu0 0
    %2592 = vmatpush1.bf16.msra.mxu0 0
    %2593 = vmatprep.subr.bf16.mxu0 0
    %2594 = vmatpush1.bf16.msra.mxu0 0
    %2595 = vmatprep.subr.bf16.mxu0 0
    %2596 = vmatpush1.bf16.msra.mxu0 0
    %2597 = vmatprep.subr.bf16.mxu0 0
    %2598 = vmatpush1.bf16.msra.mxu0 0
    %2599 = vmatprep.subr.bf16.mxu0 0
    %2600 = vmatpush1.bf16.msra.mxu0 0
    %2601 = vmatprep.mubr.bf16.mxu0 0
    %2602 = vmatmul.mubr.bf16.gmra.mrb[0].mxu0 %v155
    %v2603 = vpop.f32.mrb[0].mxu0
    %v2604 = vadd.f32 %v2563, %v2603
    %v2605 = vpop.f32.mrb[0].mxu0
    %v2606 = vadd.f32 %v2565, %v2605
    %v2607 = vpop.f32.mrb[0].mxu0
    %v2608 = vpop.f32.mrb[0].mxu0
    %2609 = vdwg.mxu0
    %v2610 = vtanh.pop %v2235
    %v2611 = vtanh.pop %v2237
    %v2612 = vtanh.pop %v2358
    %v2613 = vtanh.pop %v2360
    %v2614 = vtanh.pop %v2481
    %v2615 = vtanh.pop %v2483
    %v2616 = vtanh.pop %v2604
    %v2617 = vtanh.pop %v2606
    %v2618 = vpack.c.bf16 %v2610, %v2610
    %v2619 = vpack.c.bf16 %v2611, %v2611
    %v2620 = vpack.c.bf16 %v2612, %v2612
    %v2621 = vpack.c.bf16 %v2613, %v2613
    %v2622 = vpack.c.bf16 %v2614, %v2614
    %v2623 = vpack.c.bf16 %v2615, %v2615
    %v2624 = vpack.c.bf16 %v2616, %v2616
    %v2625 = vpack.c.bf16 %v2617, %v2617
    %v2626 = vld [vmem:[#allocation8] sm:$0xff]
    %v2627 = vld [vmem:[#allocation8 + $0x8] sm:$0xff]
    %v2628 = vld [vmem:[#allocation8 + $0x10] sm:$0xff]
    %v2629 = vld [vmem:[#allocation8 + $0x18] sm:$0xff]
    %v2630 = vld [vmem:[#allocation8 + $0x20] sm:$0xff]
    %v2631 = vld [vmem:[#allocation8 + $0x28] sm:$0xff]
    %v2632 = vld [vmem:[#allocation8 + $0x30] sm:$0xff]
    %v2633 = vld [vmem:[#allocation8 + $0x38] sm:$0xff]
    %v2634 = vld [vmem:[#allocation8 + $0x40] sm:$0xff]
    %v2635 = vld [vmem:[#allocation8 + $0x48] sm:$0xff]
    %v2636 = vld [vmem:[#allocation8 + $0x50] sm:$0xff]
    %v2637 = vld [vmem:[#allocation8 + $0x58] sm:$0xff]
    %v2638 = vld [vmem:[#allocation8 + $0x60] sm:$0xff]
    %v2639 = vld [vmem:[#allocation8 + $0x68] sm:$0xff]
    %v2640 = vld [vmem:[#allocation8 + $0x70] sm:$0xff]
    %v2641 = vld [vmem:[#allocation8 + $0x78] sm:$0xff]
    %v2642 = vld [vmem:[#allocation8 + $0x80] sm:$0xff]
    %v2643 = vld [vmem:[#allocation8 + $0x88] sm:$0xff]
    %v2644 = vld [vmem:[#allocation8 + $0x90] sm:$0xff]
    %v2645 = vld [vmem:[#allocation8 + $0x98] sm:$0xff]
    %v2646 = vld [vmem:[#allocation8 + $0xa0] sm:$0xff]
    %v2647 = vld [vmem:[#allocation8 + $0xa8] sm:$0xff]
    %v2648 = vld [vmem:[#allocation8 + $0xb0] sm:$0xff]
    %v2649 = vld [vmem:[#allocation8 + $0xb8] sm:$0xff]
    %v2650 = vld [vmem:[#allocation8 + $0xc0] sm:$0xff]
    %v2651 = vld [vmem:[#allocation8 + $0xc8] sm:$0xff]
    %v2652 = vld [vmem:[#allocation8 + $0xd0] sm:$0xff]
    %v2653 = vld [vmem:[#allocation8 + $0xd8] sm:$0xff]
    %v2654 = vld [vmem:[#allocation8 + $0xe0] sm:$0xff]
    %v2655 = vld [vmem:[#allocation8 + $0xe8] sm:$0xff]
    %v2656 = vld [vmem:[#allocation8 + $0xf0] sm:$0xff]
    %v2657 = vld [vmem:[#allocation8 + $0xf8] sm:$0xff]
    %v2658 = vld [vmem:[#allocation8 + $0x100] sm:$0xff]
    %v2659 = vld [vmem:[#allocation8 + $0x108] sm:$0xff]
    %v2660 = vld [vmem:[#allocation8 + $0x110] sm:$0xff]
    %v2661 = vld [vmem:[#allocation8 + $0x118] sm:$0xff]
    %v2662 = vld [vmem:[#allocation8 + $0x120] sm:$0xff]
    %v2663 = vld [vmem:[#allocation8 + $0x128] sm:$0xff]
    %v2664 = vld [vmem:[#allocation8 + $0x130] sm:$0xff]
    %v2665 = vld [vmem:[#allocation8 + $0x138] sm:$0xff]
    %v2666 = vld [vmem:[#allocation8 + $0x140] sm:$0xff]
    %v2667 = vld [vmem:[#allocation8 + $0x148] sm:$0xff]
    %v2668 = vld [vmem:[#allocation8 + $0x150] sm:$0xff]
    %v2669 = vld [vmem:[#allocation8 + $0x158] sm:$0xff]
    %v2670 = vld [vmem:[#allocation8 + $0x160] sm:$0xff]
    %v2671 = vld [vmem:[#allocation8 + $0x168] sm:$0xff]
    %v2672 = vld [vmem:[#allocation8 + $0x170] sm:$0xff]
    %v2673 = vld [vmem:[#allocation8 + $0x178] sm:$0xff]
    %v2674 = vld [vmem:[#allocation8 + $0x180] sm:$0xff]
    %v2675 = vld [vmem:[#allocation8 + $0x188] sm:$0xff]
    %v2676 = vld [vmem:[#allocation8 + $0x190] sm:$0xff]
    %v2677 = vld [vmem:[#allocation8 + $0x198] sm:$0xff]
    %v2678 = vld [vmem:[#allocation8 + $0x1a0] sm:$0xff]
    %v2679 = vld [vmem:[#allocation8 + $0x1a8] sm:$0xff]
    %v2680 = vld [vmem:[#allocation8 + $0x1b0] sm:$0xff]
    %v2681 = vld [vmem:[#allocation8 + $0x1b8] sm:$0xff]
    %v2682 = vld [vmem:[#allocation8 + $0x1c0] sm:$0xff]
    %v2683 = vld [vmem:[#allocation8 + $0x1c8] sm:$0xff]
    %v2684 = vld [vmem:[#allocation8 + $0x1d0] sm:$0xff]
    %v2685 = vld [vmem:[#allocation8 + $0x1d8] sm:$0xff]
    %v2686 = vld [vmem:[#allocation8 + $0x1e0] sm:$0xff]
    %v2687 = vld [vmem:[#allocation8 + $0x1e8] sm:$0xff]
    %v2688 = vld [vmem:[#allocation8 + $0x1f0] sm:$0xff]
    %v2689 = vld [vmem:[#allocation8 + $0x1f8] sm:$0xff]
    %v2690 = vld [vmem:[#allocation8 + $0x200] sm:$0xff]
    %v2691 = vld [vmem:[#allocation8 + $0x208] sm:$0xff]
    %v2692 = vld [vmem:[#allocation8 + $0x210] sm:$0xff]
    %v2693 = vld [vmem:[#allocation8 + $0x218] sm:$0xff]
    %v2694 = vld [vmem:[#allocation8 + $0x220] sm:$0xff]
    %v2695 = vld [vmem:[#allocation8 + $0x228] sm:$0xff]
    %v2696 = vld [vmem:[#allocation8 + $0x230] sm:$0xff]
    %v2697 = vld [vmem:[#allocation8 + $0x238] sm:$0xff]
    %v2698 = vld [vmem:[#allocation8 + $0x240] sm:$0xff]
    %v2699 = vld [vmem:[#allocation8 + $0x248] sm:$0xff]
    %v2700 = vld [vmem:[#allocation8 + $0x250] sm:$0xff]
    %v2701 = vld [vmem:[#allocation8 + $0x258] sm:$0xff]
    %v2702 = vld [vmem:[#allocation8 + $0x260] sm:$0xff]
    %v2703 = vld [vmem:[#allocation8 + $0x268] sm:$0xff]
    %v2704 = vld [vmem:[#allocation8 + $0x270] sm:$0xff]
    %v2705 = vld [vmem:[#allocation8 + $0x278] sm:$0xff]
    %v2706 = vld [vmem:[#allocation8 + $0x280] sm:$0xff]
    %v2707 = vld [vmem:[#allocation8 + $0x288] sm:$0xff]
    %v2708 = vld [vmem:[#allocation8 + $0x290] sm:$0xff]
    %v2709 = vld [vmem:[#allocation8 + $0x298] sm:$0xff]
    %v2710 = vld [vmem:[#allocation8 + $0x2a0] sm:$0xff]
    %v2711 = vld [vmem:[#allocation8 + $0x2a8] sm:$0xff]
    %v2712 = vld [vmem:[#allocation8 + $0x2b0] sm:$0xff]
    %v2713 = vld [vmem:[#allocation8 + $0x2b8] sm:$0xff]
    %v2714 = vld [vmem:[#allocation8 + $0x2c0] sm:$0xff]
    %v2715 = vld [vmem:[#allocation8 + $0x2c8] sm:$0xff]
    %v2716 = vld [vmem:[#allocation8 + $0x2d0] sm:$0xff]
    %v2717 = vld [vmem:[#allocation8 + $0x2d8] sm:$0xff]
    %v2718 = vld [vmem:[#allocation8 + $0x2e0] sm:$0xff]
    %v2719 = vld [vmem:[#allocation8 + $0x2e8] sm:$0xff]
    %v2720 = vld [vmem:[#allocation8 + $0x2f0] sm:$0xff]
    %v2721 = vld [vmem:[#allocation8 + $0x2f8] sm:$0xff]
    %v2722 = vld [vmem:[#allocation8 + $0x300] sm:$0xff]
    %v2723 = vld [vmem:[#allocation8 + $0x308] sm:$0xff]
    %v2724 = vld [vmem:[#allocation8 + $0x310] sm:$0xff]
    %v2725 = vld [vmem:[#allocation8 + $0x318] sm:$0xff]
    %v2726 = vld [vmem:[#allocation8 + $0x320] sm:$0xff]
    %v2727 = vld [vmem:[#allocation8 + $0x328] sm:$0xff]
    %v2728 = vld [vmem:[#allocation8 + $0x330] sm:$0xff]
    %v2729 = vld [vmem:[#allocation8 + $0x338] sm:$0xff]
    %v2730 = vld [vmem:[#allocation8 + $0x340] sm:$0xff]
    %v2731 = vld [vmem:[#allocation8 + $0x348] sm:$0xff]
    %v2732 = vld [vmem:[#allocation8 + $0x350] sm:$0xff]
    %v2733 = vld [vmem:[#allocation8 + $0x358] sm:$0xff]
    %v2734 = vld [vmem:[#allocation8 + $0x360] sm:$0xff]
    %v2735 = vld [vmem:[#allocation8 + $0x368] sm:$0xff]
    %v2736 = vld [vmem:[#allocation8 + $0x370] sm:$0xff]
    %v2737 = vld [vmem:[#allocation8 + $0x378] sm:$0xff]
    %v2738 = vld [vmem:[#allocation8 + $0x380] sm:$0xff]
    %v2739 = vld [vmem:[#allocation8 + $0x388] sm:$0xff]
    %v2740 = vld [vmem:[#allocation8 + $0x390] sm:$0xff]
    %v2741 = vld [vmem:[#allocation8 + $0x398] sm:$0xff]
    %v2742 = vld [vmem:[#allocation8 + $0x3a0] sm:$0xff]
    %v2743 = vld [vmem:[#allocation8 + $0x3a8] sm:$0xff]
    %v2744 = vld [vmem:[#allocation8 + $0x3b0] sm:$0xff]
    %v2745 = vld [vmem:[#allocation8 + $0x3b8] sm:$0xff]
    %v2746 = vld [vmem:[#allocation8 + $0x3c0] sm:$0xff]
    %v2747 = vld [vmem:[#allocation8 + $0x3c8] sm:$0xff]
    %v2748 = vld [vmem:[#allocation8 + $0x3d0] sm:$0xff]
    %v2749 = vld [vmem:[#allocation8 + $0x3d8] sm:$0xff]
    %v2750 = vld [vmem:[#allocation8 + $0x3e0] sm:$0xff]
    %v2751 = vld [vmem:[#allocation8 + $0x3e8] sm:$0xff]
    %v2752 = vld [vmem:[#allocation8 + $0x3f0] sm:$0xff]
    %v2753 = vld [vmem:[#allocation8 + $0x3f8] sm:$0xff]
    %v2754 = vld [vmem:[#allocation8 + $0x400] sm:$0xff]
    %v2755 = vld [vmem:[#allocation8 + $0x408] sm:$0xff]
    %v2756 = vld [vmem:[#allocation8 + $0x410] sm:$0xff]
    %v2757 = vld [vmem:[#allocation8 + $0x418] sm:$0xff]
    %v2758 = vld [vmem:[#allocation8 + $0x420] sm:$0xff]
    %v2759 = vld [vmem:[#allocation8 + $0x428] sm:$0xff]
    %v2760 = vld [vmem:[#allocation8 + $0x430] sm:$0xff]
    %v2761 = vld [vmem:[#allocation8 + $0x438] sm:$0xff]
    %v2762 = vld [vmem:[#allocation8 + $0x440] sm:$0xff]
    %v2763 = vld [vmem:[#allocation8 + $0x448] sm:$0xff]
    %v2764 = vld [vmem:[#allocation8 + $0x450] sm:$0xff]
    %v2765 = vld [vmem:[#allocation8 + $0x458] sm:$0xff]
    %v2766 = vld [vmem:[#allocation8 + $0x460] sm:$0xff]
    %v2767 = vld [vmem:[#allocation8 + $0x468] sm:$0xff]
    %v2768 = vld [vmem:[#allocation8 + $0x470] sm:$0xff]
    %v2769 = vld [vmem:[#allocation8 + $0x478] sm:$0xff]
    %v2770 = vld [vmem:[#allocation8 + $0x480] sm:$0xff]
    %v2771 = vld [vmem:[#allocation8 + $0x488] sm:$0xff]
    %v2772 = vld [vmem:[#allocation8 + $0x490] sm:$0xff]
    %v2773 = vld [vmem:[#allocation8 + $0x498] sm:$0xff]
    %v2774 = vld [vmem:[#allocation8 + $0x4a0] sm:$0xff]
    %v2775 = vld [vmem:[#allocation8 + $0x4a8] sm:$0xff]
    %v2776 = vld [vmem:[#allocation8 + $0x4b0] sm:$0xff]
    %v2777 = vld [vmem:[#allocation8 + $0x4b8] sm:$0xff]
    %v2778 = vld [vmem:[#allocation8 + $0x4c0] sm:$0xff]
    %v2779 = vld [vmem:[#allocation8 + $0x4c8] sm:$0xff]
    %v2780 = vld [vmem:[#allocation8 + $0x4d0] sm:$0xff]
    %v2781 = vld [vmem:[#allocation8 + $0x4d8] sm:$0xff]
    %v2782 = vld [vmem:[#allocation8 + $0x4e0] sm:$0xff]
    %v2783 = vld [vmem:[#allocation8 + $0x4e8] sm:$0xff]
    %v2784 = vld [vmem:[#allocation8 + $0x4f0] sm:$0xff]
    %v2785 = vld [vmem:[#allocation8 + $0x4f8] sm:$0xff]
    %v2786 = vld [vmem:[#allocation8 + $0x500] sm:$0xff]
    %v2787 = vld [vmem:[#allocation8 + $0x508] sm:$0xff]
    %v2788 = vld [vmem:[#allocation8 + $0x510] sm:$0xff]
    %v2789 = vld [vmem:[#allocation8 + $0x518] sm:$0xff]
    %v2790 = vld [vmem:[#allocation8 + $0x520] sm:$0xff]
    %v2791 = vld [vmem:[#allocation8 + $0x528] sm:$0xff]
    %v2792 = vld [vmem:[#allocation8 + $0x530] sm:$0xff]
    %v2793 = vld [vmem:[#allocation8 + $0x538] sm:$0xff]
    %v2794 = vld [vmem:[#allocation8 + $0x540] sm:$0xff]
    %v2795 = vld [vmem:[#allocation8 + $0x548] sm:$0xff]
    %v2796 = vld [vmem:[#allocation8 + $0x550] sm:$0xff]
    %v2797 = vld [vmem:[#allocation8 + $0x558] sm:$0xff]
    %v2798 = vld [vmem:[#allocation8 + $0x560] sm:$0xff]
    %v2799 = vld [vmem:[#allocation8 + $0x568] sm:$0xff]
    %v2800 = vld [vmem:[#allocation8 + $0x570] sm:$0xff]
    %v2801 = vld [vmem:[#allocation8 + $0x578] sm:$0xff]
    %v2802 = vld [vmem:[#allocation8 + $0x580] sm:$0xff]
    %v2803 = vld [vmem:[#allocation8 + $0x588] sm:$0xff]
    %v2804 = vld [vmem:[#allocation8 + $0x590] sm:$0xff]
    %v2805 = vld [vmem:[#allocation8 + $0x598] sm:$0xff]
    %v2806 = vld [vmem:[#allocation8 + $0x5a0] sm:$0xff]
    %v2807 = vld [vmem:[#allocation8 + $0x5a8] sm:$0xff]
    %v2808 = vld [vmem:[#allocation8 + $0x5b0] sm:$0xff]
    %v2809 = vld [vmem:[#allocation8 + $0x5b8] sm:$0xff]
    %v2810 = vld [vmem:[#allocation8 + $0x5c0] sm:$0xff]
    %v2811 = vld [vmem:[#allocation8 + $0x5c8] sm:$0xff]
    %v2812 = vld [vmem:[#allocation8 + $0x5d0] sm:$0xff]
    %v2813 = vld [vmem:[#allocation8 + $0x5d8] sm:$0xff]
    %v2814 = vld [vmem:[#allocation8 + $0x5e0] sm:$0xff]
    %v2815 = vld [vmem:[#allocation8 + $0x5e8] sm:$0xff]
    %v2816 = vld [vmem:[#allocation8 + $0x5f0] sm:$0xff]
    %v2817 = vld [vmem:[#allocation8 + $0x5f8] sm:$0xff]
    %v2818 = vld [vmem:[#allocation8 + $0x600] sm:$0xff]
    %v2819 = vld [vmem:[#allocation8 + $0x608] sm:$0xff]
    %v2820 = vld [vmem:[#allocation8 + $0x610] sm:$0xff]
    %v2821 = vld [vmem:[#allocation8 + $0x618] sm:$0xff]
    %v2822 = vld [vmem:[#allocation8 + $0x620] sm:$0xff]
    %v2823 = vld [vmem:[#allocation8 + $0x628] sm:$0xff]
    %v2824 = vld [vmem:[#allocation8 + $0x630] sm:$0xff]
    %v2825 = vld [vmem:[#allocation8 + $0x638] sm:$0xff]
    %v2826 = vld [vmem:[#allocation8 + $0x640] sm:$0xff]
    %v2827 = vld [vmem:[#allocation8 + $0x648] sm:$0xff]
    %v2828 = vld [vmem:[#allocation8 + $0x650] sm:$0xff]
    %v2829 = vld [vmem:[#allocation8 + $0x658] sm:$0xff]
    %v2830 = vld [vmem:[#allocation8 + $0x660] sm:$0xff]
    %v2831 = vld [vmem:[#allocation8 + $0x668] sm:$0xff]
    %v2832 = vld [vmem:[#allocation8 + $0x670] sm:$0xff]
    %v2833 = vld [vmem:[#allocation8 + $0x678] sm:$0xff]
    %v2834 = vld [vmem:[#allocation8 + $0x680] sm:$0xff]
    %v2835 = vld [vmem:[#allocation8 + $0x688] sm:$0xff]
    %v2836 = vld [vmem:[#allocation8 + $0x690] sm:$0xff]
    %v2837 = vld [vmem:[#allocation8 + $0x698] sm:$0xff]
    %v2838 = vld [vmem:[#allocation8 + $0x6a0] sm:$0xff]
    %v2839 = vld [vmem:[#allocation8 + $0x6a8] sm:$0xff]
    %v2840 = vld [vmem:[#allocation8 + $0x6b0] sm:$0xff]
    %v2841 = vld [vmem:[#allocation8 + $0x6b8] sm:$0xff]
    %v2842 = vld [vmem:[#allocation8 + $0x6c0] sm:$0xff]
    %v2843 = vld [vmem:[#allocation8 + $0x6c8] sm:$0xff]
    %v2844 = vld [vmem:[#allocation8 + $0x6d0] sm:$0xff]
    %v2845 = vld [vmem:[#allocation8 + $0x6d8] sm:$0xff]
    %v2846 = vld [vmem:[#allocation8 + $0x6e0] sm:$0xff]
    %v2847 = vld [vmem:[#allocation8 + $0x6e8] sm:$0xff]
    %v2848 = vld [vmem:[#allocation8 + $0x6f0] sm:$0xff]
    %v2849 = vld [vmem:[#allocation8 + $0x6f8] sm:$0xff]
    %v2850 = vld [vmem:[#allocation8 + $0x700] sm:$0xff]
    %v2851 = vld [vmem:[#allocation8 + $0x708] sm:$0xff]
    %v2852 = vld [vmem:[#allocation8 + $0x710] sm:$0xff]
    %v2853 = vld [vmem:[#allocation8 + $0x718] sm:$0xff]
    %v2854 = vld [vmem:[#allocation8 + $0x720] sm:$0xff]
    %v2855 = vld [vmem:[#allocation8 + $0x728] sm:$0xff]
    %v2856 = vld [vmem:[#allocation8 + $0x730] sm:$0xff]
    %v2857 = vld [vmem:[#allocation8 + $0x738] sm:$0xff]
    %v2858 = vld [vmem:[#allocation8 + $0x740] sm:$0xff]
    %v2859 = vld [vmem:[#allocation8 + $0x748] sm:$0xff]
    %v2860 = vld [vmem:[#allocation8 + $0x750] sm:$0xff]
    %v2861 = vld [vmem:[#allocation8 + $0x758] sm:$0xff]
    %v2862 = vld [vmem:[#allocation8 + $0x760] sm:$0xff]
    %v2863 = vld [vmem:[#allocation8 + $0x768] sm:$0xff]
    %v2864 = vld [vmem:[#allocation8 + $0x770] sm:$0xff]
    %v2865 = vld [vmem:[#allocation8 + $0x778] sm:$0xff]
    %v2866 = vld [vmem:[#allocation8 + $0x780] sm:$0xff]
    %v2867 = vld [vmem:[#allocation8 + $0x788] sm:$0xff]
    %v2868 = vld [vmem:[#allocation8 + $0x790] sm:$0xff]
    %v2869 = vld [vmem:[#allocation8 + $0x798] sm:$0xff]
    %v2870 = vld [vmem:[#allocation8 + $0x7a0] sm:$0xff]
    %v2871 = vld [vmem:[#allocation8 + $0x7a8] sm:$0xff]
    %v2872 = vld [vmem:[#allocation8 + $0x7b0] sm:$0xff]
    %v2873 = vld [vmem:[#allocation8 + $0x7b8] sm:$0xff]
    %v2874 = vld [vmem:[#allocation8 + $0x7c0] sm:$0xff]
    %v2875 = vld [vmem:[#allocation8 + $0x7c8] sm:$0xff]
    %v2876 = vld [vmem:[#allocation8 + $0x7d0] sm:$0xff]
    %v2877 = vld [vmem:[#allocation8 + $0x7d8] sm:$0xff]
    %v2878 = vld [vmem:[#allocation8 + $0x7e0] sm:$0xff]
    %v2879 = vld [vmem:[#allocation8 + $0x7e8] sm:$0xff]
    %v2880 = vld [vmem:[#allocation8 + $0x7f0] sm:$0xff]
    %v2881 = vld [vmem:[#allocation8 + $0x7f8] sm:$0xff]
    %v2882 = vld [vmem:[#allocation10] sm:$0xf]
    %v2884 = vlaneseq
    %v2885 = vshrl.u32 %v2884, 7
    %v2886 = vsub.s32 0, %v2885
    %v2887 = vrot.slane %v2882, %v2886
    %v2888 = vlaneseq
    %v2889 = vshrl.u32 %v2888, 7
    %v2890 = vsub.s32 1, %v2889
    %v2891 = vrot.slane %v2882, %v2890
    %v2892 = vlaneseq
    %v2893 = vshrl.u32 %v2892, 7
    %v2894 = vsub.s32 2, %v2893
    %v2895 = vrot.slane %v2882, %v2894
    %v2896 = vlaneseq
    %v2897 = vshrl.u32 %v2896, 7
    %v2898 = vsub.s32 3, %v2897
    %v2899 = vrot.slane %v2882, %v2898
    %v3160 = vunpack.c.l.b16 %v2626
    %v3161 = vunpack.c.h.b16 %v2626
    %v3162 = vunpack.c.l.b16 %v2627
    %v3163 = vunpack.c.h.b16 %v2627
    %v3164 = vunpack.c.l.b16 %v2628
    %v3165 = vunpack.c.h.b16 %v2628
    %v3166 = vunpack.c.l.b16 %v2629
    %v3167 = vunpack.c.h.b16 %v2629
    %v3168 = vunpack.c.l.b16 %v2630
    %v3169 = vunpack.c.h.b16 %v2630
    %v3170 = vunpack.c.l.b16 %v2631
    %v3171 = vunpack.c.h.b16 %v2631
    %v3172 = vunpack.c.l.b16 %v2632
    %v3173 = vunpack.c.h.b16 %v2632
    %v3174 = vunpack.c.l.b16 %v2633
    %v3175 = vunpack.c.h.b16 %v2633
    %v3176 = vunpack.c.l.b16 %v2634
    %v3177 = vunpack.c.h.b16 %v2634
    %v3178 = vunpack.c.l.b16 %v2635
    %v3179 = vunpack.c.h.b16 %v2635
    %v3180 = vunpack.c.l.b16 %v2636
    %v3181 = vunpack.c.h.b16 %v2636
    %v3182 = vunpack.c.l.b16 %v2637
    %v3183 = vunpack.c.h.b16 %v2637
    %v3184 = vunpack.c.l.b16 %v2638
    %v3185 = vunpack.c.h.b16 %v2638
    %v3186 = vunpack.c.l.b16 %v2639
    %v3187 = vunpack.c.h.b16 %v2639
    %v3188 = vunpack.c.l.b16 %v2640
    %v3189 = vunpack.c.h.b16 %v2640
    %v3190 = vunpack.c.l.b16 %v2641
    %v3191 = vunpack.c.h.b16 %v2641
    %v3192 = vunpack.c.l.b16 %v2642
    %v3193 = vunpack.c.h.b16 %v2642
    %v3194 = vunpack.c.l.b16 %v2643
    %v3195 = vunpack.c.h.b16 %v2643
    %v3196 = vunpack.c.l.b16 %v2644
    %v3197 = vunpack.c.h.b16 %v2644
    %v3198 = vunpack.c.l.b16 %v2645
    %v3199 = vunpack.c.h.b16 %v2645
    %v3200 = vunpack.c.l.b16 %v2646
    %v3201 = vunpack.c.h.b16 %v2646
    %v3202 = vunpack.c.l.b16 %v2647
    %v3203 = vunpack.c.h.b16 %v2647
    %v3204 = vunpack.c.l.b16 %v2648
    %v3205 = vunpack.c.h.b16 %v2648
    %v3206 = vunpack.c.l.b16 %v2649
    %v3207 = vunpack.c.h.b16 %v2649
    %v3208 = vunpack.c.l.b16 %v2650
    %v3209 = vunpack.c.h.b16 %v2650
    %v3210 = vunpack.c.l.b16 %v2651
    %v3211 = vunpack.c.h.b16 %v2651
    %v3212 = vunpack.c.l.b16 %v2652
    %v3213 = vunpack.c.h.b16 %v2652
    %v3214 = vunpack.c.l.b16 %v2653
    %v3215 = vunpack.c.h.b16 %v2653
    %v3216 = vunpack.c.l.b16 %v2654
    %v3217 = vunpack.c.h.b16 %v2654
    %v3218 = vunpack.c.l.b16 %v2655
    %v3219 = vunpack.c.h.b16 %v2655
    %v3220 = vunpack.c.l.b16 %v2656
    %v3221 = vunpack.c.h.b16 %v2656
    %v3222 = vunpack.c.l.b16 %v2657
    %v3223 = vunpack.c.h.b16 %v2657
    %v3224 = vunpack.c.l.b16 %v2658
    %v3225 = vunpack.c.h.b16 %v2658
    %v3226 = vunpack.c.l.b16 %v2659
    %v3227 = vunpack.c.h.b16 %v2659
    %v3228 = vunpack.c.l.b16 %v2660
    %v3229 = vunpack.c.h.b16 %v2660
    %v3230 = vunpack.c.l.b16 %v2661
    %v3231 = vunpack.c.h.b16 %v2661
    %v3232 = vunpack.c.l.b16 %v2662
    %v3233 = vunpack.c.h.b16 %v2662
    %v3234 = vunpack.c.l.b16 %v2663
    %v3235 = vunpack.c.h.b16 %v2663
    %v3236 = vunpack.c.l.b16 %v2664
    %v3237 = vunpack.c.h.b16 %v2664
    %v3238 = vunpack.c.l.b16 %v2665
    %v3239 = vunpack.c.h.b16 %v2665
    %v3240 = vunpack.c.l.b16 %v2666
    %v3241 = vunpack.c.h.b16 %v2666
    %v3242 = vunpack.c.l.b16 %v2667
    %v3243 = vunpack.c.h.b16 %v2667
    %v3244 = vunpack.c.l.b16 %v2668
    %v3245 = vunpack.c.h.b16 %v2668
    %v3246 = vunpack.c.l.b16 %v2669
    %v3247 = vunpack.c.h.b16 %v2669
    %v3248 = vunpack.c.l.b16 %v2670
    %v3249 = vunpack.c.h.b16 %v2670
    %v3250 = vunpack.c.l.b16 %v2671
    %v3251 = vunpack.c.h.b16 %v2671
    %v3252 = vunpack.c.l.b16 %v2672
    %v3253 = vunpack.c.h.b16 %v2672
    %v3254 = vunpack.c.l.b16 %v2673
    %v3255 = vunpack.c.h.b16 %v2673
    %v3256 = vunpack.c.l.b16 %v2674
    %v3257 = vunpack.c.h.b16 %v2674
    %v3258 = vunpack.c.l.b16 %v2675
    %v3259 = vunpack.c.h.b16 %v2675
    %v3260 = vunpack.c.l.b16 %v2676
    %v3261 = vunpack.c.h.b16 %v2676
    %v3262 = vunpack.c.l.b16 %v2677
    %v3263 = vunpack.c.h.b16 %v2677
    %v3264 = vunpack.c.l.b16 %v2678
    %v3265 = vunpack.c.h.b16 %v2678
    %v3266 = vunpack.c.l.b16 %v2679
    %v3267 = vunpack.c.h.b16 %v2679
    %v3268 = vunpack.c.l.b16 %v2680
    %v3269 = vunpack.c.h.b16 %v2680
    %v3270 = vunpack.c.l.b16 %v2681
    %v3271 = vunpack.c.h.b16 %v2681
    %v3272 = vunpack.c.l.b16 %v2682
    %v3273 = vunpack.c.h.b16 %v2682
    %v3274 = vunpack.c.l.b16 %v2683
    %v3275 = vunpack.c.h.b16 %v2683
    %v3276 = vunpack.c.l.b16 %v2684
    %v3277 = vunpack.c.h.b16 %v2684
    %v3278 = vunpack.c.l.b16 %v2685
    %v3279 = vunpack.c.h.b16 %v2685
    %v3280 = vunpack.c.l.b16 %v2686
    %v3281 = vunpack.c.h.b16 %v2686
    %v3282 = vunpack.c.l.b16 %v2687
    %v3283 = vunpack.c.h.b16 %v2687
    %v3284 = vunpack.c.l.b16 %v2688
    %v3285 = vunpack.c.h.b16 %v2688
    %v3286 = vunpack.c.l.b16 %v2689
    %v3287 = vunpack.c.h.b16 %v2689
    %v3288 = vunpack.c.l.b16 %v2690
    %v3289 = vunpack.c.h.b16 %v2690
    %v3290 = vunpack.c.l.b16 %v2691
    %v3291 = vunpack.c.h.b16 %v2691
    %v3292 = vunpack.c.l.b16 %v2692
    %v3293 = vunpack.c.h.b16 %v2692
    %v3294 = vunpack.c.l.b16 %v2693
    %v3295 = vunpack.c.h.b16 %v2693
    %v3296 = vunpack.c.l.b16 %v2694
    %v3297 = vunpack.c.h.b16 %v2694
    %v3298 = vunpack.c.l.b16 %v2695
    %v3299 = vunpack.c.h.b16 %v2695
    %v3300 = vunpack.c.l.b16 %v2696
    %v3301 = vunpack.c.h.b16 %v2696
    %v3302 = vunpack.c.l.b16 %v2697
    %v3303 = vunpack.c.h.b16 %v2697
    %v3304 = vunpack.c.l.b16 %v2698
    %v3305 = vunpack.c.h.b16 %v2698
    %v3306 = vunpack.c.l.b16 %v2699
    %v3307 = vunpack.c.h.b16 %v2699
    %v3308 = vunpack.c.l.b16 %v2700
    %v3309 = vunpack.c.h.b16 %v2700
    %v3310 = vunpack.c.l.b16 %v2701
    %v3311 = vunpack.c.h.b16 %v2701
    %v3312 = vunpack.c.l.b16 %v2702
    %v3313 = vunpack.c.h.b16 %v2702
    %v3314 = vunpack.c.l.b16 %v2703
    %v3315 = vunpack.c.h.b16 %v2703
    %v3316 = vunpack.c.l.b16 %v2704
    %v3317 = vunpack.c.h.b16 %v2704
    %v3318 = vunpack.c.l.b16 %v2705
    %v3319 = vunpack.c.h.b16 %v2705
    %v3320 = vunpack.c.l.b16 %v2706
    %v3321 = vunpack.c.h.b16 %v2706
    %v3322 = vunpack.c.l.b16 %v2707
    %v3323 = vunpack.c.h.b16 %v2707
    %v3324 = vunpack.c.l.b16 %v2708
    %v3325 = vunpack.c.h.b16 %v2708
    %v3326 = vunpack.c.l.b16 %v2709
    %v3327 = vunpack.c.h.b16 %v2709
    %v3328 = vunpack.c.l.b16 %v2710
    %v3329 = vunpack.c.h.b16 %v2710
    %v3330 = vunpack.c.l.b16 %v2711
    %v3331 = vunpack.c.h.b16 %v2711
    %v3332 = vunpack.c.l.b16 %v2712
    %v3333 = vunpack.c.h.b16 %v2712
    %v3334 = vunpack.c.l.b16 %v2713
    %v3335 = vunpack.c.h.b16 %v2713
    %v3336 = vunpack.c.l.b16 %v2714
    %v3337 = vunpack.c.h.b16 %v2714
    %v3338 = vunpack.c.l.b16 %v2715
    %v3339 = vunpack.c.h.b16 %v2715
    %v3340 = vunpack.c.l.b16 %v2716
    %v3341 = vunpack.c.h.b16 %v2716
    %v3342 = vunpack.c.l.b16 %v2717
    %v3343 = vunpack.c.h.b16 %v2717
    %v3344 = vunpack.c.l.b16 %v2718
    %v3345 = vunpack.c.h.b16 %v2718
    %v3346 = vunpack.c.l.b16 %v2719
    %v3347 = vunpack.c.h.b16 %v2719
    %v3348 = vunpack.c.l.b16 %v2720
    %v3349 = vunpack.c.h.b16 %v2720
    %v3350 = vunpack.c.l.b16 %v2721
    %v3351 = vunpack.c.h.b16 %v2721
    %v3352 = vunpack.c.l.b16 %v2722
    %v3353 = vunpack.c.h.b16 %v2722
    %v3354 = vunpack.c.l.b16 %v2723
    %v3355 = vunpack.c.h.b16 %v2723
    %v3356 = vunpack.c.l.b16 %v2724
    %v3357 = vunpack.c.h.b16 %v2724
    %v3358 = vunpack.c.l.b16 %v2725
    %v3359 = vunpack.c.h.b16 %v2725
    %v3360 = vunpack.c.l.b16 %v2726
    %v3361 = vunpack.c.h.b16 %v2726
    %v3362 = vunpack.c.l.b16 %v2727
    %v3363 = vunpack.c.h.b16 %v2727
    %v3364 = vunpack.c.l.b16 %v2728
    %v3365 = vunpack.c.h.b16 %v2728
    %v3366 = vunpack.c.l.b16 %v2729
    %v3367 = vunpack.c.h.b16 %v2729
    %v3368 = vunpack.c.l.b16 %v2730
    %v3369 = vunpack.c.h.b16 %v2730
    %v3370 = vunpack.c.l.b16 %v2731
    %v3371 = vunpack.c.h.b16 %v2731
    %v3372 = vunpack.c.l.b16 %v2732
    %v3373 = vunpack.c.h.b16 %v2732
    %v3374 = vunpack.c.l.b16 %v2733
    %v3375 = vunpack.c.h.b16 %v2733
    %v3376 = vunpack.c.l.b16 %v2734
    %v3377 = vunpack.c.h.b16 %v2734
    %v3378 = vunpack.c.l.b16 %v2735
    %v3379 = vunpack.c.h.b16 %v2735
    %v3380 = vunpack.c.l.b16 %v2736
    %v3381 = vunpack.c.h.b16 %v2736
    %v3382 = vunpack.c.l.b16 %v2737
    %v3383 = vunpack.c.h.b16 %v2737
    %v3384 = vunpack.c.l.b16 %v2738
    %v3385 = vunpack.c.h.b16 %v2738
    %v3386 = vunpack.c.l.b16 %v2739
    %v3387 = vunpack.c.h.b16 %v2739
    %v3388 = vunpack.c.l.b16 %v2740
    %v3389 = vunpack.c.h.b16 %v2740
    %v3390 = vunpack.c.l.b16 %v2741
    %v3391 = vunpack.c.h.b16 %v2741
    %v3392 = vunpack.c.l.b16 %v2742
    %v3393 = vunpack.c.h.b16 %v2742
    %v3394 = vunpack.c.l.b16 %v2743
    %v3395 = vunpack.c.h.b16 %v2743
    %v3396 = vunpack.c.l.b16 %v2744
    %v3397 = vunpack.c.h.b16 %v2744
    %v3398 = vunpack.c.l.b16 %v2745
    %v3399 = vunpack.c.h.b16 %v2745
    %v3400 = vunpack.c.l.b16 %v2746
    %v3401 = vunpack.c.h.b16 %v2746
    %v3402 = vunpack.c.l.b16 %v2747
    %v3403 = vunpack.c.h.b16 %v2747
    %v3404 = vunpack.c.l.b16 %v2748
    %v3405 = vunpack.c.h.b16 %v2748
    %v3406 = vunpack.c.l.b16 %v2749
    %v3407 = vunpack.c.h.b16 %v2749
    %v3408 = vunpack.c.l.b16 %v2750
    %v3409 = vunpack.c.h.b16 %v2750
    %v3410 = vunpack.c.l.b16 %v2751
    %v3411 = vunpack.c.h.b16 %v2751
    %v3412 = vunpack.c.l.b16 %v2752
    %v3413 = vunpack.c.h.b16 %v2752
    %v3414 = vunpack.c.l.b16 %v2753
    %v3415 = vunpack.c.h.b16 %v2753
    %v3416 = vunpack.c.l.b16 %v2754
    %v3417 = vunpack.c.h.b16 %v2754
    %v3418 = vunpack.c.l.b16 %v2755
    %v3419 = vunpack.c.h.b16 %v2755
    %v3420 = vunpack.c.l.b16 %v2756
    %v3421 = vunpack.c.h.b16 %v2756
    %v3422 = vunpack.c.l.b16 %v2757
    %v3423 = vunpack.c.h.b16 %v2757
    %v3424 = vunpack.c.l.b16 %v2758
    %v3425 = vunpack.c.h.b16 %v2758
    %v3426 = vunpack.c.l.b16 %v2759
    %v3427 = vunpack.c.h.b16 %v2759
    %v3428 = vunpack.c.l.b16 %v2760
    %v3429 = vunpack.c.h.b16 %v2760
    %v3430 = vunpack.c.l.b16 %v2761
    %v3431 = vunpack.c.h.b16 %v2761
    %v3432 = vunpack.c.l.b16 %v2762
    %v3433 = vunpack.c.h.b16 %v2762
    %v3434 = vunpack.c.l.b16 %v2763
    %v3435 = vunpack.c.h.b16 %v2763
    %v3436 = vunpack.c.l.b16 %v2764
    %v3437 = vunpack.c.h.b16 %v2764
    %v3438 = vunpack.c.l.b16 %v2765
    %v3439 = vunpack.c.h.b16 %v2765
    %v3440 = vunpack.c.l.b16 %v2766
    %v3441 = vunpack.c.h.b16 %v2766
    %v3442 = vunpack.c.l.b16 %v2767
    %v3443 = vunpack.c.h.b16 %v2767
    %v3444 = vunpack.c.l.b16 %v2768
    %v3445 = vunpack.c.h.b16 %v2768
    %v3446 = vunpack.c.l.b16 %v2769
    %v3447 = vunpack.c.h.b16 %v2769
    %v3448 = vunpack.c.l.b16 %v2770
    %v3449 = vunpack.c.h.b16 %v2770
    %v3450 = vunpack.c.l.b16 %v2771
    %v3451 = vunpack.c.h.b16 %v2771
    %v3452 = vunpack.c.l.b16 %v2772
    %v3453 = vunpack.c.h.b16 %v2772
    %v3454 = vunpack.c.l.b16 %v2773
    %v3455 = vunpack.c.h.b16 %v2773
    %v3456 = vunpack.c.l.b16 %v2774
    %v3457 = vunpack.c.h.b16 %v2774
    %v3458 = vunpack.c.l.b16 %v2775
    %v3459 = vunpack.c.h.b16 %v2775
    %v3460 = vunpack.c.l.b16 %v2776
    %v3461 = vunpack.c.h.b16 %v2776
    %v3462 = vunpack.c.l.b16 %v2777
    %v3463 = vunpack.c.h.b16 %v2777
    %v3464 = vunpack.c.l.b16 %v2778
    %v3465 = vunpack.c.h.b16 %v2778
    %v3466 = vunpack.c.l.b16 %v2779
    %v3467 = vunpack.c.h.b16 %v2779
    %v3468 = vunpack.c.l.b16 %v2780
    %v3469 = vunpack.c.h.b16 %v2780
    %v3470 = vunpack.c.l.b16 %v2781
    %v3471 = vunpack.c.h.b16 %v2781
    %v3472 = vunpack.c.l.b16 %v2782
    %v3473 = vunpack.c.h.b16 %v2782
    %v3474 = vunpack.c.l.b16 %v2783
    %v3475 = vunpack.c.h.b16 %v2783
    %v3476 = vunpack.c.l.b16 %v2784
    %v3477 = vunpack.c.h.b16 %v2784
    %v3478 = vunpack.c.l.b16 %v2785
    %v3479 = vunpack.c.h.b16 %v2785
    %v3480 = vunpack.c.l.b16 %v2786
    %v3481 = vunpack.c.h.b16 %v2786
    %v3482 = vunpack.c.l.b16 %v2787
    %v3483 = vunpack.c.h.b16 %v2787
    %v3484 = vunpack.c.l.b16 %v2788
    %v3485 = vunpack.c.h.b16 %v2788
    %v3486 = vunpack.c.l.b16 %v2789
    %v3487 = vunpack.c.h.b16 %v2789
    %v3488 = vunpack.c.l.b16 %v2790
    %v3489 = vunpack.c.h.b16 %v2790
    %v3490 = vunpack.c.l.b16 %v2791
    %v3491 = vunpack.c.h.b16 %v2791
    %v3492 = vunpack.c.l.b16 %v2792
    %v3493 = vunpack.c.h.b16 %v2792
    %v3494 = vunpack.c.l.b16 %v2793
    %v3495 = vunpack.c.h.b16 %v2793
    %v3496 = vunpack.c.l.b16 %v2794
    %v3497 = vunpack.c.h.b16 %v2794
    %v3498 = vunpack.c.l.b16 %v2795
    %v3499 = vunpack.c.h.b16 %v2795
    %v3500 = vunpack.c.l.b16 %v2796
    %v3501 = vunpack.c.h.b16 %v2796
    %v3502 = vunpack.c.l.b16 %v2797
    %v3503 = vunpack.c.h.b16 %v2797
    %v3504 = vunpack.c.l.b16 %v2798
    %v3505 = vunpack.c.h.b16 %v2798
    %v3506 = vunpack.c.l.b16 %v2799
    %v3507 = vunpack.c.h.b16 %v2799
    %v3508 = vunpack.c.l.b16 %v2800
    %v3509 = vunpack.c.h.b16 %v2800
    %v3510 = vunpack.c.l.b16 %v2801
    %v3511 = vunpack.c.h.b16 %v2801
    %v3512 = vunpack.c.l.b16 %v2802
    %v3513 = vunpack.c.h.b16 %v2802
    %v3514 = vunpack.c.l.b16 %v2803
    %v3515 = vunpack.c.h.b16 %v2803
    %v3516 = vunpack.c.l.b16 %v2804
    %v3517 = vunpack.c.h.b16 %v2804
    %v3518 = vunpack.c.l.b16 %v2805
    %v3519 = vunpack.c.h.b16 %v2805
    %v3520 = vunpack.c.l.b16 %v2806
    %v3521 = vunpack.c.h.b16 %v2806
    %v3522 = vunpack.c.l.b16 %v2807
    %v3523 = vunpack.c.h.b16 %v2807
    %v3524 = vunpack.c.l.b16 %v2808
    %v3525 = vunpack.c.h.b16 %v2808
    %v3526 = vunpack.c.l.b16 %v2809
    %v3527 = vunpack.c.h.b16 %v2809
    %v3528 = vunpack.c.l.b16 %v2810
    %v3529 = vunpack.c.h.b16 %v2810
    %v3530 = vunpack.c.l.b16 %v2811
    %v3531 = vunpack.c.h.b16 %v2811
    %v3532 = vunpack.c.l.b16 %v2812
    %v3533 = vunpack.c.h.b16 %v2812
    %v3534 = vunpack.c.l.b16 %v2813
    %v3535 = vunpack.c.h.b16 %v2813
    %v3536 = vunpack.c.l.b16 %v2814
    %v3537 = vunpack.c.h.b16 %v2814
    %v3538 = vunpack.c.l.b16 %v2815
    %v3539 = vunpack.c.h.b16 %v2815
    %v3540 = vunpack.c.l.b16 %v2816
    %v3541 = vunpack.c.h.b16 %v2816
    %v3542 = vunpack.c.l.b16 %v2817
    %v3543 = vunpack.c.h.b16 %v2817
    %v3544 = vunpack.c.l.b16 %v2818
    %v3545 = vunpack.c.h.b16 %v2818
    %v3546 = vunpack.c.l.b16 %v2819
    %v3547 = vunpack.c.h.b16 %v2819
    %v3548 = vunpack.c.l.b16 %v2820
    %v3549 = vunpack.c.h.b16 %v2820
    %v3550 = vunpack.c.l.b16 %v2821
    %v3551 = vunpack.c.h.b16 %v2821
    %v3552 = vunpack.c.l.b16 %v2822
    %v3553 = vunpack.c.h.b16 %v2822
    %v3554 = vunpack.c.l.b16 %v2823
    %v3555 = vunpack.c.h.b16 %v2823
    %v3556 = vunpack.c.l.b16 %v2824
    %v3557 = vunpack.c.h.b16 %v2824
    %v3558 = vunpack.c.l.b16 %v2825
    %v3559 = vunpack.c.h.b16 %v2825
    %v3560 = vunpack.c.l.b16 %v2826
    %v3561 = vunpack.c.h.b16 %v2826
    %v3562 = vunpack.c.l.b16 %v2827
    %v3563 = vunpack.c.h.b16 %v2827
    %v3564 = vunpack.c.l.b16 %v2828
    %v3565 = vunpack.c.h.b16 %v2828
    %v3566 = vunpack.c.l.b16 %v2829
    %v3567 = vunpack.c.h.b16 %v2829
    %v3568 = vunpack.c.l.b16 %v2830
    %v3569 = vunpack.c.h.b16 %v2830
    %v3570 = vunpack.c.l.b16 %v2831
    %v3571 = vunpack.c.h.b16 %v2831
    %v3572 = vunpack.c.l.b16 %v2832
    %v3573 = vunpack.c.h.b16 %v2832
    %v3574 = vunpack.c.l.b16 %v2833
    %v3575 = vunpack.c.h.b16 %v2833
    %v3576 = vunpack.c.l.b16 %v2834
    %v3577 = vunpack.c.h.b16 %v2834
    %v3578 = vunpack.c.l.b16 %v2835
    %v3579 = vunpack.c.h.b16 %v2835
    %v3580 = vunpack.c.l.b16 %v2836
    %v3581 = vunpack.c.h.b16 %v2836
    %v3582 = vunpack.c.l.b16 %v2837
    %v3583 = vunpack.c.h.b16 %v2837
    %v3584 = vunpack.c.l.b16 %v2838
    %v3585 = vunpack.c.h.b16 %v2838
    %v3586 = vunpack.c.l.b16 %v2839
    %v3587 = vunpack.c.h.b16 %v2839
    %v3588 = vunpack.c.l.b16 %v2840
    %v3589 = vunpack.c.h.b16 %v2840
    %v3590 = vunpack.c.l.b16 %v2841
    %v3591 = vunpack.c.h.b16 %v2841
    %v3592 = vunpack.c.l.b16 %v2842
    %v3593 = vunpack.c.h.b16 %v2842
    %v3594 = vunpack.c.l.b16 %v2843
    %v3595 = vunpack.c.h.b16 %v2843
    %v3596 = vunpack.c.l.b16 %v2844
    %v3597 = vunpack.c.h.b16 %v2844
    %v3598 = vunpack.c.l.b16 %v2845
    %v3599 = vunpack.c.h.b16 %v2845
    %v3600 = vunpack.c.l.b16 %v2846
    %v3601 = vunpack.c.h.b16 %v2846
    %v3602 = vunpack.c.l.b16 %v2847
    %v3603 = vunpack.c.h.b16 %v2847
    %v3604 = vunpack.c.l.b16 %v2848
    %v3605 = vunpack.c.h.b16 %v2848
    %v3606 = vunpack.c.l.b16 %v2849
    %v3607 = vunpack.c.h.b16 %v2849
    %v3608 = vunpack.c.l.b16 %v2850
    %v3609 = vunpack.c.h.b16 %v2850
    %v3610 = vunpack.c.l.b16 %v2851
    %v3611 = vunpack.c.h.b16 %v2851
    %v3612 = vunpack.c.l.b16 %v2852
    %v3613 = vunpack.c.h.b16 %v2852
    %v3614 = vunpack.c.l.b16 %v2853
    %v3615 = vunpack.c.h.b16 %v2853
    %v3616 = vunpack.c.l.b16 %v2854
    %v3617 = vunpack.c.h.b16 %v2854
    %v3618 = vunpack.c.l.b16 %v2855
    %v3619 = vunpack.c.h.b16 %v2855
    %v3620 = vunpack.c.l.b16 %v2856
    %v3621 = vunpack.c.h.b16 %v2856
    %v3622 = vunpack.c.l.b16 %v2857
    %v3623 = vunpack.c.h.b16 %v2857
    %v3624 = vunpack.c.l.b16 %v2858
    %v3625 = vunpack.c.h.b16 %v2858
    %v3626 = vunpack.c.l.b16 %v2859
    %v3627 = vunpack.c.h.b16 %v2859
    %v3628 = vunpack.c.l.b16 %v2860
    %v3629 = vunpack.c.h.b16 %v2860
    %v3630 = vunpack.c.l.b16 %v2861
    %v3631 = vunpack.c.h.b16 %v2861
    %v3632 = vunpack.c.l.b16 %v2862
    %v3633 = vunpack.c.h.b16 %v2862
    %v3634 = vunpack.c.l.b16 %v2863
    %v3635 = vunpack.c.h.b16 %v2863
    %v3636 = vunpack.c.l.b16 %v2864
    %v3637 = vunpack.c.h.b16 %v2864
    %v3638 = vunpack.c.l.b16 %v2865
    %v3639 = vunpack.c.h.b16 %v2865
    %v3640 = vunpack.c.l.b16 %v2866
    %v3641 = vunpack.c.h.b16 %v2866
    %v3642 = vunpack.c.l.b16 %v2867
    %v3643 = vunpack.c.h.b16 %v2867
    %v3644 = vunpack.c.l.b16 %v2868
    %v3645 = vunpack.c.h.b16 %v2868
    %v3646 = vunpack.c.l.b16 %v2869
    %v3647 = vunpack.c.h.b16 %v2869
    %v3648 = vunpack.c.l.b16 %v2870
    %v3649 = vunpack.c.h.b16 %v2870
    %v3650 = vunpack.c.l.b16 %v2871
    %v3651 = vunpack.c.h.b16 %v2871
    %v3652 = vunpack.c.l.b16 %v2872
    %v3653 = vunpack.c.h.b16 %v2872
    %v3654 = vunpack.c.l.b16 %v2873
    %v3655 = vunpack.c.h.b16 %v2873
    %v3656 = vunpack.c.l.b16 %v2874
    %v3657 = vunpack.c.h.b16 %v2874
    %v3658 = vunpack.c.l.b16 %v2875
    %v3659 = vunpack.c.h.b16 %v2875
    %v3660 = vunpack.c.l.b16 %v2876
    %v3661 = vunpack.c.h.b16 %v2876
    %v3662 = vunpack.c.l.b16 %v2877
    %v3663 = vunpack.c.h.b16 %v2877
    %v3664 = vunpack.c.l.b16 %v2878
    %v3665 = vunpack.c.h.b16 %v2878
    %v3666 = vunpack.c.l.b16 %v2879
    %v3667 = vunpack.c.h.b16 %v2879
    %v3668 = vunpack.c.l.b16 %v2880
    %v3669 = vunpack.c.h.b16 %v2880
    %v3670 = vunpack.c.l.b16 %v2881
    %v3671 = vunpack.c.h.b16 %v2881
    %v3672 = vpack.c.b16 %v3164, %v3160
    %v3673 = vpack.c.b16 %v3165, %v3161
    %v3674 = vpack.c.b16 %v3166, %v3162
    %v3675 = vpack.c.b16 %v3167, %v3163
    %v3676 = vpack.c.b16 %v3172, %v3168
    %v3677 = vpack.c.b16 %v3173, %v3169
    %v3678 = vpack.c.b16 %v3174, %v3170
    %v3679 = vpack.c.b16 %v3175, %v3171
    %v3680 = vpack.c.b16 %v3180, %v3176
    %v3681 = vpack.c.b16 %v3181, %v3177
    %v3682 = vpack.c.b16 %v3182, %v3178
    %v3683 = vpack.c.b16 %v3183, %v3179
    %v3684 = vpack.c.b16 %v3188, %v3184
    %v3685 = vpack.c.b16 %v3189, %v3185
    %v3686 = vpack.c.b16 %v3190, %v3186
    %v3687 = vpack.c.b16 %v3191, %v3187
    %v3688 = vpack.c.b16 %v3196, %v3192
    %v3689 = vpack.c.b16 %v3197, %v3193
    %v3690 = vpack.c.b16 %v3198, %v3194
    %v3691 = vpack.c.b16 %v3199, %v3195
    %v3692 = vpack.c.b16 %v3204, %v3200
    %v3693 = vpack.c.b16 %v3205, %v3201
    %v3694 = vpack.c.b16 %v3206, %v3202
    %v3695 = vpack.c.b16 %v3207, %v3203
    %v3696 = vpack.c.b16 %v3212, %v3208
    %v3697 = vpack.c.b16 %v3213, %v3209
    %v3698 = vpack.c.b16 %v3214, %v3210
    %v3699 = vpack.c.b16 %v3215, %v3211
    %v3700 = vpack.c.b16 %v3220, %v3216
    %v3701 = vpack.c.b16 %v3221, %v3217
    %v3702 = vpack.c.b16 %v3222, %v3218
    %v3703 = vpack.c.b16 %v3223, %v3219
    %v3704 = vpack.c.b16 %v3228, %v3224
    %v3705 = vpack.c.b16 %v3229, %v3225
    %v3706 = vpack.c.b16 %v3230, %v3226
    %v3707 = vpack.c.b16 %v3231, %v3227
    %v3708 = vpack.c.b16 %v3236, %v3232
    %v3709 = vpack.c.b16 %v3237, %v3233
    %v3710 = vpack.c.b16 %v3238, %v3234
    %v3711 = vpack.c.b16 %v3239, %v3235
    %v3712 = vpack.c.b16 %v3244, %v3240
    %v3713 = vpack.c.b16 %v3245, %v3241
    %v3714 = vpack.c.b16 %v3246, %v3242
    %v3715 = vpack.c.b16 %v3247, %v3243
    %v3716 = vpack.c.b16 %v3252, %v3248
    %v3717 = vpack.c.b16 %v3253, %v3249
    %v3718 = vpack.c.b16 %v3254, %v3250
    %v3719 = vpack.c.b16 %v3255, %v3251
    %v3720 = vpack.c.b16 %v3260, %v3256
    %v3721 = vpack.c.b16 %v3261, %v3257
    %v3722 = vpack.c.b16 %v3262, %v3258
    %v3723 = vpack.c.b16 %v3263, %v3259
    %v3724 = vpack.c.b16 %v3268, %v3264
    %v3725 = vpack.c.b16 %v3269, %v3265
    %v3726 = vpack.c.b16 %v3270, %v3266
    %v3727 = vpack.c.b16 %v3271, %v3267
    %v3728 = vpack.c.b16 %v3276, %v3272
    %v3729 = vpack.c.b16 %v3277, %v3273
    %v3730 = vpack.c.b16 %v3278, %v3274
    %v3731 = vpack.c.b16 %v3279, %v3275
    %v3732 = vpack.c.b16 %v3284, %v3280
    %v3733 = vpack.c.b16 %v3285, %v3281
    %v3734 = vpack.c.b16 %v3286, %v3282
    %v3735 = vpack.c.b16 %v3287, %v3283
    %v3736 = vpack.c.b16 %v3292, %v3288
    %v3737 = vpack.c.b16 %v3293, %v3289
    %v3738 = vpack.c.b16 %v3294, %v3290
    %v3739 = vpack.c.b16 %v3295, %v3291
    %v3740 = vpack.c.b16 %v3300, %v3296
    %v3741 = vpack.c.b16 %v3301, %v3297
    %v3742 = vpack.c.b16 %v3302, %v3298
    %v3743 = vpack.c.b16 %v3303, %v3299
    %v3744 = vpack.c.b16 %v3308, %v3304
    %v3745 = vpack.c.b16 %v3309, %v3305
    %v3746 = vpack.c.b16 %v3310, %v3306
    %v3747 = vpack.c.b16 %v3311, %v3307
    %v3748 = vpack.c.b16 %v3316, %v3312
    %v3749 = vpack.c.b16 %v3317, %v3313
    %v3750 = vpack.c.b16 %v3318, %v3314
    %v3751 = vpack.c.b16 %v3319, %v3315
    %v3752 = vpack.c.b16 %v3324, %v3320
    %v3753 = vpack.c.b16 %v3325, %v3321
    %v3754 = vpack.c.b16 %v3326, %v3322
    %v3755 = vpack.c.b16 %v3327, %v3323
    %v3756 = vpack.c.b16 %v3332, %v3328
    %v3757 = vpack.c.b16 %v3333, %v3329
    %v3758 = vpack.c.b16 %v3334, %v3330
    %v3759 = vpack.c.b16 %v3335, %v3331
    %v3760 = vpack.c.b16 %v3340, %v3336
    %v3761 = vpack.c.b16 %v3341, %v3337
    %v3762 = vpack.c.b16 %v3342, %v3338
    %v3763 = vpack.c.b16 %v3343, %v3339
    %v3764 = vpack.c.b16 %v3348, %v3344
    %v3765 = vpack.c.b16 %v3349, %v3345
    %v3766 = vpack.c.b16 %v3350, %v3346
    %v3767 = vpack.c.b16 %v3351, %v3347
    %v3768 = vpack.c.b16 %v3356, %v3352
    %v3769 = vpack.c.b16 %v3357, %v3353
    %v3770 = vpack.c.b16 %v3358, %v3354
    %v3771 = vpack.c.b16 %v3359, %v3355
    %v3772 = vpack.c.b16 %v3364, %v3360
    %v3773 = vpack.c.b16 %v3365, %v3361
    %v3774 = vpack.c.b16 %v3366, %v3362
    %v3775 = vpack.c.b16 %v3367, %v3363
    %v3776 = vpack.c.b16 %v3372, %v3368
    %v3777 = vpack.c.b16 %v3373, %v3369
    %v3778 = vpack.c.b16 %v3374, %v3370
    %v3779 = vpack.c.b16 %v3375, %v3371
    %v3780 = vpack.c.b16 %v3380, %v3376
    %v3781 = vpack.c.b16 %v3381, %v3377
    %v3782 = vpack.c.b16 %v3382, %v3378
    %v3783 = vpack.c.b16 %v3383, %v3379
    %v3784 = vpack.c.b16 %v3388, %v3384
    %v3785 = vpack.c.b16 %v3389, %v3385
    %v3786 = vpack.c.b16 %v3390, %v3386
    %v3787 = vpack.c.b16 %v3391, %v3387
    %v3788 = vpack.c.b16 %v3396, %v3392
    %v3789 = vpack.c.b16 %v3397, %v3393
    %v3790 = vpack.c.b16 %v3398, %v3394
    %v3791 = vpack.c.b16 %v3399, %v3395
    %v3792 = vpack.c.b16 %v3404, %v3400
    %v3793 = vpack.c.b16 %v3405, %v3401
    %v3794 = vpack.c.b16 %v3406, %v3402
    %v3795 = vpack.c.b16 %v3407, %v3403
    %v3796 = vpack.c.b16 %v3412, %v3408
    %v3797 = vpack.c.b16 %v3413, %v3409
    %v3798 = vpack.c.b16 %v3414, %v3410
    %v3799 = vpack.c.b16 %v3415, %v3411
    %v3800 = vpack.c.b16 %v3420, %v3416
    %v3801 = vpack.c.b16 %v3421, %v3417
    %v3802 = vpack.c.b16 %v3422, %v3418
    %v3803 = vpack.c.b16 %v3423, %v3419
    %v3804 = vpack.c.b16 %v3428, %v3424
    %v3805 = vpack.c.b16 %v3429, %v3425
    %v3806 = vpack.c.b16 %v3430, %v3426
    %v3807 = vpack.c.b16 %v3431, %v3427
    %v3808 = vpack.c.b16 %v3436, %v3432
    %v3809 = vpack.c.b16 %v3437, %v3433
    %v3810 = vpack.c.b16 %v3438, %v3434
    %v3811 = vpack.c.b16 %v3439, %v3435
    %v3812 = vpack.c.b16 %v3444, %v3440
    %v3813 = vpack.c.b16 %v3445, %v3441
    %v3814 = vpack.c.b16 %v3446, %v3442
    %v3815 = vpack.c.b16 %v3447, %v3443
    %v3816 = vpack.c.b16 %v3452, %v3448
    %v3817 = vpack.c.b16 %v3453, %v3449
    %v3818 = vpack.c.b16 %v3454, %v3450
    %v3819 = vpack.c.b16 %v3455, %v3451
    %v3820 = vpack.c.b16 %v3460, %v3456
    %v3821 = vpack.c.b16 %v3461, %v3457
    %v3822 = vpack.c.b16 %v3462, %v3458
    %v3823 = vpack.c.b16 %v3463, %v3459
    %v3824 = vpack.c.b16 %v3468, %v3464
    %v3825 = vpack.c.b16 %v3469, %v3465
    %v3826 = vpack.c.b16 %v3470, %v3466
    %v3827 = vpack.c.b16 %v3471, %v3467
    %v3828 = vpack.c.b16 %v3476, %v3472
    %v3829 = vpack.c.b16 %v3477, %v3473
    %v3830 = vpack.c.b16 %v3478, %v3474
    %v3831 = vpack.c.b16 %v3479, %v3475
    %v3832 = vpack.c.b16 %v3484, %v3480
    %v3833 = vpack.c.b16 %v3485, %v3481
    %v3834 = vpack.c.b16 %v3486, %v3482
    %v3835 = vpack.c.b16 %v3487, %v3483
    %v3836 = vpack.c.b16 %v3492, %v3488
    %v3837 = vpack.c.b16 %v3493, %v3489
    %v3838 = vpack.c.b16 %v3494, %v3490
    %v3839 = vpack.c.b16 %v3495, %v3491
    %v3840 = vpack.c.b16 %v3500, %v3496
    %v3841 = vpack.c.b16 %v3501, %v3497
    %v3842 = vpack.c.b16 %v3502, %v3498
    %v3843 = vpack.c.b16 %v3503, %v3499
    %v3844 = vpack.c.b16 %v3508, %v3504
    %v3845 = vpack.c.b16 %v3509, %v3505
    %v3846 = vpack.c.b16 %v3510, %v3506
    %v3847 = vpack.c.b16 %v3511, %v3507
    %v3848 = vpack.c.b16 %v3516, %v3512
    %v3849 = vpack.c.b16 %v3517, %v3513
    %v3850 = vpack.c.b16 %v3518, %v3514
    %v3851 = vpack.c.b16 %v3519, %v3515
    %v3852 = vpack.c.b16 %v3524, %v3520
    %v3853 = vpack.c.b16 %v3525, %v3521
    %v3854 = vpack.c.b16 %v3526, %v3522
    %v3855 = vpack.c.b16 %v3527, %v3523
    %v3856 = vpack.c.b16 %v3532, %v3528
    %v3857 = vpack.c.b16 %v3533, %v3529
    %v3858 = vpack.c.b16 %v3534, %v3530
    %v3859 = vpack.c.b16 %v3535, %v3531
    %v3860 = vpack.c.b16 %v3540, %v3536
    %v3861 = vpack.c.b16 %v3541, %v3537
    %v3862 = vpack.c.b16 %v3542, %v3538
    %v3863 = vpack.c.b16 %v3543, %v3539
    %v3864 = vpack.c.b16 %v3548, %v3544
    %v3865 = vpack.c.b16 %v3549, %v3545
    %v3866 = vpack.c.b16 %v3550, %v3546
    %v3867 = vpack.c.b16 %v3551, %v3547
    %v3868 = vpack.c.b16 %v3556, %v3552
    %v3869 = vpack.c.b16 %v3557, %v3553
    %v3870 = vpack.c.b16 %v3558, %v3554
    %v3871 = vpack.c.b16 %v3559, %v3555
    %v3872 = vpack.c.b16 %v3564, %v3560
    %v3873 = vpack.c.b16 %v3565, %v3561
    %v3874 = vpack.c.b16 %v3566, %v3562
    %v3875 = vpack.c.b16 %v3567, %v3563
    %v3876 = vpack.c.b16 %v3572, %v3568
    %v3877 = vpack.c.b16 %v3573, %v3569
    %v3878 = vpack.c.b16 %v3574, %v3570
    %v3879 = vpack.c.b16 %v3575, %v3571
    %v3880 = vpack.c.b16 %v3580, %v3576
    %v3881 = vpack.c.b16 %v3581, %v3577
    %v3882 = vpack.c.b16 %v3582, %v3578
    %v3883 = vpack.c.b16 %v3583, %v3579
    %v3884 = vpack.c.b16 %v3588, %v3584
    %v3885 = vpack.c.b16 %v3589, %v3585
    %v3886 = vpack.c.b16 %v3590, %v3586
    %v3887 = vpack.c.b16 %v3591, %v3587
    %v3888 = vpack.c.b16 %v3596, %v3592
    %v3889 = vpack.c.b16 %v3597, %v3593
    %v3890 = vpack.c.b16 %v3598, %v3594
    %v3891 = vpack.c.b16 %v3599, %v3595
    %v3892 = vpack.c.b16 %v3604, %v3600
    %v3893 = vpack.c.b16 %v3605, %v3601
    %v3894 = vpack.c.b16 %v3606, %v3602
    %v3895 = vpack.c.b16 %v3607, %v3603
    %v3896 = vpack.c.b16 %v3612, %v3608
    %v3897 = vpack.c.b16 %v3613, %v3609
    %v3898 = vpack.c.b16 %v3614, %v3610
    %v3899 = vpack.c.b16 %v3615, %v3611
    %v3900 = vpack.c.b16 %v3620, %v3616
    %v3901 = vpack.c.b16 %v3621, %v3617
    %v3902 = vpack.c.b16 %v3622, %v3618
    %v3903 = vpack.c.b16 %v3623, %v3619
    %v3904 = vpack.c.b16 %v3628, %v3624
    %v3905 = vpack.c.b16 %v3629, %v3625
    %v3906 = vpack.c.b16 %v3630, %v3626
    %v3907 = vpack.c.b16 %v3631, %v3627
    %v3908 = vpack.c.b16 %v3636, %v3632
    %v3909 = vpack.c.b16 %v3637, %v3633
    %v3910 = vpack.c.b16 %v3638, %v3634
    %v3911 = vpack.c.b16 %v3639, %v3635
    %v3912 = vpack.c.b16 %v3644, %v3640
    %v3913 = vpack.c.b16 %v3645, %v3641
    %v3914 = vpack.c.b16 %v3646, %v3642
    %v3915 = vpack.c.b16 %v3647, %v3643
    %v3916 = vpack.c.b16 %v3652, %v3648
    %v3917 = vpack.c.b16 %v3653, %v3649
    %v3918 = vpack.c.b16 %v3654, %v3650
    %v3919 = vpack.c.b16 %v3655, %v3651
    %v3920 = vpack.c.b16 %v3660, %v3656
    %v3921 = vpack.c.b16 %v3661, %v3657
    %v3922 = vpack.c.b16 %v3662, %v3658
    %v3923 = vpack.c.b16 %v3663, %v3659
    %v3924 = vpack.c.b16 %v3668, %v3664
    %v3925 = vpack.c.b16 %v3669, %v3665
    %v3926 = vpack.c.b16 %v3670, %v3666
    %v3927 = vpack.c.b16 %v3671, %v3667
    %4184 = vmatprep.subr.bf16.mxu0 %v3673
    %4185 = vmatpush1.bf16.msra.mxu0 %v3672
    %4186 = vmatprep.subr.bf16.mxu0 %v3677
    %4187 = vmatpush1.bf16.msra.mxu0 %v3676
    %4188 = vmatprep.subr.bf16.mxu0 %v3681
    %4189 = vmatpush1.bf16.msra.mxu0 %v3680
    %4190 = vmatprep.subr.bf16.mxu0 %v3685
    %4191 = vmatpush1.bf16.msra.mxu0 %v3684
    %4192 = vmatprep.subr.bf16.mxu0 %v3689
    %4193 = vmatpush1.bf16.msra.mxu0 %v3688
    %4194 = vmatprep.subr.bf16.mxu0 %v3693
    %4195 = vmatpush1.bf16.msra.mxu0 %v3692
    %4196 = vmatprep.subr.bf16.mxu0 %v3697
    %4197 = vmatpush1.bf16.msra.mxu0 %v3696
    %4198 = vmatprep.subr.bf16.mxu0 %v3701
    %4199 = vmatpush1.bf16.msra.mxu0 %v3700
    %4200 = vmatprep.subr.bf16.mxu0 %v3705
    %4201 = vmatpush1.bf16.msra.mxu0 %v3704
    %4202 = vmatprep.subr.bf16.mxu0 %v3709
    %4203 = vmatpush1.bf16.msra.mxu0 %v3708
    %4204 = vmatprep.subr.bf16.mxu0 %v3713
    %4205 = vmatpush1.bf16.msra.mxu0 %v3712
    %4206 = vmatprep.subr.bf16.mxu0 %v3717
    %4207 = vmatpush1.bf16.msra.mxu0 %v3716
    %4208 = vmatprep.subr.bf16.mxu0 %v3721
    %4209 = vmatpush1.bf16.msra.mxu0 %v3720
    %4210 = vmatprep.subr.bf16.mxu0 %v3725
    %4211 = vmatpush1.bf16.msra.mxu0 %v3724
    %4212 = vmatprep.subr.bf16.mxu0 %v3729
    %4213 = vmatpush1.bf16.msra.mxu0 %v3728
    %4214 = vmatprep.subr.bf16.mxu0 %v3733
    %4215 = vmatpush1.bf16.msra.mxu0 %v3732
    %4216 = vmatprep.mubr.bf16.mxu0 %v2619
    %4217 = vmatmul.mubr.bf16.gmra.mrb[0].mxu0 %v2618
    %v4218 = vpop.f32.mrb[0].mxu0
    %v4219 = vadd.f32 %v2887, %v4218
    %v4220 = vpop.f32.mrb[0].mxu0
    %v4221 = vadd.f32 %v2891, %v4220
    %v4222 = vpop.f32.mrb[0].mxu0
    %v4223 = vpop.f32.mrb[0].mxu0
    %4224 = vdwg.mxu0
    %4225 = vmatprep.subr.bf16.mxu0 %v3737
    %4226 = vmatpush1.bf16.msra.mxu0 %v3736
    %4227 = vmatprep.subr.bf16.mxu0 %v3741
    %4228 = vmatpush1.bf16.msra.mxu0 %v3740
    %4229 = vmatprep.subr.bf16.mxu0 %v3745
    %4230 = vmatpush1.bf16.msra.mxu0 %v3744
    %4231 = vmatprep.subr.bf16.mxu0 %v3749
    %4232 = vmatpush1.bf16.msra.mxu0 %v3748
    %4233 = vmatprep.subr.bf16.mxu0 %v3753
    %4234 = vmatpush1.bf16.msra.mxu0 %v3752
    %4235 = vmatprep.subr.bf16.mxu0 %v3757
    %4236 = vmatpush1.bf16.msra.mxu0 %v3756
    %4237 = vmatprep.subr.bf16.mxu0 %v3761
    %4238 = vmatpush1.bf16.msra.mxu0 %v3760
    %4239 = vmatprep.subr.bf16.mxu0 %v3765
    %4240 = vmatpush1.bf16.msra.mxu0 %v3764
    %4241 = vmatprep.subr.bf16.mxu0 %v3769
    %4242 = vmatpush1.bf16.msra.mxu0 %v3768
    %4243 = vmatprep.subr.bf16.mxu0 %v3773
    %4244 = vmatpush1.bf16.msra.mxu0 %v3772
    %4245 = vmatprep.subr.bf16.mxu0 %v3777
    %4246 = vmatpush1.bf16.msra.mxu0 %v3776
    %4247 = vmatprep.subr.bf16.mxu0 %v3781
    %4248 = vmatpush1.bf16.msra.mxu0 %v3780
    %4249 = vmatprep.subr.bf16.mxu0 %v3785
    %4250 = vmatpush1.bf16.msra.mxu0 %v3784
    %4251 = vmatprep.subr.bf16.mxu0 %v3789
    %4252 = vmatpush1.bf16.msra.mxu0 %v3788
    %4253 = vmatprep.subr.bf16.mxu0 %v3793
    %4254 = vmatpush1.bf16.msra.mxu0 %v3792
    %4255 = vmatprep.subr.bf16.mxu0 %v3797
    %4256 = vmatpush1.bf16.msra.mxu0 %v3796
    %4257 = vmatprep.mubr.bf16.mxu0 %v2621
    %4258 = vmatmul.mubr.bf16.gmra.mrb[0].mxu0 %v2620
    %v4259 = vpop.f32.mrb[0].mxu0
    %v4260 = vadd.f32 %v4219, %v4259
    %v4261 = vpop.f32.mrb[0].mxu0
    %v4262 = vadd.f32 %v4221, %v4261
    %v4263 = vpop.f32.mrb[0].mxu0
    %v4264 = vpop.f32.mrb[0].mxu0
    %4265 = vdwg.mxu0
    %4266 = vmatprep.subr.bf16.mxu0 %v3801
    %4267 = vmatpush1.bf16.msra.mxu0 %v3800
    %4268 = vmatprep.subr.bf16.mxu0 %v3805
    %4269 = vmatpush1.bf16.msra.mxu0 %v3804
    %4270 = vmatprep.subr.bf16.mxu0 %v3809
    %4271 = vmatpush1.bf16.msra.mxu0 %v3808
    %4272 = vmatprep.subr.bf16.mxu0 %v3813
    %4273 = vmatpush1.bf16.msra.mxu0 %v3812
    %4274 = vmatprep.subr.bf16.mxu0 %v3817
    %4275 = vmatpush1.bf16.msra.mxu0 %v3816
    %4276 = vmatprep.subr.bf16.mxu0 %v3821
    %4277 = vmatpush1.bf16.msra.mxu0 %v3820
    %4278 = vmatprep.subr.bf16.mxu0 %v3825
    %4279 = vmatpush1.bf16.msra.mxu0 %v3824
    %4280 = vmatprep.subr.bf16.mxu0 %v3829
    %4281 = vmatpush1.bf16.msra.mxu0 %v3828
    %4282 = vmatprep.subr.bf16.mxu0 %v3833
    %4283 = vmatpush1.bf16.msra.mxu0 %v3832
    %4284 = vmatprep.subr.bf16.mxu0 %v3837
    %4285 = vmatpush1.bf16.msra.mxu0 %v3836
    %4286 = vmatprep.subr.bf16.mxu0 %v3841
    %4287 = vmatpush1.bf16.msra.mxu0 %v3840
    %4288 = vmatprep.subr.bf16.mxu0 %v3845
    %4289 = vmatpush1.bf16.msra.mxu0 %v3844
    %4290 = vmatprep.subr.bf16.mxu0 %v3849
    %4291 = vmatpush1.bf16.msra.mxu0 %v3848
    %4292 = vmatprep.subr.bf16.mxu0 %v3853
    %4293 = vmatpush1.bf16.msra.mxu0 %v3852
    %4294 = vmatprep.subr.bf16.mxu0 %v3857
    %4295 = vmatpush1.bf16.msra.mxu0 %v3856
    %4296 = vmatprep.subr.bf16.mxu0 %v3861
    %4297 = vmatpush1.bf16.msra.mxu0 %v3860
    %4298 = vmatprep.mubr.bf16.mxu0 %v2623
    %4299 = vmatmul.mubr.bf16.gmra.mrb[0].mxu0 %v2622
    %v4300 = vpop.f32.mrb[0].mxu0
    %v4301 = vadd.f32 %v4260, %v4300
    %v4302 = vpop.f32.mrb[0].mxu0
    %v4303 = vadd.f32 %v4262, %v4302
    %v4304 = vpop.f32.mrb[0].mxu0
    %v4305 = vpop.f32.mrb[0].mxu0
    %4306 = vdwg.mxu0
    %4307 = vmatprep.subr.bf16.mxu0 %v3865
    %4308 = vmatpush1.bf16.msra.mxu0 %v3864
    %4309 = vmatprep.subr.bf16.mxu0 %v3869
    %4310 = vmatpush1.bf16.msra.mxu0 %v3868
    %4311 = vmatprep.subr.bf16.mxu0 %v3873
    %4312 = vmatpush1.bf16.msra.mxu0 %v3872
    %4313 = vmatprep.subr.bf16.mxu0 %v3877
    %4314 = vmatpush1.bf16.msra.mxu0 %v3876
    %4315 = vmatprep.subr.bf16.mxu0 %v3881
    %4316 = vmatpush1.bf16.msra.mxu0 %v3880
    %4317 = vmatprep.subr.bf16.mxu0 %v3885
    %4318 = vmatpush1.bf16.msra.mxu0 %v3884
    %4319 = vmatprep.subr.bf16.mxu0 %v3889
    %4320 = vmatpush1.bf16.msra.mxu0 %v3888
    %4321 = vmatprep.subr.bf16.mxu0 %v3893
    %4322 = vmatpush1.bf16.msra.mxu0 %v3892
    %4323 = vmatprep.subr.bf16.mxu0 %v3897
    %4324 = vmatpush1.bf16.msra.mxu0 %v3896
    %4325 = vmatprep.subr.bf16.mxu0 %v3901
    %4326 = vmatpush1.bf16.msra.mxu0 %v3900
    %4327 = vmatprep.subr.bf16.mxu0 %v3905
    %4328 = vmatpush1.bf16.msra.mxu0 %v3904
    %4329 = vmatprep.subr.bf16.mxu0 %v3909
    %4330 = vmatpush1.bf16.msra.mxu0 %v3908
    %4331 = vmatprep.subr.bf16.mxu0 %v3913
    %4332 = vmatpush1.bf16.msra.mxu0 %v3912
    %4333 = vmatprep.subr.bf16.mxu0 %v3917
    %4334 = vmatpush1.bf16.msra.mxu0 %v3916
    %4335 = vmatprep.subr.bf16.mxu0 %v3921
    %4336 = vmatpush1.bf16.msra.mxu0 %v3920
    %4337 = vmatprep.subr.bf16.mxu0 %v3925
    %4338 = vmatpush1.bf16.msra.mxu0 %v3924
    %4339 = vmatprep.mubr.bf16.mxu0 %v2625
    %4340 = vmatmul.mubr.bf16.gmra.mrb[0].mxu0 %v2624
    %v4341 = vpop.f32.mrb[0].mxu0
    %v4342 = vadd.f32 %v4301, %v4341
    %v4343 = vpop.f32.mrb[0].mxu0
    %v4344 = vadd.f32 %v4303, %v4343
    %v4345 = vpop.f32.mrb[0].mxu0
    %v4346 = vpop.f32.mrb[0].mxu0
    %4347 = vdwg.mxu0
    %4348 = vmatprep.subr.bf16.mxu0 %v3675
    %4349 = vmatpush1.bf16.msra.mxu0 %v3674
    %4350 = vmatprep.subr.bf16.mxu0 %v3679
    %4351 = vmatpush1.bf16.msra.mxu0 %v3678
    %4352 = vmatprep.subr.bf16.mxu0 %v3683
    %4353 = vmatpush1.bf16.msra.mxu0 %v3682
    %4354 = vmatprep.subr.bf16.mxu0 %v3687
    %4355 = vmatpush1.bf16.msra.mxu0 %v3686
    %4356 = vmatprep.subr.bf16.mxu0 %v3691
    %4357 = vmatpush1.bf16.msra.mxu0 %v3690
    %4358 = vmatprep.subr.bf16.mxu0 %v3695
    %4359 = vmatpush1.bf16.msra.mxu0 %v3694
    %4360 = vmatprep.subr.bf16.mxu0 %v3699
    %4361 = vmatpush1.bf16.msra.mxu0 %v3698
    %4362 = vmatprep.subr.bf16.mxu0 %v3703
    %4363 = vmatpush1.bf16.msra.mxu0 %v3702
    %4364 = vmatprep.subr.bf16.mxu0 %v3707
    %4365 = vmatpush1.bf16.msra.mxu0 %v3706
    %4366 = vmatprep.subr.bf16.mxu0 %v3711
    %4367 = vmatpush1.bf16.msra.mxu0 %v3710
    %4368 = vmatprep.subr.bf16.mxu0 %v3715
    %4369 = vmatpush1.bf16.msra.mxu0 %v3714
    %4370 = vmatprep.subr.bf16.mxu0 %v3719
    %4371 = vmatpush1.bf16.msra.mxu0 %v3718
    %4372 = vmatprep.subr.bf16.mxu0 %v3723
    %4373 = vmatpush1.bf16.msra.mxu0 %v3722
    %4374 = vmatprep.subr.bf16.mxu0 %v3727
    %4375 = vmatpush1.bf16.msra.mxu0 %v3726
    %4376 = vmatprep.subr.bf16.mxu0 %v3731
    %4377 = vmatpush1.bf16.msra.mxu0 %v3730
    %4378 = vmatprep.subr.bf16.mxu0 %v3735
    %4379 = vmatpush1.bf16.msra.mxu0 %v3734
    %4380 = vmatprep.mubr.bf16.mxu0 %v2619
    %4381 = vmatmul.mubr.bf16.gmra.mrb[0].mxu0 %v2618
    %v4382 = vpop.f32.mrb[0].mxu0
    %v4383 = vadd.f32 %v2895, %v4382
    %v4384 = vpop.f32.mrb[0].mxu0
    %v4385 = vadd.f32 %v2899, %v4384
    %v4386 = vpop.f32.mrb[0].mxu0
    %v4387 = vpop.f32.mrb[0].mxu0
    %4388 = vdwg.mxu0
    %4389 = vmatprep.subr.bf16.mxu0 %v3739
    %4390 = vmatpush1.bf16.msra.mxu0 %v3738
    %4391 = vmatprep.subr.bf16.mxu0 %v3743
    %4392 = vmatpush1.bf16.msra.mxu0 %v3742
    %4393 = vmatprep.subr.bf16.mxu0 %v3747
    %4394 = vmatpush1.bf16.msra.mxu0 %v3746
    %4395 = vmatprep.subr.bf16.mxu0 %v3751
    %4396 = vmatpush1.bf16.msra.mxu0 %v3750
    %4397 = vmatprep.subr.bf16.mxu0 %v3755
    %4398 = vmatpush1.bf16.msra.mxu0 %v3754
    %4399 = vmatprep.subr.bf16.mxu0 %v3759
    %4400 = vmatpush1.bf16.msra.mxu0 %v3758
    %4401 = vmatprep.subr.bf16.mxu0 %v3763
    %4402 = vmatpush1.bf16.msra.mxu0 %v3762
    %4403 = vmatprep.subr.bf16.mxu0 %v3767
    %4404 = vmatpush1.bf16.msra.mxu0 %v3766
    %4405 = vmatprep.subr.bf16.mxu0 %v3771
    %4406 = vmatpush1.bf16.msra.mxu0 %v3770
    %4407 = vmatprep.subr.bf16.mxu0 %v3775
    %4408 = vmatpush1.bf16.msra.mxu0 %v3774
    %4409 = vmatprep.subr.bf16.mxu0 %v3779
    %4410 = vmatpush1.bf16.msra.mxu0 %v3778
    %4411 = vmatprep.subr.bf16.mxu0 %v3783
    %4412 = vmatpush1.bf16.msra.mxu0 %v3782
    %4413 = vmatprep.subr.bf16.mxu0 %v3787
    %4414 = vmatpush1.bf16.msra.mxu0 %v3786
    %4415 = vmatprep.subr.bf16.mxu0 %v3791
    %4416 = vmatpush1.bf16.msra.mxu0 %v3790
    %4417 = vmatprep.subr.bf16.mxu0 %v3795
    %4418 = vmatpush1.bf16.msra.mxu0 %v3794
    %4419 = vmatprep.subr.bf16.mxu0 %v3799
    %4420 = vmatpush1.bf16.msra.mxu0 %v3798
    %4421 = vmatprep.mubr.bf16.mxu0 %v2621
    %4422 = vmatmul.mubr.bf16.gmra.mrb[0].mxu0 %v2620
    %v4423 = vpop.f32.mrb[0].mxu0
    %v4424 = vadd.f32 %v4383, %v4423
    %v4425 = vpop.f32.mrb[0].mxu0
    %v4426 = vadd.f32 %v4385, %v4425
    %v4427 = vpop.f32.mrb[0].mxu0
    %v4428 = vpop.f32.mrb[0].mxu0
    %4429 = vdwg.mxu0
    %4430 = vmatprep.subr.bf16.mxu0 %v3803
    %4431 = vmatpush1.bf16.msra.mxu0 %v3802
    %4432 = vmatprep.subr.bf16.mxu0 %v3807
    %4433 = vmatpush1.bf16.msra.mxu0 %v3806
    %4434 = vmatprep.subr.bf16.mxu0 %v3811
    %4435 = vmatpush1.bf16.msra.mxu0 %v3810
    %4436 = vmatprep.subr.bf16.mxu0 %v3815
    %4437 = vmatpush1.bf16.msra.mxu0 %v3814
    %4438 = vmatprep.subr.bf16.mxu0 %v3819
    %4439 = vmatpush1.bf16.msra.mxu0 %v3818
    %4440 = vmatprep.subr.bf16.mxu0 %v3823
    %4441 = vmatpush1.bf16.msra.mxu0 %v3822
    %4442 = vmatprep.subr.bf16.mxu0 %v3827
    %4443 = vmatpush1.bf16.msra.mxu0 %v3826
    %4444 = vmatprep.subr.bf16.mxu0 %v3831
    %4445 = vmatpush1.bf16.msra.mxu0 %v3830
    %4446 = vmatprep.subr.bf16.mxu0 %v3835
    %4447 = vmatpush1.bf16.msra.mxu0 %v3834
    %4448 = vmatprep.subr.bf16.mxu0 %v3839
    %4449 = vmatpush1.bf16.msra.mxu0 %v3838
    %4450 = vmatprep.subr.bf16.mxu0 %v3843
    %4451 = vmatpush1.bf16.msra.mxu0 %v3842
    %4452 = vmatprep.subr.bf16.mxu0 %v3847
    %4453 = vmatpush1.bf16.msra.mxu0 %v3846
    %4454 = vmatprep.subr.bf16.mxu0 %v3851
    %4455 = vmatpush1.bf16.msra.mxu0 %v3850
    %4456 = vmatprep.subr.bf16.mxu0 %v3855
    %4457 = vmatpush1.bf16.msra.mxu0 %v3854
    %4458 = vmatprep.subr.bf16.mxu0 %v3859
    %4459 = vmatpush1.bf16.msra.mxu0 %v3858
    %4460 = vmatprep.subr.bf16.mxu0 %v3863
    %4461 = vmatpush1.bf16.msra.mxu0 %v3862
    %4462 = vmatprep.mubr.bf16.mxu0 %v2623
    %4463 = vmatmul.mubr.bf16.gmra.mrb[0].mxu0 %v2622
    %v4464 = vpop.f32.mrb[0].mxu0
    %v4465 = vadd.f32 %v4424, %v4464
    %v4466 = vpop.f32.mrb[0].mxu0
    %v4467 = vadd.f32 %v4426, %v4466
    %v4468 = vpop.f32.mrb[0].mxu0
    %v4469 = vpop.f32.mrb[0].mxu0
    %4470 = vdwg.mxu0
    %4471 = vmatprep.subr.bf16.mxu0 %v3867
    %4472 = vmatpush1.bf16.msra.mxu0 %v3866
    %4473 = vmatprep.subr.bf16.mxu0 %v3871
    %4474 = vmatpush1.bf16.msra.mxu0 %v3870
    %4475 = vmatprep.subr.bf16.mxu0 %v3875
    %4476 = vmatpush1.bf16.msra.mxu0 %v3874
    %4477 = vmatprep.subr.bf16.mxu0 %v3879
    %4478 = vmatpush1.bf16.msra.mxu0 %v3878
    %4479 = vmatprep.subr.bf16.mxu0 %v3883
    %4480 = vmatpush1.bf16.msra.mxu0 %v3882
    %4481 = vmatprep.subr.bf16.mxu0 %v3887
    %4482 = vmatpush1.bf16.msra.mxu0 %v3886
    %4483 = vmatprep.subr.bf16.mxu0 %v3891
    %4484 = vmatpush1.bf16.msra.mxu0 %v3890
    %4485 = vmatprep.subr.bf16.mxu0 %v3895
    %4486 = vmatpush1.bf16.msra.mxu0 %v3894
    %4487 = vmatprep.subr.bf16.mxu0 %v3899
    %4488 = vmatpush1.bf16.msra.mxu0 %v3898
    %4489 = vmatprep.subr.bf16.mxu0 %v3903
    %4490 = vmatpush1.bf16.msra.mxu0 %v3902
    %4491 = vmatprep.subr.bf16.mxu0 %v3907
    %4492 = vmatpush1.bf16.msra.mxu0 %v3906
    %4493 = vmatprep.subr.bf16.mxu0 %v3911
    %4494 = vmatpush1.bf16.msra.mxu0 %v3910
    %4495 = vmatprep.subr.bf16.mxu0 %v3915
    %4496 = vmatpush1.bf16.msra.mxu0 %v3914
    %4497 = vmatprep.subr.bf16.mxu0 %v3919
    %4498 = vmatpush1.bf16.msra.mxu0 %v3918
    %4499 = vmatprep.subr.bf16.mxu0 %v3923
    %4500 = vmatpush1.bf16.msra.mxu0 %v3922
    %4501 = vmatprep.subr.bf16.mxu0 %v3927
    %4502 = vmatpush1.bf16.msra.mxu0 %v3926
    %4503 = vmatprep.mubr.bf16.mxu0 %v2625
    %4504 = vmatmul.mubr.bf16.gmra.mrb[0].mxu0 %v2624
    %v4505 = vpop.f32.mrb[0].mxu0
    %v4506 = vadd.f32 %v4465, %v4505
    %v4507 = vpop.f32.mrb[0].mxu0
    %v4508 = vadd.f32 %v4467, %v4507
    %v4509 = vpop.f32.mrb[0].mxu0
    %v4510 = vpop.f32.mrb[0].mxu0
    %4511 = vdwg.mxu0
    %v4512 = vtanh.pop %v4342
    %v4513 = vtanh.pop %v4344
    %v4514 = vtanh.pop %v4506
    %v4515 = vtanh.pop %v4508
    %v4516 = vpack.c.bf16 %v4512, %v4512
    %v4517 = vpack.c.bf16 %v4513, %v4513
    %v4518 = vpack.c.bf16 %v4514, %v4514
    %v4519 = vpack.c.bf16 %v4515, %v4515
    %v4520 = vld [vmem:[#allocation11] sm:$0xff]
    %v4521 = vld [vmem:[#allocation11 + $0x8] sm:$0xff]
    %v4522 = vld [vmem:[#allocation11 + $0x10] sm:$0xff]
    %v4523 = vld [vmem:[#allocation11 + $0x18] sm:$0xff]
    %v4524 = vld [vmem:[#allocation11 + $0x20] sm:$0xff]
    %v4525 = vld [vmem:[#allocation11 + $0x28] sm:$0xff]
    %v4526 = vld [vmem:[#allocation11 + $0x30] sm:$0xff]
    %v4527 = vld [vmem:[#allocation11 + $0x38] sm:$0xff]
    %v4528 = vld [vmem:[#allocation11 + $0x40] sm:$0xff]
    %v4529 = vld [vmem:[#allocation11 + $0x48] sm:$0xff]
    %v4530 = vld [vmem:[#allocation11 + $0x50] sm:$0xff]
    %v4531 = vld [vmem:[#allocation11 + $0x58] sm:$0xff]
    %v4532 = vld [vmem:[#allocation11 + $0x60] sm:$0xff]
    %v4533 = vld [vmem:[#allocation11 + $0x68] sm:$0xff]
    %v4534 = vld [vmem:[#allocation11 + $0x70] sm:$0xff]
    %v4535 = vld [vmem:[#allocation11 + $0x78] sm:$0xff]
    %v4536 = vld [vmem:[#allocation11 + $0x80] sm:$0xff]
    %v4537 = vld [vmem:[#allocation11 + $0x88] sm:$0xff]
    %v4538 = vld [vmem:[#allocation11 + $0x90] sm:$0xff]
    %v4539 = vld [vmem:[#allocation11 + $0x98] sm:$0xff]
    %v4540 = vld [vmem:[#allocation11 + $0xa0] sm:$0xff]
    %v4541 = vld [vmem:[#allocation11 + $0xa8] sm:$0xff]
    %v4542 = vld [vmem:[#allocation11 + $0xb0] sm:$0xff]
    %v4543 = vld [vmem:[#allocation11 + $0xb8] sm:$0xff]
    %v4544 = vld [vmem:[#allocation11 + $0xc0] sm:$0xff]
    %v4545 = vld [vmem:[#allocation11 + $0xc8] sm:$0xff]
    %v4546 = vld [vmem:[#allocation11 + $0xd0] sm:$0xff]
    %v4547 = vld [vmem:[#allocation11 + $0xd8] sm:$0xff]
    %v4548 = vld [vmem:[#allocation11 + $0xe0] sm:$0xff]
    %v4549 = vld [vmem:[#allocation11 + $0xe8] sm:$0xff]
    %v4550 = vld [vmem:[#allocation11 + $0xf0] sm:$0xff]
    %v4551 = vld [vmem:[#allocation11 + $0xf8] sm:$0xff]
    %v4552 = vld [vmem:[#allocation11 + $0x100] sm:$0xff]
    %v4553 = vld [vmem:[#allocation11 + $0x108] sm:$0xff]
    %v4554 = vld [vmem:[#allocation11 + $0x110] sm:$0xff]
    %v4555 = vld [vmem:[#allocation11 + $0x118] sm:$0xff]
    %v4556 = vld [vmem:[#allocation11 + $0x120] sm:$0xff]
    %v4557 = vld [vmem:[#allocation11 + $0x128] sm:$0xff]
    %v4558 = vld [vmem:[#allocation11 + $0x130] sm:$0xff]
    %v4559 = vld [vmem:[#allocation11 + $0x138] sm:$0xff]
    %v4560 = vld [vmem:[#allocation11 + $0x140] sm:$0xff]
    %v4561 = vld [vmem:[#allocation11 + $0x148] sm:$0xff]
    %v4562 = vld [vmem:[#allocation11 + $0x150] sm:$0xff]
    %v4563 = vld [vmem:[#allocation11 + $0x158] sm:$0xff]
    %v4564 = vld [vmem:[#allocation11 + $0x160] sm:$0xff]
    %v4565 = vld [vmem:[#allocation11 + $0x168] sm:$0xff]
    %v4566 = vld [vmem:[#allocation11 + $0x170] sm:$0xff]
    %v4567 = vld [vmem:[#allocation11 + $0x178] sm:$0xff]
    %v4568 = vld [vmem:[#allocation11 + $0x180] sm:$0xff]
    %v4569 = vld [vmem:[#allocation11 + $0x188] sm:$0xff]
    %v4570 = vld [vmem:[#allocation11 + $0x190] sm:$0xff]
    %v4571 = vld [vmem:[#allocation11 + $0x198] sm:$0xff]
    %v4572 = vld [vmem:[#allocation11 + $0x1a0] sm:$0xff]
    %v4573 = vld [vmem:[#allocation11 + $0x1a8] sm:$0xff]
    %v4574 = vld [vmem:[#allocation11 + $0x1b0] sm:$0xff]
    %v4575 = vld [vmem:[#allocation11 + $0x1b8] sm:$0xff]
    %v4576 = vld [vmem:[#allocation11 + $0x1c0] sm:$0xff]
    %v4577 = vld [vmem:[#allocation11 + $0x1c8] sm:$0xff]
    %v4578 = vld [vmem:[#allocation11 + $0x1d0] sm:$0xff]
    %v4579 = vld [vmem:[#allocation11 + $0x1d8] sm:$0xff]
    %v4580 = vld [vmem:[#allocation11 + $0x1e0] sm:$0xff]
    %v4581 = vld [vmem:[#allocation11 + $0x1e8] sm:$0xff]
    %v4582 = vld [vmem:[#allocation11 + $0x1f0] sm:$0xff]
    %v4583 = vld [vmem:[#allocation11 + $0x1f8] sm:$0xff]
    %v4584 = vld [vmem:[#allocation13] sm:$0x3]
    %v4586 = vlaneseq
    %v4587 = vshrl.u32 %v4586, 7
    %v4588 = vsub.s32 0, %v4587
    %v4589 = vrot.slane %v4584, %v4588
    %v4590 = vlaneseq
    %v4591 = vshrl.u32 %v4590, 7
    %v4592 = vsub.s32 1, %v4591
    %v4593 = vrot.slane %v4584, %v4592
    %v4660 = vunpack.c.l.b16 %v4520
    %v4661 = vunpack.c.h.b16 %v4520
    %v4662 = vunpack.c.l.b16 %v4521
    %v4663 = vunpack.c.h.b16 %v4521
    %v4664 = vunpack.c.l.b16 %v4522
    %v4665 = vunpack.c.h.b16 %v4522
    %v4666 = vunpack.c.l.b16 %v4523
    %v4667 = vunpack.c.h.b16 %v4523
    %v4668 = vunpack.c.l.b16 %v4524
    %v4669 = vunpack.c.h.b16 %v4524
    %v4670 = vunpack.c.l.b16 %v4525
    %v4671 = vunpack.c.h.b16 %v4525
    %v4672 = vunpack.c.l.b16 %v4526
    %v4673 = vunpack.c.h.b16 %v4526
    %v4674 = vunpack.c.l.b16 %v4527
    %v4675 = vunpack.c.h.b16 %v4527
    %v4676 = vunpack.c.l.b16 %v4528
    %v4677 = vunpack.c.h.b16 %v4528
    %v4678 = vunpack.c.l.b16 %v4529
    %v4679 = vunpack.c.h.b16 %v4529
    %v4680 = vunpack.c.l.b16 %v4530
    %v4681 = vunpack.c.h.b16 %v4530
    %v4682 = vunpack.c.l.b16 %v4531
    %v4683 = vunpack.c.h.b16 %v4531
    %v4684 = vunpack.c.l.b16 %v4532
    %v4685 = vunpack.c.h.b16 %v4532
    %v4686 = vunpack.c.l.b16 %v4533
    %v4687 = vunpack.c.h.b16 %v4533
    %v4688 = vunpack.c.l.b16 %v4534
    %v4689 = vunpack.c.h.b16 %v4534
    %v4690 = vunpack.c.l.b16 %v4535
    %v4691 = vunpack.c.h.b16 %v4535
    %v4692 = vunpack.c.l.b16 %v4536
    %v4693 = vunpack.c.h.b16 %v4536
    %v4694 = vunpack.c.l.b16 %v4537
    %v4695 = vunpack.c.h.b16 %v4537
    %v4696 = vunpack.c.l.b16 %v4538
    %v4697 = vunpack.c.h.b16 %v4538
    %v4698 = vunpack.c.l.b16 %v4539
    %v4699 = vunpack.c.h.b16 %v4539
    %v4700 = vunpack.c.l.b16 %v4540
    %v4701 = vunpack.c.h.b16 %v4540
    %v4702 = vunpack.c.l.b16 %v4541
    %v4703 = vunpack.c.h.b16 %v4541
    %v4704 = vunpack.c.l.b16 %v4542
    %v4705 = vunpack.c.h.b16 %v4542
    %v4706 = vunpack.c.l.b16 %v4543
    %v4707 = vunpack.c.h.b16 %v4543
    %v4708 = vunpack.c.l.b16 %v4544
    %v4709 = vunpack.c.h.b16 %v4544
    %v4710 = vunpack.c.l.b16 %v4545
    %v4711 = vunpack.c.h.b16 %v4545
    %v4712 = vunpack.c.l.b16 %v4546
    %v4713 = vunpack.c.h.b16 %v4546
    %v4714 = vunpack.c.l.b16 %v4547
    %v4715 = vunpack.c.h.b16 %v4547
    %v4716 = vunpack.c.l.b16 %v4548
    %v4717 = vunpack.c.h.b16 %v4548
    %v4718 = vunpack.c.l.b16 %v4549
    %v4719 = vunpack.c.h.b16 %v4549
    %v4720 = vunpack.c.l.b16 %v4550
    %v4721 = vunpack.c.h.b16 %v4550
    %v4722 = vunpack.c.l.b16 %v4551
    %v4723 = vunpack.c.h.b16 %v4551
    %v4724 = vunpack.c.l.b16 %v4552
    %v4725 = vunpack.c.h.b16 %v4552
    %v4726 = vunpack.c.l.b16 %v4553
    %v4727 = vunpack.c.h.b16 %v4553
    %v4728 = vunpack.c.l.b16 %v4554
    %v4729 = vunpack.c.h.b16 %v4554
    %v4730 = vunpack.c.l.b16 %v4555
    %v4731 = vunpack.c.h.b16 %v4555
    %v4732 = vunpack.c.l.b16 %v4556
    %v4733 = vunpack.c.h.b16 %v4556
    %v4734 = vunpack.c.l.b16 %v4557
    %v4735 = vunpack.c.h.b16 %v4557
    %v4736 = vunpack.c.l.b16 %v4558
    %v4737 = vunpack.c.h.b16 %v4558
    %v4738 = vunpack.c.l.b16 %v4559
    %v4739 = vunpack.c.h.b16 %v4559
    %v4740 = vunpack.c.l.b16 %v4560
    %v4741 = vunpack.c.h.b16 %v4560
    %v4742 = vunpack.c.l.b16 %v4561
    %v4743 = vunpack.c.h.b16 %v4561
    %v4744 = vunpack.c.l.b16 %v4562
    %v4745 = vunpack.c.h.b16 %v4562
    %v4746 = vunpack.c.l.b16 %v4563
    %v4747 = vunpack.c.h.b16 %v4563
    %v4748 = vunpack.c.l.b16 %v4564
    %v4749 = vunpack.c.h.b16 %v4564
    %v4750 = vunpack.c.l.b16 %v4565
    %v4751 = vunpack.c.h.b16 %v4565
    %v4752 = vunpack.c.l.b16 %v4566
    %v4753 = vunpack.c.h.b16 %v4566
    %v4754 = vunpack.c.l.b16 %v4567
    %v4755 = vunpack.c.h.b16 %v4567
    %v4756 = vunpack.c.l.b16 %v4568
    %v4757 = vunpack.c.h.b16 %v4568
    %v4758 = vunpack.c.l.b16 %v4569
    %v4759 = vunpack.c.h.b16 %v4569
    %v4760 = vunpack.c.l.b16 %v4570
    %v4761 = vunpack.c.h.b16 %v4570
    %v4762 = vunpack.c.l.b16 %v4571
    %v4763 = vunpack.c.h.b16 %v4571
    %v4764 = vunpack.c.l.b16 %v4572
    %v4765 = vunpack.c.h.b16 %v4572
    %v4766 = vunpack.c.l.b16 %v4573
    %v4767 = vunpack.c.h.b16 %v4573
    %v4768 = vunpack.c.l.b16 %v4574
    %v4769 = vunpack.c.h.b16 %v4574
    %v4770 = vunpack.c.l.b16 %v4575
    %v4771 = vunpack.c.h.b16 %v4575
    %v4772 = vunpack.c.l.b16 %v4576
    %v4773 = vunpack.c.h.b16 %v4576
    %v4774 = vunpack.c.l.b16 %v4577
    %v4775 = vunpack.c.h.b16 %v4577
    %v4776 = vunpack.c.l.b16 %v4578
    %v4777 = vunpack.c.h.b16 %v4578
    %v4778 = vunpack.c.l.b16 %v4579
    %v4779 = vunpack.c.h.b16 %v4579
    %v4780 = vunpack.c.l.b16 %v4580
    %v4781 = vunpack.c.h.b16 %v4580
    %v4782 = vunpack.c.l.b16 %v4581
    %v4783 = vunpack.c.h.b16 %v4581
    %v4784 = vunpack.c.l.b16 %v4582
    %v4785 = vunpack.c.h.b16 %v4582
    %v4786 = vunpack.c.l.b16 %v4583
    %v4787 = vunpack.c.h.b16 %v4583
    %v4788 = vpack.c.b16 %v4662, %v4660
    %v4789 = vpack.c.b16 %v4663, %v4661
    %v4790 = vpack.c.b16 %v4666, %v4664
    %v4791 = vpack.c.b16 %v4667, %v4665
    %v4792 = vpack.c.b16 %v4670, %v4668
    %v4793 = vpack.c.b16 %v4671, %v4669
    %v4794 = vpack.c.b16 %v4674, %v4672
    %v4795 = vpack.c.b16 %v4675, %v4673
    %v4796 = vpack.c.b16 %v4678, %v4676
    %v4797 = vpack.c.b16 %v4679, %v4677
    %v4798 = vpack.c.b16 %v4682, %v4680
    %v4799 = vpack.c.b16 %v4683, %v4681
    %v4800 = vpack.c.b16 %v4686, %v4684
    %v4801 = vpack.c.b16 %v4687, %v4685
    %v4802 = vpack.c.b16 %v4690, %v4688
    %v4803 = vpack.c.b16 %v4691, %v4689
    %v4804 = vpack.c.b16 %v4694, %v4692
    %v4805 = vpack.c.b16 %v4695, %v4693
    %v4806 = vpack.c.b16 %v4698, %v4696
    %v4807 = vpack.c.b16 %v4699, %v4697
    %v4808 = vpack.c.b16 %v4702, %v4700
    %v4809 = vpack.c.b16 %v4703, %v4701
    %v4810 = vpack.c.b16 %v4706, %v4704
    %v4811 = vpack.c.b16 %v4707, %v4705
    %v4812 = vpack.c.b16 %v4710, %v4708
    %v4813 = vpack.c.b16 %v4711, %v4709
    %v4814 = vpack.c.b16 %v4714, %v4712
    %v4815 = vpack.c.b16 %v4715, %v4713
    %v4816 = vpack.c.b16 %v4718, %v4716
    %v4817 = vpack.c.b16 %v4719, %v4717
    %v4818 = vpack.c.b16 %v4722, %v4720
    %v4819 = vpack.c.b16 %v4723, %v4721
    %v4820 = vpack.c.b16 %v4726, %v4724
    %v4821 = vpack.c.b16 %v4727, %v4725
    %v4822 = vpack.c.b16 %v4730, %v4728
    %v4823 = vpack.c.b16 %v4731, %v4729
    %v4824 = vpack.c.b16 %v4734, %v4732
    %v4825 = vpack.c.b16 %v4735, %v4733
    %v4826 = vpack.c.b16 %v4738, %v4736
    %v4827 = vpack.c.b16 %v4739, %v4737
    %v4828 = vpack.c.b16 %v4742, %v4740
    %v4829 = vpack.c.b16 %v4743, %v4741
    %v4830 = vpack.c.b16 %v4746, %v4744
    %v4831 = vpack.c.b16 %v4747, %v4745
    %v4832 = vpack.c.b16 %v4750, %v4748
    %v4833 = vpack.c.b16 %v4751, %v4749
    %v4834 = vpack.c.b16 %v4754, %v4752
    %v4835 = vpack.c.b16 %v4755, %v4753
    %v4836 = vpack.c.b16 %v4758, %v4756
    %v4837 = vpack.c.b16 %v4759, %v4757
    %v4838 = vpack.c.b16 %v4762, %v4760
    %v4839 = vpack.c.b16 %v4763, %v4761
    %v4840 = vpack.c.b16 %v4766, %v4764
    %v4841 = vpack.c.b16 %v4767, %v4765
    %v4842 = vpack.c.b16 %v4770, %v4768
    %v4843 = vpack.c.b16 %v4771, %v4769
    %v4844 = vpack.c.b16 %v4774, %v4772
    %v4845 = vpack.c.b16 %v4775, %v4773
    %v4846 = vpack.c.b16 %v4778, %v4776
    %v4847 = vpack.c.b16 %v4779, %v4777
    %v4848 = vpack.c.b16 %v4782, %v4780
    %v4849 = vpack.c.b16 %v4783, %v4781
    %v4850 = vpack.c.b16 %v4786, %v4784
    %v4851 = vpack.c.b16 %v4787, %v4785
    %4916 = vmatprep.subr.bf16.mxu0 %v4789
    %4917 = vmatpush1.bf16.msra.mxu0 %v4788
    %4918 = vmatprep.subr.bf16.mxu0 %v4791
    %4919 = vmatpush1.bf16.msra.mxu0 %v4790
    %4920 = vmatprep.subr.bf16.mxu0 %v4793
    %4921 = vmatpush1.bf16.msra.mxu0 %v4792
    %4922 = vmatprep.subr.bf16.mxu0 %v4795
    %4923 = vmatpush1.bf16.msra.mxu0 %v4794
    %4924 = vmatprep.subr.bf16.mxu0 %v4797
    %4925 = vmatpush1.bf16.msra.mxu0 %v4796
    %4926 = vmatprep.subr.bf16.mxu0 %v4799
    %4927 = vmatpush1.bf16.msra.mxu0 %v4798
    %4928 = vmatprep.subr.bf16.mxu0 %v4801
    %4929 = vmatpush1.bf16.msra.mxu0 %v4800
    %4930 = vmatprep.subr.bf16.mxu0 %v4803
    %4931 = vmatpush1.bf16.msra.mxu0 %v4802
    %4932 = vmatprep.subr.bf16.mxu0 %v4805
    %4933 = vmatpush1.bf16.msra.mxu0 %v4804
    %4934 = vmatprep.subr.bf16.mxu0 %v4807
    %4935 = vmatpush1.bf16.msra.mxu0 %v4806
    %4936 = vmatprep.subr.bf16.mxu0 %v4809
    %4937 = vmatpush1.bf16.msra.mxu0 %v4808
    %4938 = vmatprep.subr.bf16.mxu0 %v4811
    %4939 = vmatpush1.bf16.msra.mxu0 %v4810
    %4940 = vmatprep.subr.bf16.mxu0 %v4813
    %4941 = vmatpush1.bf16.msra.mxu0 %v4812
    %4942 = vmatprep.subr.bf16.mxu0 %v4815
    %4943 = vmatpush1.bf16.msra.mxu0 %v4814
    %4944 = vmatprep.subr.bf16.mxu0 %v4817
    %4945 = vmatpush1.bf16.msra.mxu0 %v4816
    %4946 = vmatprep.subr.bf16.mxu0 %v4819
    %4947 = vmatpush1.bf16.msra.mxu0 %v4818
    %4948 = vmatprep.mubr.bf16.mxu0 %v4517
    %4949 = vmatmul.mubr.bf16.gmra.mrb[0].mxu0 %v4516
    %v4950 = vpop.f32.mrb[0].mxu0
    %v4951 = vadd.f32 %v4589, %v4950
    %v4952 = vpop.f32.mrb[0].mxu0
    %v4953 = vadd.f32 %v4593, %v4952
    %v4954 = vpop.f32.mrb[0].mxu0
    %v4955 = vpop.f32.mrb[0].mxu0
    %4956 = vdwg.mxu0
    %4957 = vmatprep.subr.bf16.mxu0 %v4821
    %4958 = vmatpush1.bf16.msra.mxu0 %v4820
    %4959 = vmatprep.subr.bf16.mxu0 %v4823
    %4960 = vmatpush1.bf16.msra.mxu0 %v4822
    %4961 = vmatprep.subr.bf16.mxu0 %v4825
    %4962 = vmatpush1.bf16.msra.mxu0 %v4824
    %4963 = vmatprep.subr.bf16.mxu0 %v4827
    %4964 = vmatpush1.bf16.msra.mxu0 %v4826
    %4965 = vmatprep.subr.bf16.mxu0 %v4829
    %4966 = vmatpush1.bf16.msra.mxu0 %v4828
    %4967 = vmatprep.subr.bf16.mxu0 %v4831
    %4968 = vmatpush1.bf16.msra.mxu0 %v4830
    %4969 = vmatprep.subr.bf16.mxu0 %v4833
    %4970 = vmatpush1.bf16.msra.mxu0 %v4832
    %4971 = vmatprep.subr.bf16.mxu0 %v4835
    %4972 = vmatpush1.bf16.msra.mxu0 %v4834
    %4973 = vmatprep.subr.bf16.mxu0 %v4837
    %4974 = vmatpush1.bf16.msra.mxu0 %v4836
    %4975 = vmatprep.subr.bf16.mxu0 %v4839
    %4976 = vmatpush1.bf16.msra.mxu0 %v4838
    %4977 = vmatprep.subr.bf16.mxu0 %v4841
    %4978 = vmatpush1.bf16.msra.mxu0 %v4840
    %4979 = vmatprep.subr.bf16.mxu0 %v4843
    %4980 = vmatpush1.bf16.msra.mxu0 %v4842
    %4981 = vmatprep.subr.bf16.mxu0 %v4845
    %4982 = vmatpush1.bf16.msra.mxu0 %v4844
    %4983 = vmatprep.subr.bf16.mxu0 %v4847
    %4984 = vmatpush1.bf16.msra.mxu0 %v4846
    %4985 = vmatprep.subr.bf16.mxu0 %v4849
    %4986 = vmatpush1.bf16.msra.mxu0 %v4848
    %4987 = vmatprep.subr.bf16.mxu0 %v4851
    %4988 = vmatpush1.bf16.msra.mxu0 %v4850
    %4989 = vmatprep.mubr.bf16.mxu0 %v4519
    %4990 = vmatmul.mubr.bf16.gmra.mrb[0].mxu0 %v4518
    %v4991 = vpop.f32.mrb[0].mxu0
    %v4992 = vadd.f32 %v4951, %v4991
    %v4993 = vpop.f32.mrb[0].mxu0
    %v4994 = vadd.f32 %v4953, %v4993
    %v4995 = vpop.f32.mrb[0].mxu0
    %v4996 = vpop.f32.mrb[0].mxu0
    %4997 = vdwg.mxu0
    %v4998 = vtanh.pop %v4992
    %v4999 = vtanh.pop %v4994
    %v5000 = vpack.c.bf16 %v4998, %v4998
    %v5001 = vpack.c.bf16 %v4999, %v4999
    %v5002 = vld [vmem:[#allocation14] sm:$0xf]
    %v5003 = vld [vmem:[#allocation14 + $0x4] sm:$0xf]
    %v5004 = vld [vmem:[#allocation14 + $0x8] sm:$0xf]
    %v5005 = vld [vmem:[#allocation14 + $0xc] sm:$0xf]
    %v5006 = vld [vmem:[#allocation14 + $0x10] sm:$0xf]
    %v5007 = vld [vmem:[#allocation14 + $0x14] sm:$0xf]
    %v5008 = vld [vmem:[#allocation14 + $0x18] sm:$0xf]
    %v5009 = vld [vmem:[#allocation14 + $0x1c] sm:$0xf]
    %v5010 = vld [vmem:[#allocation14 + $0x20] sm:$0xf]
    %v5011 = vld [vmem:[#allocation14 + $0x24] sm:$0xf]
    %v5012 = vld [vmem:[#allocation14 + $0x28] sm:$0xf]
    %v5013 = vld [vmem:[#allocation14 + $0x2c] sm:$0xf]
    %v5014 = vld [vmem:[#allocation14 + $0x30] sm:$0xf]
    %v5015 = vld [vmem:[#allocation14 + $0x34] sm:$0xf]
    %v5016 = vld [vmem:[#allocation14 + $0x38] sm:$0xf]
    %v5017 = vld [vmem:[#allocation14 + $0x3c] sm:$0xf]
    %v5018 = vld [vmem:[#allocation14 + $0x40] sm:$0xf]
    %v5019 = vld [vmem:[#allocation14 + $0x44] sm:$0xf]
    %v5020 = vld [vmem:[#allocation14 + $0x48] sm:$0xf]
    %v5021 = vld [vmem:[#allocation14 + $0x4c] sm:$0xf]
    %v5022 = vld [vmem:[#allocation14 + $0x50] sm:$0xf]
    %v5023 = vld [vmem:[#allocation14 + $0x54] sm:$0xf]
    %v5024 = vld [vmem:[#allocation14 + $0x58] sm:$0xf]
    %v5025 = vld [vmem:[#allocation14 + $0x5c] sm:$0xf]
    %v5026 = vld [vmem:[#allocation14 + $0x60] sm:$0xf]
    %v5027 = vld [vmem:[#allocation14 + $0x64] sm:$0xf]
    %v5028 = vld [vmem:[#allocation14 + $0x68] sm:$0xf]
    %v5029 = vld [vmem:[#allocation14 + $0x6c] sm:$0xf]
    %v5030 = vld [vmem:[#allocation14 + $0x70] sm:$0xf]
    %v5031 = vld [vmem:[#allocation14 + $0x74] sm:$0xf]
    %v5032 = vld [vmem:[#allocation14 + $0x78] sm:$0xf]
    %v5033 = vld [vmem:[#allocation14 + $0x7c] sm:$0xf]
    %v5034 = vld [vmem:[#allocation16] sm:$0x1]
    %v5036 = vlaneseq
    %v5037 = vshrl.u32 %v5036, 7
    %v5038 = vsub.s32 0, %v5037
    %v5039 = vrot.slane %v5034, %v5038
    %v5073 = vunpack.c.l.b16 %v5002
    %v5074 = vunpack.c.l.b16 %v5003
    %v5075 = vunpack.c.l.b16 %v5004
    %v5076 = vunpack.c.l.b16 %v5005
    %v5077 = vunpack.c.l.b16 %v5006
    %v5078 = vunpack.c.l.b16 %v5007
    %v5079 = vunpack.c.l.b16 %v5008
    %v5080 = vunpack.c.l.b16 %v5009
    %v5081 = vunpack.c.l.b16 %v5010
    %v5082 = vunpack.c.l.b16 %v5011
    %v5083 = vunpack.c.l.b16 %v5012
    %v5084 = vunpack.c.l.b16 %v5013
    %v5085 = vunpack.c.l.b16 %v5014
    %v5086 = vunpack.c.l.b16 %v5015
    %v5087 = vunpack.c.l.b16 %v5016
    %v5088 = vunpack.c.l.b16 %v5017
    %v5089 = vunpack.c.l.b16 %v5018
    %v5090 = vunpack.c.l.b16 %v5019
    %v5091 = vunpack.c.l.b16 %v5020
    %v5092 = vunpack.c.l.b16 %v5021
    %v5093 = vunpack.c.l.b16 %v5022
    %v5094 = vunpack.c.l.b16 %v5023
    %v5095 = vunpack.c.l.b16 %v5024
    %v5096 = vunpack.c.l.b16 %v5025
    %v5097 = vunpack.c.l.b16 %v5026
    %v5098 = vunpack.c.l.b16 %v5027
    %v5099 = vunpack.c.l.b16 %v5028
    %v5100 = vunpack.c.l.b16 %v5029
    %v5101 = vunpack.c.l.b16 %v5030
    %v5102 = vunpack.c.l.b16 %v5031
    %v5103 = vunpack.c.l.b16 %v5032
    %v5104 = vunpack.c.l.b16 %v5033
    %v5105 = vpack.c.b16 %v5074, %v5073
    %v5106 = vpack.c.b16 %v5076, %v5075
    %v5107 = vpack.c.b16 %v5078, %v5077
    %v5108 = vpack.c.b16 %v5080, %v5079
    %v5109 = vpack.c.b16 %v5082, %v5081
    %v5110 = vpack.c.b16 %v5084, %v5083
    %v5111 = vpack.c.b16 %v5086, %v5085
    %v5112 = vpack.c.b16 %v5088, %v5087
    %v5113 = vpack.c.b16 %v5090, %v5089
    %v5114 = vpack.c.b16 %v5092, %v5091
    %v5115 = vpack.c.b16 %v5094, %v5093
    %v5116 = vpack.c.b16 %v5096, %v5095
    %v5117 = vpack.c.b16 %v5098, %v5097
    %v5118 = vpack.c.b16 %v5100, %v5099
    %v5119 = vpack.c.b16 %v5102, %v5101
    %v5120 = vpack.c.b16 %v5104, %v5103
    %5137 = vmatprep.subr.bf16.mxu0 0
    %5138 = vmatpush1.bf16.msra.mxu0 %v5105
    %5139 = vmatprep.subr.bf16.mxu0 0
    %5140 = vmatpush1.bf16.msra.mxu0 %v5106
    %5141 = vmatprep.subr.bf16.mxu0 0
    %5142 = vmatpush1.bf16.msra.mxu0 %v5107
    %5143 = vmatprep.subr.bf16.mxu0 0
    %5144 = vmatpush1.bf16.msra.mxu0 %v5108
    %5145 = vmatprep.subr.bf16.mxu0 0
    %5146 = vmatpush1.bf16.msra.mxu0 %v5109
    %5147 = vmatprep.subr.bf16.mxu0 0
    %5148 = vmatpush1.bf16.msra.mxu0 %v5110
    %5149 = vmatprep.subr.bf16.mxu0 0
    %5150 = vmatpush1.bf16.msra.mxu0 %v5111
    %5151 = vmatprep.subr.bf16.mxu0 0
    %5152 = vmatpush1.bf16.msra.mxu0 %v5112
    %5153 = vmatprep.subr.bf16.mxu0 0
    %5154 = vmatpush1.bf16.msra.mxu0 %v5113
    %5155 = vmatprep.subr.bf16.mxu0 0
    %5156 = vmatpush1.bf16.msra.mxu0 %v5114
    %5157 = vmatprep.subr.bf16.mxu0 0
    %5158 = vmatpush1.bf16.msra.mxu0 %v5115
    %5159 = vmatprep.subr.bf16.mxu0 0
    %5160 = vmatpush1.bf16.msra.mxu0 %v5116
    %5161 = vmatprep.subr.bf16.mxu0 0
    %5162 = vmatpush1.bf16.msra.mxu0 %v5117
    %5163 = vmatprep.subr.bf16.mxu0 0
    %5164 = vmatpush1.bf16.msra.mxu0 %v5118
    %5165 = vmatprep.subr.bf16.mxu0 0
    %5166 = vmatpush1.bf16.msra.mxu0 %v5119
    %5167 = vmatprep.subr.bf16.mxu0 0
    %5168 = vmatpush1.bf16.msra.mxu0 %v5120
    %5169 = vmatprep.mubr.bf16.mxu0 %v5001
    %5170 = vmatmul.mubr.bf16.gmra.mrb[0].mxu0 %v5000
    %v5171 = vpop.f32.mrb[0].mxu0
    %v5172 = vadd.f32 %v5039, %v5171
    %v5173 = vpop.f32.mrb[0].mxu0
    %v5174 = vpop.f32.mrb[0].mxu0
    %v5175 = vpop.f32.mrb[0].mxu0
    %5176 = vdwg.mxu0
    %v5177 = vtanh.pop %v5172
    %5178 = vst [vmem:[#allocation17] sm:$0xff] %v5177
    // Predicated region
    $region74: #{tpu_custom_call.1} parent=1 // pred_check
      _
    $region75: #{tpu_custom_call.1} parent=1 // pred_check_branch
      %5180 = sbr.rel (0) target = $region77
    $region76: #{tpu_custom_call.1} parent=1 // pred_region
      %s5182 = ssub.s32 128, 128
      %5183 = vsyncadd [#allocation4], %s5182
      %s5185 = sshll.u32 [#allocation17], 4
      %s5186 = int_to_ptr.vmem [resolvable:$true] %s5185
      %5188 = dma.vmem_to_hbm [thread:$0]  %s5186, 128, %s9, [#allocation4]
    $region77: #{tpu_custom_call.1} parent=1 // pred_fallthru
      _
    // Predicated region
    $region78: #{tpu_custom_call.1} parent=1 // pred_check
      _
    $region79: #{tpu_custom_call.1} parent=1 // pred_check_branch
      %5190 = sbr.rel (0) target = $region81
    $region80: #{tpu_custom_call.1} parent=1 // pred_region
      %5191 = dma.done [#allocation4], 128
    $region81: #{tpu_custom_call.1} parent=1 // pred_fallthru
      _
    %5192 = vsyncpa [#allocation3], 1
    %5193 = vsyncpa [#allocation6], 1
    %5194 = vsyncpa [#allocation9], 1
    %5195 = vsyncpa [#allocation12], 1
    %5196 = vsyncpa [#allocation15], 1
    %5197 = vsyncpa [#allocation4], 1

</llo_original>
